<compile_context>
chip_gen: v7x
topology: tpu7x:2x2x1
jax: 0.10.0
libtpu: 0.0.40
codegen_flags: <defaults>
</compile_context>

<pallas_src>
import jax
import jax.numpy as jnp
from jax.experimental import pallas as pl
from jax.experimental.pallas import tpu as pltpu

D_IN = 768
D_H1, D_H1P = 1000, 1024      # hidden 1: real / lane-padded
D_H2, D_H2P = 20, 128         # hidden 2: real / lane-padded
D_OUT, D_OUTP = 1, 128        # output : real / lane-padded (lane-dense store)

TILE_B_MAX = 512              # ~85% of roofline; VMEM stays ~10 MiB (safe on v5e)
FORCE_SPLIT_MIN_B = 128       # ensure >=2 grid steps (v7x megacore) once B is big enough
GR_LAMBDA = 1.0               # GradientReversal lambda


def _cdiv(a, b):
    return -(-a // b)


def _round_up(n, m):
    return _cdiv(n, m) * m


# ----------------------------------------------------------------------------
# GradientReversal: identity in forward, multiplies the gradient by -lambda.
# ----------------------------------------------------------------------------
@jax.custom_vjp
def _gradient_reversal(x):
    return x


def _gr_fwd(x):
    return x, None


def _gr_bwd(_, g):
    return (-GR_LAMBDA * g,)


_gradient_reversal.defvjp(_gr_fwd, _gr_bwd)
# TODO(synk): the pallas_call below has no custom VJP of its own; if this head
# is ever differentiated end-to-end, a backward kernel is still required.


# ----------------------------------------------------------------------------
# Kernel: 3-layer MLP on one batch tile. Weights are VMEM-resident (constant
# index_map); x / out tiles stream through VMEM and the batch grid is parallel.
# ----------------------------------------------------------------------------
def _discriminator_mlp_kernel(x_ref, w1_ref, b1_ref, w2_ref, b2_ref,
                              w3_ref, b3_ref, o_ref):
    # f32 -> bf16 cast done in-kernel (VPU, hidden under the MXU); avoids a
    # separate XLA pass over x in HBM.
    x = x_ref[...].astype(jnp.bfloat16)                        # (TB, 768)

    # Linear(768 -> 1024 padded) + ReLU : bf16 MXU matmul, f32 accumulation.
    h1 = jnp.dot(x, w1_ref[...], preferred_element_type=jnp.float32) + b1_ref[...]
    h1 = jnp.maximum(h1, 0.0)

    # Linear(1024 -> 128 padded) + ReLU.
    h2 = jnp.dot(h1.astype(jnp.bfloat16), w2_ref[...],
                 preferred_element_type=jnp.float32) + b2_ref[...]
    h2 = jnp.maximum(h2, 0.0)

    # Linear(128 -> 128 padded); only lane 0 carries the real logit.
    out = jnp.dot(h2.astype(jnp.bfloat16), w3_ref[...],
                  preferred_element_type=jnp.float32) + b3_ref[...]
    o_ref[...] = out                                           # lane-dense f32 store


def _choose_tiling(B):
    """Adaptive batch tiling: big tiles, >=2 grid steps for v7x, minimal waste."""
    n_tiles = _cdiv(B, TILE_B_MAX)
    if B >= FORCE_SPLIT_MIN_B:
        n_tiles = max(n_tiles, 2)          # keep both v7x TensorCores busy
    tile_b = _round_up(_cdiv(B, n_tiles), 8)   # sublane-aligned, <8 wasted rows/tile
    n_grid = _cdiv(B, tile_b)
    return tile_b, n_grid


def point_transformer_forward(x, packed):
    """x: (B, 768) float32.  packed: padded/bf16 params (see pack_params).

    Returns (B, 1) float32 — identical semantics to the PyTorch forward.
    """
    B = x.shape[0]
    x = _gradient_reversal(x.astype(jnp.float32))   # identity in forward

    tile_b, n_grid = _choose_tiling(B)

    w1, b1, w2, b2, w3, b3 = (packed["w1"], packed["b1"], packed["w2"],
                              packed["b2"], packed["w3"], packed["b3"])

    def resident(shape):
        # Weights/biases: constant block index -> fetched once, stay in VMEM.
        return pl.BlockSpec(shape, lambda i: (0, 0))

    weight_bytes = sum(int(v.size) * v.dtype.itemsize
                       for v in (w1, b1, w2, b2, w3, b3))
    cost = pl.CostEstimate(
        flops=2 * n_grid * tile_b * (D_IN * D_H1P + D_H1P * D_H2P + D_H2P * D_OUTP),
        transcendentals=0,
        bytes_accessed=weight_bytes
        + B * D_IN * 4          # x streamed as f32
        + B * D_OUTP * 4,       # lane-dense f32 output
    )

    out_padded = pl.pallas_call(
        _discriminator_mlp_kernel,
        out_shape=jax.ShapeDtypeStruct((B, D_OUTP), jnp.float32),
        grid=(n_grid,),
        in_specs=[
            pl.BlockSpec((tile_b, D_IN), lambda i: (i, 0)),    # x tile streams (f32)
            resident((D_IN, D_H1P)),                           # w1 (bf16)
            resident((1, D_H1P)),                              # b1 (f32)
            resident((D_H1P, D_H2P)),                          # w2 (bf16)
            resident((1, D_H2P)),                              # b2 (f32)
            resident((D_H2P, D_OUTP)),                         # w3 (bf16)
            resident((1, D_OUTP)),                             # b3 (f32)
        ],
        out_specs=pl.BlockSpec((tile_b, D_OUTP), lambda i: (i, 0)),
        compiler_params=pltpu.CompilerParams(
            dimension_semantics=("parallel",)),
        cost_estimate=cost,
    )(x, w1, b1, w2, b2, w3, b3)

    # Strip the lane padding of the width-1 logit.
    return out_padded[:, :D_OUT]


def init_params(key):
    """Deterministic init mimicking nn.Linear default (uniform +-1/sqrt(fan_in))."""
    ks = jax.random.split(key, 6)

    def linear(kw, kb, fan_in, fan_out):
        bound = 1.0 / jnp.sqrt(fan_in)
        w = jax.random.uniform(kw, (fan_in, fan_out), jnp.float32, -bound, bound)
        b = jax.random.uniform(kb, (fan_out,), jnp.float32, -bound, bound)
        return w, b

    w1, b1 = linear(ks[0], ks[1], D_IN, D_H1)
    w2, b2 = linear(ks[2], ks[3], D_H1, D_H2)
    w3, b3 = linear(ks[4], ks[5], D_H2, D_OUT)
    return {"w1": w1, "b1": b1, "w2": w2, "b2": b2, "w3": w3, "b3": b3}


def pack_params(p):
    """Zero-pad to lane multiples and cast weights to bf16 (f32 biases).

    NOTE: if loading real PyTorch nn.Linear weights, transpose them to the
    (in_features, out_features) layout first.
    """
    def pad2(a, rows, cols):
        return jnp.pad(a, ((0, rows - a.shape[0]), (0, cols - a.shape[1])))

    return {
        "w1": pad2(p["w1"], D_IN, D_H1P).astype(jnp.bfloat16),
        "b1": pad2(p["b1"][None, :], 1, D_H1P).astype(jnp.float32),
        "w2": pad2(p["w2"], D_H1P, D_H2P).astype(jnp.bfloat16),
        "b2": pad2(p["b2"][None, :], 1, D_H2P).astype(jnp.float32),
        "w3": pad2(p["w3"], D_H2P, D_OUTP).astype(jnp.bfloat16),
        "b3": pad2(p["b3"][None, :], 1, D_OUTP).astype(jnp.float32),
    }


def _reference_bf16(x, packed):
    """Pure-JAX reference with the same bf16-weight / f32-accumulate recipe."""
    xb = x.astype(jnp.bfloat16)
    h1 = jnp.maximum(
        jnp.dot(xb, packed["w1"], preferred_element_type=jnp.float32)
        + packed["b1"], 0.0)
    h2 = jnp.maximum(
        jnp.dot(h1.astype(jnp.bfloat16), packed["w2"],
                preferred_element_type=jnp.float32) + packed["b2"], 0.0)
    out = jnp.dot(h2.astype(jnp.bfloat16), packed["w3"],
                  preferred_element_type=jnp.float32) + packed["b3"]
    return out[:, :D_OUT]


def _reference_f32(x, p):
    """Full-precision reference matching the PyTorch f32 forward semantics."""
    h1 = jnp.maximum(x @ p["w1"] + p["b1"], 0.0)
    h2 = jnp.maximum(h1 @ p["w2"] + p["b2"], 0.0)
    return h2 @ p["w3"] + p["b3"]


if __name__ == "__main__":
    key = jax.random.PRNGKey(0)
    k_x_small, k_x_big, k_p = jax.random.split(key, 3)

    params = init_params(k_p)
    packed = pack_params(params)

    # Small batch (single grid step, exact tile) and a larger batch exercising
    # the multi-tile parallel grid + partial last block (no wrapper-side pad).
    for B, kx in ((8, k_x_small), (300, k_x_big)):
        x = jax.random.normal(kx, (B, D_IN), dtype=jnp.float32)
        out = jax.block_until_ready(point_transformer_forward(x, packed))
        assert out.shape == (B, D_OUT)

        ref_bf16 = _reference_bf16(x, packed)
        assert jnp.allclose(out, ref_bf16, atol=5e-3, rtol=5e-3), \
            f"mismatch vs bf16-recipe reference at B={B}"

        # Loose check against the true f32 forward (bounds the bf16-weight error).
        ref_f32 = _reference_f32(x, params)
        assert jnp.allclose(out, ref_f32, atol=1e-1, rtol=1e-1), \
            f"mismatch vs f32 reference at B={B}"

    # TODO(synk): MultiheadPointTransformerLayer is constructed in __init__ but
    # never called by point_transformer.forward, so it is intentionally not
    # implemented here.
    print("KERNEL_OK")
</pallas_src>

<mosaic_0001>
module attributes {stable_mosaic.version = 11 : i64} {
  func.func @_discriminator_mlp_kernel(%arg0: i32, %arg1: memref<8x768xf32, #tpu.memory_space<vmem>>, %arg2: memref<768x1024xbf16, #tpu.memory_space<vmem>>, %arg3: memref<1x1024xf32, #tpu.memory_space<vmem>>, %arg4: memref<1024x128xbf16, #tpu.memory_space<vmem>>, %arg5: memref<1x128xf32, #tpu.memory_space<vmem>>, %arg6: memref<128x128xbf16, #tpu.memory_space<vmem>>, %arg7: memref<1x128xf32, #tpu.memory_space<vmem>>, %arg8: memref<8x128xf32, #tpu.memory_space<vmem>>) attributes {dimension_semantics = [#tpu.dimension_semantics<parallel>], iteration_bounds = array<i64: 1>, scalar_prefetch = 0 : i64, scratch_operands = 0 : i64, tpu.core_type = #tpu.core_type<tc>, window_params = [{transform_indices = @transform_0, window_bounds = array<i64: 8, 768>}, {pipeline_mode = #tpu.pipeline_mode<synchronous>, transform_indices = @transform_1, window_bounds = array<i64: 768, 1024>}, {pipeline_mode = #tpu.pipeline_mode<synchronous>, transform_indices = @transform_2, window_bounds = array<i64: 1, 1024>}, {pipeline_mode = #tpu.pipeline_mode<synchronous>, transform_indices = @transform_3, window_bounds = array<i64: 1024, 128>}, {pipeline_mode = #tpu.pipeline_mode<synchronous>, transform_indices = @transform_4, window_bounds = array<i64: 1, 128>}, {pipeline_mode = #tpu.pipeline_mode<synchronous>, transform_indices = @transform_5, window_bounds = array<i64: 128, 128>}, {pipeline_mode = #tpu.pipeline_mode<synchronous>, transform_indices = @transform_6, window_bounds = array<i64: 1, 128>}, {transform_indices = @transform_7, window_bounds = array<i64: 8, 128>}]} {
    %c0 = arith.constant 0 : index
    %c0_0 = arith.constant 0 : index
    %0 = vector.load %arg1[%c0, %c0_0] : memref<8x768xf32, #tpu.memory_space<vmem>>, vector<8x768xf32>
    %1 = arith.truncf %0 : vector<8x768xf32> to vector<8x768xbf16>
    %c0_1 = arith.constant 0 : index
    %c0_2 = arith.constant 0 : index
    %2 = vector.load %arg2[%c0_1, %c0_2] : memref<768x1024xbf16, #tpu.memory_space<vmem>>, vector<768x1024xbf16>
    %cst = arith.constant dense<0.000000e+00> : vector<8x1024xf32>
    %3 = tpu.matmul %1, %2, %cst {dimension_numbers = #tpu.dot_dimension_numbers<[1], [0], [0], [1], [0, 0, 1, 1], [], []>} : vector<8x768xbf16>, vector<768x1024xbf16>, vector<8x1024xf32> -> vector<8x1024xf32>
    %c0_3 = arith.constant 0 : index
    %c0_4 = arith.constant 0 : index
    %4 = vector.load %arg3[%c0_3, %c0_4] : memref<1x1024xf32, #tpu.memory_space<vmem>>, vector<1x1024xf32>
    %5 = vector.broadcast %4 : vector<1x1024xf32> to vector<8x1024xf32>
    %6 = arith.addf %3, %5 : vector<8x1024xf32>
    %cst_5 = arith.constant 0.000000e+00 : f32
    %7 = vector.broadcast %cst_5 : f32 to vector<8x1024xf32>
    %8 = arith.maximumf %6, %7 : vector<8x1024xf32>
    %9 = arith.truncf %8 : vector<8x1024xf32> to vector<8x1024xbf16>
    %c0_6 = arith.constant 0 : index
    %c0_7 = arith.constant 0 : index
    %10 = vector.load %arg4[%c0_6, %c0_7] : memref<1024x128xbf16, #tpu.memory_space<vmem>>, vector<1024x128xbf16>
    %cst_8 = arith.constant dense<0.000000e+00> : vector<8x128xf32>
    %11 = tpu.matmul %9, %10, %cst_8 {dimension_numbers = #tpu.dot_dimension_numbers<[1], [0], [0], [1], [0, 0, 1, 1], [], []>} : vector<8x1024xbf16>, vector<1024x128xbf16>, vector<8x128xf32> -> vector<8x128xf32>
    %c0_9 = arith.constant 0 : index
    %c0_10 = arith.constant 0 : index
    %12 = vector.load %arg5[%c0_9, %c0_10] : memref<1x128xf32, #tpu.memory_space<vmem>>, vector<1x128xf32>
    %13 = vector.broadcast %12 : vector<1x128xf32> to vector<8x128xf32>
    %14 = arith.addf %11, %13 : vector<8x128xf32>
    %cst_11 = arith.constant 0.000000e+00 : f32
    %15 = vector.broadcast %cst_11 : f32 to vector<8x128xf32>
    %16 = arith.maximumf %14, %15 : vector<8x128xf32>
    %17 = arith.truncf %16 : vector<8x128xf32> to vector<8x128xbf16>
    %c0_12 = arith.constant 0 : index
    %c0_13 = arith.constant 0 : index
    %18 = vector.load %arg6[%c0_12, %c0_13] : memref<128x128xbf16, #tpu.memory_space<vmem>>, vector<128x128xbf16>
    %cst_14 = arith.constant dense<0.000000e+00> : vector<8x128xf32>
    %19 = tpu.matmul %17, %18, %cst_14 {dimension_numbers = #tpu.dot_dimension_numbers<[1], [0], [0], [1], [0, 0, 1, 1], [], []>} : vector<8x128xbf16>, vector<128x128xbf16>, vector<8x128xf32> -> vector<8x128xf32>
    %c0_15 = arith.constant 0 : index
    %c0_16 = arith.constant 0 : index
    %20 = vector.load %arg7[%c0_15, %c0_16] : memref<1x128xf32, #tpu.memory_space<vmem>>, vector<1x128xf32>
    %21 = vector.broadcast %20 : vector<1x128xf32> to vector<8x128xf32>
    %22 = arith.addf %19, %21 : vector<8x128xf32>
    %c0_17 = arith.constant 0 : index
    %c0_18 = arith.constant 0 : index
    %23 = vector.load %arg8[%c0_17, %c0_18] : memref<8x128xf32, #tpu.memory_space<vmem>>, vector<8x128xf32>
    tpu.vector_store %arg8[%c0_17, %c0_18], %22 {strides = array<i32>} : memref<8x128xf32, #tpu.memory_space<vmem>>, vector<8x128xf32>,
    return
  }
  func.func @transform_0(%arg0: i32) -> (i32, i32) {
    %c0_i32 = arith.constant 0 : i32
    %c0_i32_0 = arith.constant 0 : i32
    return %arg0, %c0_i32 : i32, i32
  }
  func.func @transform_1(%arg0: i32) -> (i32, i32) {
    %c0_i32 = arith.constant 0 : i32
    %c0_i32_0 = arith.constant 0 : i32
    %c0_i32_1 = arith.constant 0 : i32
    return %c0_i32, %c0_i32_0 : i32, i32
  }
  func.func @transform_2(%arg0: i32) -> (i32, i32) {
    %c0_i32 = arith.constant 0 : i32
    %c0_i32_0 = arith.constant 0 : i32
    %c0_i32_1 = arith.constant 0 : i32
    return %c0_i32, %c0_i32_0 : i32, i32
  }
  func.func @transform_3(%arg0: i32) -> (i32, i32) {
    %c0_i32 = arith.constant 0 : i32
    %c0_i32_0 = arith.constant 0 : i32
    %c0_i32_1 = arith.constant 0 : i32
    return %c0_i32, %c0_i32_0 : i32, i32
  }
  func.func @transform_4(%arg0: i32) -> (i32, i32) {
    %c0_i32 = arith.constant 0 : i32
    %c0_i32_0 = arith.constant 0 : i32
    %c0_i32_1 = arith.constant 0 : i32
    return %c0_i32, %c0_i32_0 : i32, i32
  }
  func.func @transform_5(%arg0: i32) -> (i32, i32) {
    %c0_i32 = arith.constant 0 : i32
    %c0_i32_0 = arith.constant 0 : i32
    %c0_i32_1 = arith.constant 0 : i32
    return %c0_i32, %c0_i32_0 : i32, i32
  }
  func.func @transform_6(%arg0: i32) -> (i32, i32) {
    %c0_i32 = arith.constant 0 : i32
    %c0_i32_0 = arith.constant 0 : i32
    %c0_i32_1 = arith.constant 0 : i32
    return %c0_i32, %c0_i32_0 : i32, i32
  }
  func.func @transform_7(%arg0: i32) -> (i32, i32) {
    %c0_i32 = arith.constant 0 : i32
    %c0_i32_0 = arith.constant 0 : i32
    return %arg0, %c0_i32 : i32, i32
  }
}

</mosaic_0001>

<llo_original>
// kernel: tpu_custom_call.1
$region0: #{tpu_custom_call.1}
  #allocation0 [shape = 'u32[]', space=smem, size = 0x4, offset = 0x4, fixed_abs, tag = 'smem constant byte address 0x4 - core index']
  #allocation1 [shape = 'u32[144,128]{1,0:T(1,128)}', space=vmem, size = 0x12000, scoped, tag = 'internal scratch']
  %s0 = inlined_call_operand.hbm [shape: f32[8,768], index: 0, kind: input, shape index: {}]
  %s1 = inlined_call_operand.hbm [shape: bf16[768,1024], index: 1, kind: input, shape index: {}]
  %s2 = inlined_call_operand.hbm [shape: f32[1,1024], index: 2, kind: input, shape index: {}]
  %s3 = inlined_call_operand.hbm [shape: bf16[1024,128], index: 3, kind: input, shape index: {}]
  %s4 = inlined_call_operand.hbm [shape: f32[1,128], index: 4, kind: input, shape index: {}]
  %s5 = inlined_call_operand.hbm [shape: bf16[128,128], index: 5, kind: input, shape index: {}]
  %s6 = inlined_call_operand.hbm [shape: f32[1,128], index: 6, kind: input, shape index: {}]
  %s7 = inlined_call_operand.hbm [shape: f32[8,128], index: 7, kind: output, shape index: {}]
  %s8 = sld [smem:[#allocation0]]
  $region66: #{tpu_custom_call.1} parent=0
    _
  %s10 = ssub.s32 1, %s8
  %s11 = scalar_select 0, %s10, %s8
  $region1: #{tpu_custom_call.1} parent=0
    #allocation2 [shape = 'u8[24576]{0}', space=vmem, size = 0x6000, scoped, tag = 'input window, operand 0, single buffered']
    #allocation3 [shape = 's32[1]{0}', space=sflag, size = 0x4, scoped, tag = 'scoped memory for tpu_custom_call.1']
    #allocation4 [shape = 's32[1]{0}', space=sflag, size = 0x4, scoped, tag = 'scoped memory for tpu_custom_call.1']
    #allocation5 [shape = 'u8[1572864]{0}', space=vmem, size = 0x180000, scoped, tag = 'input window, operand 1, single buffered']
    #allocation6 [shape = 's32[1]{0}', space=sflag, size = 0x4, scoped, tag = 'scoped memory for tpu_custom_call.1']
    #allocation7 [shape = 'u8[4096]{0}', space=vmem, size = 0x1000, scoped, tag = 'input window, operand 2, single buffered']
    #allocation8 [shape = 'u8[262144]{0}', space=vmem, size = 0x40000, scoped, tag = 'input window, operand 3, single buffered']
    #allocation9 [shape = 's32[1]{0}', space=sflag, size = 0x4, scoped, tag = 'scoped memory for tpu_custom_call.1']
    #allocation10 [shape = 'u8[512]{0}', space=vmem, size = 0x400, scoped, tag = 'input window, operand 4, single buffered']
    #allocation11 [shape = 'u8[32768]{0}', space=vmem, size = 0x8000, scoped, tag = 'input window, operand 5, single buffered']
    #allocation12 [shape = 's32[1]{0}', space=sflag, size = 0x4, scoped, tag = 'scoped memory for tpu_custom_call.1']
    #allocation13 [shape = 'u8[512]{0}', space=vmem, size = 0x400, scoped, tag = 'input window, operand 6, single buffered']
    #allocation14 [shape = 'u8[4096]{0}', space=vmem, size = 0x1000, scoped, tag = 'output window, operand 0, single buffered']
    %12 = vsyncpa [#allocation3], 0
    %13 = vsyncpa [#allocation6], 0
    %14 = vsyncpa [#allocation9], 0
    %15 = vsyncpa [#allocation12], 0
    %16 = vsyncpa [#allocation4], 0
    // Predicated region
    $region2: #{tpu_custom_call.1} parent=1 // pred_check
      _
    $region3: #{tpu_custom_call.1} parent=1 // pred_check_branch
      %18 = sbr.rel (0) target = $region5
    $region4: #{tpu_custom_call.1} parent=1 // pred_region
      %s20 = ssub.s32 768, 768
      %21 = vsyncadd [#allocation3], %s20
      %s23 = sshll.u32 [#allocation2], 4
      %s24 = int_to_ptr.vmem [resolvable:$true] %s23
      %26 = dma.hbm_to_vmem [thread:$0]  %s0, 768, %s24, [#allocation3]
    $region5: #{tpu_custom_call.1} parent=1 // pred_fallthru
      _
    // Predicated region
    $region6: #{tpu_custom_call.1} parent=1 // pred_check
      _
    $region7: #{tpu_custom_call.1} parent=1 // pred_check_branch
      %28 = sbr.rel (0) target = $region9
    $region8: #{tpu_custom_call.1} parent=1 // pred_region
      %s30 = ssub.s32 49152, 49152
      %31 = vsyncadd [#allocation6], %s30
      %s32 = sshll.u32 [#allocation5], 4
      %s33 = int_to_ptr.vmem [resolvable:$true] %s32
      %38 = dma.hbm_to_vmem [thread:$0]  %s1, 49152, %s33, [#allocation6], 512, 512, 32
    $region9: #{tpu_custom_call.1} parent=1 // pred_fallthru
      _
    // Predicated region
    $region10: #{tpu_custom_call.1} parent=1 // pred_check
      _
    $region11: #{tpu_custom_call.1} parent=1 // pred_check_branch
      %40 = sbr.rel (0) target = $region13
    $region12: #{tpu_custom_call.1} parent=1 // pred_region
      %s42 = ssub.s32 128, 128
      %43 = vsyncadd [#allocation6], %s42
      %s45 = sshll.u32 [#allocation7], 4
      %s46 = int_to_ptr.vmem [resolvable:$true] %s45
      %48 = dma.hbm_to_vmem [thread:$0]  %s2, 128, %s46, [#allocation6]
    $region13: #{tpu_custom_call.1} parent=1 // pred_fallthru
      _
    // Predicated region
    $region14: #{tpu_custom_call.1} parent=1 // pred_check
      _
    $region15: #{tpu_custom_call.1} parent=1 // pred_check_branch
      %50 = sbr.rel (0) target = $region17
    $region16: #{tpu_custom_call.1} parent=1 // pred_region
      %s52 = ssub.s32 8192, 8192
      %53 = vsyncadd [#allocation9], %s52
      %s54 = sshll.u32 [#allocation8], 4
      %s55 = int_to_ptr.vmem [resolvable:$true] %s54
      %60 = dma.hbm_to_vmem [thread:$0]  %s3, 8192, %s55, [#allocation9], 64, 64, 4
    $region17: #{tpu_custom_call.1} parent=1 // pred_fallthru
      _
    // Predicated region
    $region18: #{tpu_custom_call.1} parent=1 // pred_check
      _
    $region19: #{tpu_custom_call.1} parent=1 // pred_check_branch
      %62 = sbr.rel (0) target = $region21
    $region20: #{tpu_custom_call.1} parent=1 // pred_region
      %s64 = ssub.s32 16, 16
      %65 = vsyncadd [#allocation9], %s64
      %s67 = sshll.u32 [#allocation10], 4
      %s68 = int_to_ptr.vmem [resolvable:$true] %s67
      %70 = dma.hbm_to_vmem [thread:$0]  %s4, 16, %s68, [#allocation9]
    $region21: #{tpu_custom_call.1} parent=1 // pred_fallthru
      _
    // Predicated region
    $region22: #{tpu_custom_call.1} parent=1 // pred_check
      _
    $region23: #{tpu_custom_call.1} parent=1 // pred_check_branch
      %72 = sbr.rel (0) target = $region25
    $region24: #{tpu_custom_call.1} parent=1 // pred_region
      %s74 = ssub.s32 1024, 1024
      %75 = vsyncadd [#allocation12], %s74
      %s76 = sshll.u32 [#allocation11], 4
      %s77 = int_to_ptr.vmem [resolvable:$true] %s76
      %82 = dma.hbm_to_vmem [thread:$0]  %s5, 1024, %s77, [#allocation12], 64, 64, 4
    $region25: #{tpu_custom_call.1} parent=1 // pred_fallthru
      _
    // Predicated region
    $region26: #{tpu_custom_call.1} parent=1 // pred_check
      _
    $region27: #{tpu_custom_call.1} parent=1 // pred_check_branch
      %84 = sbr.rel (0) target = $region29
    $region28: #{tpu_custom_call.1} parent=1 // pred_region
      %s86 = ssub.s32 16, 16
      %87 = vsyncadd [#allocation12], %s86
      %s89 = sshll.u32 [#allocation13], 4
      %s90 = int_to_ptr.vmem [resolvable:$true] %s89
      %92 = dma.hbm_to_vmem [thread:$0]  %s6, 16, %s90, [#allocation12]
    $region29: #{tpu_custom_call.1} parent=1 // pred_fallthru
      _
    // Predicated region
    $region30: #{tpu_custom_call.1} parent=1 // pred_check
      _
    $region31: #{tpu_custom_call.1} parent=1 // pred_check_branch
      %94 = sbr.rel (0) target = $region33
    $region32: #{tpu_custom_call.1} parent=1 // pred_region
      %95 = dma.done [#allocation3], 768
    $region33: #{tpu_custom_call.1} parent=1 // pred_fallthru
      _
    // Predicated region
    $region34: #{tpu_custom_call.1} parent=1 // pred_check
      _
    $region35: #{tpu_custom_call.1} parent=1 // pred_check_branch
      %97 = sbr.rel (0) target = $region37
    $region36: #{tpu_custom_call.1} parent=1 // pred_region
      %98 = dma.done [#allocation6], 49152
    $region37: #{tpu_custom_call.1} parent=1 // pred_fallthru
      _
    // Predicated region
    $region38: #{tpu_custom_call.1} parent=1 // pred_check
      _
    $region39: #{tpu_custom_call.1} parent=1 // pred_check_branch
      %100 = sbr.rel (0) target = $region41
    $region40: #{tpu_custom_call.1} parent=1 // pred_region
      %101 = dma.done [#allocation6], 128
    $region41: #{tpu_custom_call.1} parent=1 // pred_fallthru
      _
    // Predicated region
    $region42: #{tpu_custom_call.1} parent=1 // pred_check
      _
    $region43: #{tpu_custom_call.1} parent=1 // pred_check_branch
      %103 = sbr.rel (0) target = $region45
    $region44: #{tpu_custom_call.1} parent=1 // pred_region
      %104 = dma.done [#allocation9], 8192
    $region45: #{tpu_custom_call.1} parent=1 // pred_fallthru
      _
    // Predicated region
    $region46: #{tpu_custom_call.1} parent=1 // pred_check
      _
    $region47: #{tpu_custom_call.1} parent=1 // pred_check_branch
      %106 = sbr.rel (0) target = $region49
    $region48: #{tpu_custom_call.1} parent=1 // pred_region
      %107 = dma.done [#allocation9], 16
    $region49: #{tpu_custom_call.1} parent=1 // pred_fallthru
      _
    // Predicated region
    $region50: #{tpu_custom_call.1} parent=1 // pred_check
      _
    $region51: #{tpu_custom_call.1} parent=1 // pred_check_branch
      %109 = sbr.rel (0) target = $region53
    $region52: #{tpu_custom_call.1} parent=1 // pred_region
      %110 = dma.done [#allocation12], 1024
    $region53: #{tpu_custom_call.1} parent=1 // pred_fallthru
      _
    // Predicated region
    $region54: #{tpu_custom_call.1} parent=1 // pred_check
      _
    $region55: #{tpu_custom_call.1} parent=1 // pred_check_branch
      %112 = sbr.rel (0) target = $region57
    $region56: #{tpu_custom_call.1} parent=1 // pred_region
      %113 = dma.done [#allocation12], 16
    $region57: #{tpu_custom_call.1} parent=1 // pred_fallthru
      _
    %v115 = vld [vmem:[#allocation2] sm:$0xff]
    %v116 = vld [vmem:[#allocation2 + $0x8] sm:$0xff]
    %v117 = vld [vmem:[#allocation2 + $0x10] sm:$0xff]
    %v118 = vld [vmem:[#allocation2 + $0x18] sm:$0xff]
    %v119 = vld [vmem:[#allocation2 + $0x20] sm:$0xff]
    %v120 = vld [vmem:[#allocation2 + $0x28] sm:$0xff]
    %v121 = vpack.c.bf16 %v115, %v115
    %v122 = vpack.c.bf16 %v116, %v116
    %v123 = vpack.c.bf16 %v117, %v117
    %v124 = vpack.c.bf16 %v118, %v118
    %v125 = vpack.c.bf16 %v119, %v119
    %v126 = vpack.c.bf16 %v120, %v120
    %v127 = vld [vmem:[#allocation5] sm:$0xff]
    %v128 = vld [vmem:[#allocation5 + $0x8] sm:$0xff]
    %v129 = vld [vmem:[#allocation5 + $0x10] sm:$0xff]
    %v130 = vld [vmem:[#allocation5 + $0x18] sm:$0xff]
    %v131 = vld [vmem:[#allocation5 + $0x20] sm:$0xff]
    %v132 = vld [vmem:[#allocation5 + $0x28] sm:$0xff]
    %v133 = vld [vmem:[#allocation5 + $0x30] sm:$0xff]
    %v134 = vld [vmem:[#allocation5 + $0x38] sm:$0xff]
    %v135 = vld [vmem:[#allocation5 + $0x40] sm:$0xff]
    %v136 = vld [vmem:[#allocation5 + $0x48] sm:$0xff]
    %v137 = vld [vmem:[#allocation5 + $0x50] sm:$0xff]
    %v138 = vld [vmem:[#allocation5 + $0x58] sm:$0xff]
    %v139 = vld [vmem:[#allocation5 + $0x60] sm:$0xff]
    %v140 = vld [vmem:[#allocation5 + $0x68] sm:$0xff]
    %v141 = vld [vmem:[#allocation5 + $0x70] sm:$0xff]
    %v142 = vld [vmem:[#allocation5 + $0x78] sm:$0xff]
    %v143 = vld [vmem:[#allocation5 + $0x80] sm:$0xff]
    %v144 = vld [vmem:[#allocation5 + $0x88] sm:$0xff]
    %v145 = vld [vmem:[#allocation5 + $0x90] sm:$0xff]
    %v146 = vld [vmem:[#allocation5 + $0x98] sm:$0xff]
    %v147 = vld [vmem:[#allocation5 + $0xa0] sm:$0xff]
    %v148 = vld [vmem:[#allocation5 + $0xa8] sm:$0xff]
    %v149 = vld [vmem:[#allocation5 + $0xb0] sm:$0xff]
    %v150 = vld [vmem:[#allocation5 + $0xb8] sm:$0xff]
    %v151 = vld [vmem:[#allocation5 + $0xc0] sm:$0xff]
    %v152 = vld [vmem:[#allocation5 + $0xc8] sm:$0xff]
    %v153 = vld [vmem:[#allocation5 + $0xd0] sm:$0xff]
    %v154 = vld [vmem:[#allocation5 + $0xd8] sm:$0xff]
    %v155 = vld [vmem:[#allocation5 + $0xe0] sm:$0xff]
    %v156 = vld [vmem:[#allocation5 + $0xe8] sm:$0xff]
    %v157 = vld [vmem:[#allocation5 + $0xf0] sm:$0xff]
    %v158 = vld [vmem:[#allocation5 + $0xf8] sm:$0xff]
    %v159 = vld [vmem:[#allocation5 + $0x100] sm:$0xff]
    %v160 = vld [vmem:[#allocation5 + $0x108] sm:$0xff]
    %v161 = vld [vmem:[#allocation5 + $0x110] sm:$0xff]
    %v162 = vld [vmem:[#allocation5 + $0x118] sm:$0xff]
    %v163 = vld [vmem:[#allocation5 + $0x120] sm:$0xff]
    %v164 = vld [vmem:[#allocation5 + $0x128] sm:$0xff]
    %v165 = vld [vmem:[#allocation5 + $0x130] sm:$0xff]
    %v166 = vld [vmem:[#allocation5 + $0x138] sm:$0xff]
    %v167 = vld [vmem:[#allocation5 + $0x140] sm:$0xff]
    %v168 = vld [vmem:[#allocation5 + $0x148] sm:$0xff]
    %v169 = vld [vmem:[#allocation5 + $0x150] sm:$0xff]
    %v170 = vld [vmem:[#allocation5 + $0x158] sm:$0xff]
    %v171 = vld [vmem:[#allocation5 + $0x160] sm:$0xff]
    %v172 = vld [vmem:[#allocation5 + $0x168] sm:$0xff]
    %v173 = vld [vmem:[#allocation5 + $0x170] sm:$0xff]
    %v174 = vld [vmem:[#allocation5 + $0x178] sm:$0xff]
    %v175 = vld [vmem:[#allocation5 + $0x180] sm:$0xff]
    %v176 = vld [vmem:[#allocation5 + $0x188] sm:$0xff]
    %v177 = vld [vmem:[#allocation5 + $0x190] sm:$0xff]
    %v178 = vld [vmem:[#allocation5 + $0x198] sm:$0xff]
    %v179 = vld [vmem:[#allocation5 + $0x1a0] sm:$0xff]
    %v180 = vld [vmem:[#allocation5 + $0x1a8] sm:$0xff]
    %v181 = vld [vmem:[#allocation5 + $0x1b0] sm:$0xff]
    %v182 = vld [vmem:[#allocation5 + $0x1b8] sm:$0xff]
    %v183 = vld [vmem:[#allocation5 + $0x1c0] sm:$0xff]
    %v184 = vld [vmem:[#allocation5 + $0x1c8] sm:$0xff]
    %v185 = vld [vmem:[#allocation5 + $0x1d0] sm:$0xff]
    %v186 = vld [vmem:[#allocation5 + $0x1d8] sm:$0xff]
    %v187 = vld [vmem:[#allocation5 + $0x1e0] sm:$0xff]
    %v188 = vld [vmem:[#allocation5 + $0x1e8] sm:$0xff]
    %v189 = vld [vmem:[#allocation5 + $0x1f0] sm:$0xff]
    %v190 = vld [vmem:[#allocation5 + $0x1f8] sm:$0xff]
    %v191 = vld [vmem:[#allocation5 + $0x200] sm:$0xff]
    %v192 = vld [vmem:[#allocation5 + $0x208] sm:$0xff]
    %v193 = vld [vmem:[#allocation5 + $0x210] sm:$0xff]
    %v194 = vld [vmem:[#allocation5 + $0x218] sm:$0xff]
    %v195 = vld [vmem:[#allocation5 + $0x220] sm:$0xff]
    %v196 = vld [vmem:[#allocation5 + $0x228] sm:$0xff]
    %v197 = vld [vmem:[#allocation5 + $0x230] sm:$0xff]
    %v198 = vld [vmem:[#allocation5 + $0x238] sm:$0xff]
    %v199 = vld [vmem:[#allocation5 + $0x240] sm:$0xff]
    %v200 = vld [vmem:[#allocation5 + $0x248] sm:$0xff]
    %v201 = vld [vmem:[#allocation5 + $0x250] sm:$0xff]
    %v202 = vld [vmem:[#allocation5 + $0x258] sm:$0xff]
    %v203 = vld [vmem:[#allocation5 + $0x260] sm:$0xff]
    %v204 = vld [vmem:[#allocation5 + $0x268] sm:$0xff]
    %v205 = vld [vmem:[#allocation5 + $0x270] sm:$0xff]
    %v206 = vld [vmem:[#allocation5 + $0x278] sm:$0xff]
    %v207 = vld [vmem:[#allocation5 + $0x280] sm:$0xff]
    %v208 = vld [vmem:[#allocation5 + $0x288] sm:$0xff]
    %v209 = vld [vmem:[#allocation5 + $0x290] sm:$0xff]
    %v210 = vld [vmem:[#allocation5 + $0x298] sm:$0xff]
    %v211 = vld [vmem:[#allocation5 + $0x2a0] sm:$0xff]
    %v212 = vld [vmem:[#allocation5 + $0x2a8] sm:$0xff]
    %v213 = vld [vmem:[#allocation5 + $0x2b0] sm:$0xff]
    %v214 = vld [vmem:[#allocation5 + $0x2b8] sm:$0xff]
    %v215 = vld [vmem:[#allocation5 + $0x2c0] sm:$0xff]
    %v216 = vld [vmem:[#allocation5 + $0x2c8] sm:$0xff]
    %v217 = vld [vmem:[#allocation5 + $0x2d0] sm:$0xff]
    %v218 = vld [vmem:[#allocation5 + $0x2d8] sm:$0xff]
    %v219 = vld [vmem:[#allocation5 + $0x2e0] sm:$0xff]
    %v220 = vld [vmem:[#allocation5 + $0x2e8] sm:$0xff]
    %v221 = vld [vmem:[#allocation5 + $0x2f0] sm:$0xff]
    %v222 = vld [vmem:[#allocation5 + $0x2f8] sm:$0xff]
    %v223 = vld [vmem:[#allocation5 + $0x300] sm:$0xff]
    %v224 = vld [vmem:[#allocation5 + $0x308] sm:$0xff]
    %v225 = vld [vmem:[#allocation5 + $0x310] sm:$0xff]
    %v226 = vld [vmem:[#allocation5 + $0x318] sm:$0xff]
    %v227 = vld [vmem:[#allocation5 + $0x320] sm:$0xff]
    %v228 = vld [vmem:[#allocation5 + $0x328] sm:$0xff]
    %v229 = vld [vmem:[#allocation5 + $0x330] sm:$0xff]
    %v230 = vld [vmem:[#allocation5 + $0x338] sm:$0xff]
    %v231 = vld [vmem:[#allocation5 + $0x340] sm:$0xff]
    %v232 = vld [vmem:[#allocation5 + $0x348] sm:$0xff]
    %v233 = vld [vmem:[#allocation5 + $0x350] sm:$0xff]
    %v234 = vld [vmem:[#allocation5 + $0x358] sm:$0xff]
    %v235 = vld [vmem:[#allocation5 + $0x360] sm:$0xff]
    %v236 = vld [vmem:[#allocation5 + $0x368] sm:$0xff]
    %v237 = vld [vmem:[#allocation5 + $0x370] sm:$0xff]
    %v238 = vld [vmem:[#allocation5 + $0x378] sm:$0xff]
    %v239 = vld [vmem:[#allocation5 + $0x380] sm:$0xff]
    %v240 = vld [vmem:[#allocation5 + $0x388] sm:$0xff]
    %v241 = vld [vmem:[#allocation5 + $0x390] sm:$0xff]
    %v242 = vld [vmem:[#allocation5 + $0x398] sm:$0xff]
    %v243 = vld [vmem:[#allocation5 + $0x3a0] sm:$0xff]
    %v244 = vld [vmem:[#allocation5 + $0x3a8] sm:$0xff]
    %v245 = vld [vmem:[#allocation5 + $0x3b0] sm:$0xff]
    %v246 = vld [vmem:[#allocation5 + $0x3b8] sm:$0xff]
    %v247 = vld [vmem:[#allocation5 + $0x3c0] sm:$0xff]
    %v248 = vld [vmem:[#allocation5 + $0x3c8] sm:$0xff]
    %v249 = vld [vmem:[#allocation5 + $0x3d0] sm:$0xff]
    %v250 = vld [vmem:[#allocation5 + $0x3d8] sm:$0xff]
    %v251 = vld [vmem:[#allocation5 + $0x3e0] sm:$0xff]
    %v252 = vld [vmem:[#allocation5 + $0x3e8] sm:$0xff]
    %v253 = vld [vmem:[#allocation5 + $0x3f0] sm:$0xff]
    %v254 = vld [vmem:[#allocation5 + $0x3f8] sm:$0xff]
    %v255 = vld [vmem:[#allocation5 + $0x400] sm:$0xff]
    %v256 = vld [vmem:[#allocation5 + $0x408] sm:$0xff]
    %v257 = vld [vmem:[#allocation5 + $0x410] sm:$0xff]
    %v258 = vld [vmem:[#allocation5 + $0x418] sm:$0xff]
    %v259 = vld [vmem:[#allocation5 + $0x420] sm:$0xff]
    %v260 = vld [vmem:[#allocation5 + $0x428] sm:$0xff]
    %v261 = vld [vmem:[#allocation5 + $0x430] sm:$0xff]
    %v262 = vld [vmem:[#allocation5 + $0x438] sm:$0xff]
    %v263 = vld [vmem:[#allocation5 + $0x440] sm:$0xff]
    %v264 = vld [vmem:[#allocation5 + $0x448] sm:$0xff]
    %v265 = vld [vmem:[#allocation5 + $0x450] sm:$0xff]
    %v266 = vld [vmem:[#allocation5 + $0x458] sm:$0xff]
    %v267 = vld [vmem:[#allocation5 + $0x460] sm:$0xff]
    %v268 = vld [vmem:[#allocation5 + $0x468] sm:$0xff]
    %v269 = vld [vmem:[#allocation5 + $0x470] sm:$0xff]
    %v270 = vld [vmem:[#allocation5 + $0x478] sm:$0xff]
    %v271 = vld [vmem:[#allocation5 + $0x480] sm:$0xff]
    %v272 = vld [vmem:[#allocation5 + $0x488] sm:$0xff]
    %v273 = vld [vmem:[#allocation5 + $0x490] sm:$0xff]
    %v274 = vld [vmem:[#allocation5 + $0x498] sm:$0xff]
    %v275 = vld [vmem:[#allocation5 + $0x4a0] sm:$0xff]
    %v276 = vld [vmem:[#allocation5 + $0x4a8] sm:$0xff]
    %v277 = vld [vmem:[#allocation5 + $0x4b0] sm:$0xff]
    %v278 = vld [vmem:[#allocation5 + $0x4b8] sm:$0xff]
    %v279 = vld [vmem:[#allocation5 + $0x4c0] sm:$0xff]
    %v280 = vld [vmem:[#allocation5 + $0x4c8] sm:$0xff]
    %v281 = vld [vmem:[#allocation5 + $0x4d0] sm:$0xff]
    %v282 = vld [vmem:[#allocation5 + $0x4d8] sm:$0xff]
    %v283 = vld [vmem:[#allocation5 + $0x4e0] sm:$0xff]
    %v284 = vld [vmem:[#allocation5 + $0x4e8] sm:$0xff]
    %v285 = vld [vmem:[#allocation5 + $0x4f0] sm:$0xff]
    %v286 = vld [vmem:[#allocation5 + $0x4f8] sm:$0xff]
    %v287 = vld [vmem:[#allocation5 + $0x500] sm:$0xff]
    %v288 = vld [vmem:[#allocation5 + $0x508] sm:$0xff]
    %v289 = vld [vmem:[#allocation5 + $0x510] sm:$0xff]
    %v290 = vld [vmem:[#allocation5 + $0x518] sm:$0xff]
    %v291 = vld [vmem:[#allocation5 + $0x520] sm:$0xff]
    %v292 = vld [vmem:[#allocation5 + $0x528] sm:$0xff]
    %v293 = vld [vmem:[#allocation5 + $0x530] sm:$0xff]
    %v294 = vld [vmem:[#allocation5 + $0x538] sm:$0xff]
    %v295 = vld [vmem:[#allocation5 + $0x540] sm:$0xff]
    %v296 = vld [vmem:[#allocation5 + $0x548] sm:$0xff]
    %v297 = vld [vmem:[#allocation5 + $0x550] sm:$0xff]
    %v298 = vld [vmem:[#allocation5 + $0x558] sm:$0xff]
    %v299 = vld [vmem:[#allocation5 + $0x560] sm:$0xff]
    %v300 = vld [vmem:[#allocation5 + $0x568] sm:$0xff]
    %v301 = vld [vmem:[#allocation5 + $0x570] sm:$0xff]
    %v302 = vld [vmem:[#allocation5 + $0x578] sm:$0xff]
    %v303 = vld [vmem:[#allocation5 + $0x580] sm:$0xff]
    %v304 = vld [vmem:[#allocation5 + $0x588] sm:$0xff]
    %v305 = vld [vmem:[#allocation5 + $0x590] sm:$0xff]
    %v306 = vld [vmem:[#allocation5 + $0x598] sm:$0xff]
    %v307 = vld [vmem:[#allocation5 + $0x5a0] sm:$0xff]
    %v308 = vld [vmem:[#allocation5 + $0x5a8] sm:$0xff]
    %v309 = vld [vmem:[#allocation5 + $0x5b0] sm:$0xff]
    %v310 = vld [vmem:[#allocation5 + $0x5b8] sm:$0xff]
    %v311 = vld [vmem:[#allocation5 + $0x5c0] sm:$0xff]
    %v312 = vld [vmem:[#allocation5 + $0x5c8] sm:$0xff]
    %v313 = vld [vmem:[#allocation5 + $0x5d0] sm:$0xff]
    %v314 = vld [vmem:[#allocation5 + $0x5d8] sm:$0xff]
    %v315 = vld [vmem:[#allocation5 + $0x5e0] sm:$0xff]
    %v316 = vld [vmem:[#allocation5 + $0x5e8] sm:$0xff]
    %v317 = vld [vmem:[#allocation5 + $0x5f0] sm:$0xff]
    %v318 = vld [vmem:[#allocation5 + $0x5f8] sm:$0xff]
    %v319 = vld [vmem:[#allocation5 + $0x600] sm:$0xff]
    %v320 = vld [vmem:[#allocation5 + $0x608] sm:$0xff]
    %v321 = vld [vmem:[#allocation5 + $0x610] sm:$0xff]
    %v322 = vld [vmem:[#allocation5 + $0x618] sm:$0xff]
    %v323 = vld [vmem:[#allocation5 + $0x620] sm:$0xff]
    %v324 = vld [vmem:[#allocation5 + $0x628] sm:$0xff]
    %v325 = vld [vmem:[#allocation5 + $0x630] sm:$0xff]
    %v326 = vld [vmem:[#allocation5 + $0x638] sm:$0xff]
    %v327 = vld [vmem:[#allocation5 + $0x640] sm:$0xff]
    %v328 = vld [vmem:[#allocation5 + $0x648] sm:$0xff]
    %v329 = vld [vmem:[#allocation5 + $0x650] sm:$0xff]
    %v330 = vld [vmem:[#allocation5 + $0x658] sm:$0xff]
    %v331 = vld [vmem:[#allocation5 + $0x660] sm:$0xff]
    %v332 = vld [vmem:[#allocation5 + $0x668] sm:$0xff]
    %v333 = vld [vmem:[#allocation5 + $0x670] sm:$0xff]
    %v334 = vld [vmem:[#allocation5 + $0x678] sm:$0xff]
    %v335 = vld [vmem:[#allocation5 + $0x680] sm:$0xff]
    %v336 = vld [vmem:[#allocation5 + $0x688] sm:$0xff]
    %v337 = vld [vmem:[#allocation5 + $0x690] sm:$0xff]
    %v338 = vld [vmem:[#allocation5 + $0x698] sm:$0xff]
    %v339 = vld [vmem:[#allocation5 + $0x6a0] sm:$0xff]
    %v340 = vld [vmem:[#allocation5 + $0x6a8] sm:$0xff]
    %v341 = vld [vmem:[#allocation5 + $0x6b0] sm:$0xff]
    %v342 = vld [vmem:[#allocation5 + $0x6b8] sm:$0xff]
    %v343 = vld [vmem:[#allocation5 + $0x6c0] sm:$0xff]
    %v344 = vld [vmem:[#allocation5 + $0x6c8] sm:$0xff]
    %v345 = vld [vmem:[#allocation5 + $0x6d0] sm:$0xff]
    %v346 = vld [vmem:[#allocation5 + $0x6d8] sm:$0xff]
    %v347 = vld [vmem:[#allocation5 + $0x6e0] sm:$0xff]
    %v348 = vld [vmem:[#allocation5 + $0x6e8] sm:$0xff]
    %v349 = vld [vmem:[#allocation5 + $0x6f0] sm:$0xff]
    %v350 = vld [vmem:[#allocation5 + $0x6f8] sm:$0xff]
    %v351 = vld [vmem:[#allocation5 + $0x700] sm:$0xff]
    %v352 = vld [vmem:[#allocation5 + $0x708] sm:$0xff]
    %v353 = vld [vmem:[#allocation5 + $0x710] sm:$0xff]
    %v354 = vld [vmem:[#allocation5 + $0x718] sm:$0xff]
    %v355 = vld [vmem:[#allocation5 + $0x720] sm:$0xff]
    %v356 = vld [vmem:[#allocation5 + $0x728] sm:$0xff]
    %v357 = vld [vmem:[#allocation5 + $0x730] sm:$0xff]
    %v358 = vld [vmem:[#allocation5 + $0x738] sm:$0xff]
    %v359 = vld [vmem:[#allocation5 + $0x740] sm:$0xff]
    %v360 = vld [vmem:[#allocation5 + $0x748] sm:$0xff]
    %v361 = vld [vmem:[#allocation5 + $0x750] sm:$0xff]
    %v362 = vld [vmem:[#allocation5 + $0x758] sm:$0xff]
    %v363 = vld [vmem:[#allocation5 + $0x760] sm:$0xff]
    %v364 = vld [vmem:[#allocation5 + $0x768] sm:$0xff]
    %v365 = vld [vmem:[#allocation5 + $0x770] sm:$0xff]
    %v366 = vld [vmem:[#allocation5 + $0x778] sm:$0xff]
    %v367 = vld [vmem:[#allocation5 + $0x780] sm:$0xff]
    %v368 = vld [vmem:[#allocation5 + $0x788] sm:$0xff]
    %v369 = vld [vmem:[#allocation5 + $0x790] sm:$0xff]
    %v370 = vld [vmem:[#allocation5 + $0x798] sm:$0xff]
    %v371 = vld [vmem:[#allocation5 + $0x7a0] sm:$0xff]
    %v372 = vld [vmem:[#allocation5 + $0x7a8] sm:$0xff]
    %v373 = vld [vmem:[#allocation5 + $0x7b0] sm:$0xff]
    %v374 = vld [vmem:[#allocation5 + $0x7b8] sm:$0xff]
    %v375 = vld [vmem:[#allocation5 + $0x7c0] sm:$0xff]
    %v376 = vld [vmem:[#allocation5 + $0x7c8] sm:$0xff]
    %v377 = vld [vmem:[#allocation5 + $0x7d0] sm:$0xff]
    %v378 = vld [vmem:[#allocation5 + $0x7d8] sm:$0xff]
    %v379 = vld [vmem:[#allocation5 + $0x7e0] sm:$0xff]
    %v380 = vld [vmem:[#allocation5 + $0x7e8] sm:$0xff]
    %v381 = vld [vmem:[#allocation5 + $0x7f0] sm:$0xff]
    %v382 = vld [vmem:[#allocation5 + $0x7f8] sm:$0xff]
    %v383 = vld [vmem:[#allocation5 + $0x800] sm:$0xff]
    %v384 = vld [vmem:[#allocation5 + $0x808] sm:$0xff]
    %v385 = vld [vmem:[#allocation5 + $0x810] sm:$0xff]
    %v386 = vld [vmem:[#allocation5 + $0x818] sm:$0xff]
    %v387 = vld [vmem:[#allocation5 + $0x820] sm:$0xff]
    %v388 = vld [vmem:[#allocation5 + $0x828] sm:$0xff]
    %v389 = vld [vmem:[#allocation5 + $0x830] sm:$0xff]
    %v390 = vld [vmem:[#allocation5 + $0x838] sm:$0xff]
    %v391 = vld [vmem:[#allocation5 + $0x840] sm:$0xff]
    %v392 = vld [vmem:[#allocation5 + $0x848] sm:$0xff]
    %v393 = vld [vmem:[#allocation5 + $0x850] sm:$0xff]
    %v394 = vld [vmem:[#allocation5 + $0x858] sm:$0xff]
    %v395 = vld [vmem:[#allocation5 + $0x860] sm:$0xff]
    %v396 = vld [vmem:[#allocation5 + $0x868] sm:$0xff]
    %v397 = vld [vmem:[#allocation5 + $0x870] sm:$0xff]
    %v398 = vld [vmem:[#allocation5 + $0x878] sm:$0xff]
    %v399 = vld [vmem:[#allocation5 + $0x880] sm:$0xff]
    %v400 = vld [vmem:[#allocation5 + $0x888] sm:$0xff]
    %v401 = vld [vmem:[#allocation5 + $0x890] sm:$0xff]
    %v402 = vld [vmem:[#allocation5 + $0x898] sm:$0xff]
    %v403 = vld [vmem:[#allocation5 + $0x8a0] sm:$0xff]
    %v404 = vld [vmem:[#allocation5 + $0x8a8] sm:$0xff]
    %v405 = vld [vmem:[#allocation5 + $0x8b0] sm:$0xff]
    %v406 = vld [vmem:[#allocation5 + $0x8b8] sm:$0xff]
    %v407 = vld [vmem:[#allocation5 + $0x8c0] sm:$0xff]
    %v408 = vld [vmem:[#allocation5 + $0x8c8] sm:$0xff]
    %v409 = vld [vmem:[#allocation5 + $0x8d0] sm:$0xff]
    %v410 = vld [vmem:[#allocation5 + $0x8d8] sm:$0xff]
    %v411 = vld [vmem:[#allocation5 + $0x8e0] sm:$0xff]
    %v412 = vld [vmem:[#allocation5 + $0x8e8] sm:$0xff]
    %v413 = vld [vmem:[#allocation5 + $0x8f0] sm:$0xff]
    %v414 = vld [vmem:[#allocation5 + $0x8f8] sm:$0xff]
    %v415 = vld [vmem:[#allocation5 + $0x900] sm:$0xff]
    %v416 = vld [vmem:[#allocation5 + $0x908] sm:$0xff]
    %v417 = vld [vmem:[#allocation5 + $0x910] sm:$0xff]
    %v418 = vld [vmem:[#allocation5 + $0x918] sm:$0xff]
    %v419 = vld [vmem:[#allocation5 + $0x920] sm:$0xff]
    %v420 = vld [vmem:[#allocation5 + $0x928] sm:$0xff]
    %v421 = vld [vmem:[#allocation5 + $0x930] sm:$0xff]
    %v422 = vld [vmem:[#allocation5 + $0x938] sm:$0xff]
    %v423 = vld [vmem:[#allocation5 + $0x940] sm:$0xff]
    %v424 = vld [vmem:[#allocation5 + $0x948] sm:$0xff]
    %v425 = vld [vmem:[#allocation5 + $0x950] sm:$0xff]
    %v426 = vld [vmem:[#allocation5 + $0x958] sm:$0xff]
    %v427 = vld [vmem:[#allocation5 + $0x960] sm:$0xff]
    %v428 = vld [vmem:[#allocation5 + $0x968] sm:$0xff]
    %v429 = vld [vmem:[#allocation5 + $0x970] sm:$0xff]
    %v430 = vld [vmem:[#allocation5 + $0x978] sm:$0xff]
    %v431 = vld [vmem:[#allocation5 + $0x980] sm:$0xff]
    %v432 = vld [vmem:[#allocation5 + $0x988] sm:$0xff]
    %v433 = vld [vmem:[#allocation5 + $0x990] sm:$0xff]
    %v434 = vld [vmem:[#allocation5 + $0x998] sm:$0xff]
    %v435 = vld [vmem:[#allocation5 + $0x9a0] sm:$0xff]
    %v436 = vld [vmem:[#allocation5 + $0x9a8] sm:$0xff]
    %v437 = vld [vmem:[#allocation5 + $0x9b0] sm:$0xff]
    %v438 = vld [vmem:[#allocation5 + $0x9b8] sm:$0xff]
    %v439 = vld [vmem:[#allocation5 + $0x9c0] sm:$0xff]
    %v440 = vld [vmem:[#allocation5 + $0x9c8] sm:$0xff]
    %v441 = vld [vmem:[#allocation5 + $0x9d0] sm:$0xff]
    %v442 = vld [vmem:[#allocation5 + $0x9d8] sm:$0xff]
    %v443 = vld [vmem:[#allocation5 + $0x9e0] sm:$0xff]
    %v444 = vld [vmem:[#allocation5 + $0x9e8] sm:$0xff]
    %v445 = vld [vmem:[#allocation5 + $0x9f0] sm:$0xff]
    %v446 = vld [vmem:[#allocation5 + $0x9f8] sm:$0xff]
    %v447 = vld [vmem:[#allocation5 + $0xa00] sm:$0xff]
    %v448 = vld [vmem:[#allocation5 + $0xa08] sm:$0xff]
    %v449 = vld [vmem:[#allocation5 + $0xa10] sm:$0xff]
    %v450 = vld [vmem:[#allocation5 + $0xa18] sm:$0xff]
    %v451 = vld [vmem:[#allocation5 + $0xa20] sm:$0xff]
    %v452 = vld [vmem:[#allocation5 + $0xa28] sm:$0xff]
    %v453 = vld [vmem:[#allocation5 + $0xa30] sm:$0xff]
    %v454 = vld [vmem:[#allocation5 + $0xa38] sm:$0xff]
    %v455 = vld [vmem:[#allocation5 + $0xa40] sm:$0xff]
    %v456 = vld [vmem:[#allocation5 + $0xa48] sm:$0xff]
    %v457 = vld [vmem:[#allocation5 + $0xa50] sm:$0xff]
    %v458 = vld [vmem:[#allocation5 + $0xa58] sm:$0xff]
    %v459 = vld [vmem:[#allocation5 + $0xa60] sm:$0xff]
    %v460 = vld [vmem:[#allocation5 + $0xa68] sm:$0xff]
    %v461 = vld [vmem:[#allocation5 + $0xa70] sm:$0xff]
    %v462 = vld [vmem:[#allocation5 + $0xa78] sm:$0xff]
    %v463 = vld [vmem:[#allocation5 + $0xa80] sm:$0xff]
    %v464 = vld [vmem:[#allocation5 + $0xa88] sm:$0xff]
    %v465 = vld [vmem:[#allocation5 + $0xa90] sm:$0xff]
    %v466 = vld [vmem:[#allocation5 + $0xa98] sm:$0xff]
    %v467 = vld [vmem:[#allocation5 + $0xaa0] sm:$0xff]
    %v468 = vld [vmem:[#allocation5 + $0xaa8] sm:$0xff]
    %v469 = vld [vmem:[#allocation5 + $0xab0] sm:$0xff]
    %v470 = vld [vmem:[#allocation5 + $0xab8] sm:$0xff]
    %v471 = vld [vmem:[#allocation5 + $0xac0] sm:$0xff]
    %v472 = vld [vmem:[#allocation5 + $0xac8] sm:$0xff]
    %v473 = vld [vmem:[#allocation5 + $0xad0] sm:$0xff]
    %v474 = vld [vmem:[#allocation5 + $0xad8] sm:$0xff]
    %v475 = vld [vmem:[#allocation5 + $0xae0] sm:$0xff]
    %v476 = vld [vmem:[#allocation5 + $0xae8] sm:$0xff]
    %v477 = vld [vmem:[#allocation5 + $0xaf0] sm:$0xff]
    %v478 = vld [vmem:[#allocation5 + $0xaf8] sm:$0xff]
    %v479 = vld [vmem:[#allocation5 + $0xb00] sm:$0xff]
    %v480 = vld [vmem:[#allocation5 + $0xb08] sm:$0xff]
    %v481 = vld [vmem:[#allocation5 + $0xb10] sm:$0xff]
    %v482 = vld [vmem:[#allocation5 + $0xb18] sm:$0xff]
    %v483 = vld [vmem:[#allocation5 + $0xb20] sm:$0xff]
    %v484 = vld [vmem:[#allocation5 + $0xb28] sm:$0xff]
    %v485 = vld [vmem:[#allocation5 + $0xb30] sm:$0xff]
    %v486 = vld [vmem:[#allocation5 + $0xb38] sm:$0xff]
    %v487 = vld [vmem:[#allocation5 + $0xb40] sm:$0xff]
    %v488 = vld [vmem:[#allocation5 + $0xb48] sm:$0xff]
    %v489 = vld [vmem:[#allocation5 + $0xb50] sm:$0xff]
    %v490 = vld [vmem:[#allocation5 + $0xb58] sm:$0xff]
    %v491 = vld [vmem:[#allocation5 + $0xb60] sm:$0xff]
    %v492 = vld [vmem:[#allocation5 + $0xb68] sm:$0xff]
    %v493 = vld [vmem:[#allocation5 + $0xb70] sm:$0xff]
    %v494 = vld [vmem:[#allocation5 + $0xb78] sm:$0xff]
    %v495 = vld [vmem:[#allocation5 + $0xb80] sm:$0xff]
    %v496 = vld [vmem:[#allocation5 + $0xb88] sm:$0xff]
    %v497 = vld [vmem:[#allocation5 + $0xb90] sm:$0xff]
    %v498 = vld [vmem:[#allocation5 + $0xb98] sm:$0xff]
    %v499 = vld [vmem:[#allocation5 + $0xba0] sm:$0xff]
    %v500 = vld [vmem:[#allocation5 + $0xba8] sm:$0xff]
    %v501 = vld [vmem:[#allocation5 + $0xbb0] sm:$0xff]
    %v502 = vld [vmem:[#allocation5 + $0xbb8] sm:$0xff]
    %v503 = vld [vmem:[#allocation5 + $0xbc0] sm:$0xff]
    %v504 = vld [vmem:[#allocation5 + $0xbc8] sm:$0xff]
    %v505 = vld [vmem:[#allocation5 + $0xbd0] sm:$0xff]
    %v506 = vld [vmem:[#allocation5 + $0xbd8] sm:$0xff]
    %v507 = vld [vmem:[#allocation5 + $0xbe0] sm:$0xff]
    %v508 = vld [vmem:[#allocation5 + $0xbe8] sm:$0xff]
    %v509 = vld [vmem:[#allocation5 + $0xbf0] sm:$0xff]
    %v510 = vld [vmem:[#allocation5 + $0xbf8] sm:$0xff]
    %v511 = vld [vmem:[#allocation7] sm:$0xff]
    %v513 = vlaneseq
    %v514 = vshrl.u32 %v513, 7
    %v515 = vsub.s32 0, %v514
    %v516 = vrot.slane %v511, %v515
    %v517 = vlaneseq
    %v518 = vshrl.u32 %v517, 7
    %v519 = vsub.s32 1, %v518
    %v520 = vrot.slane %v511, %v519
    %v521 = vlaneseq
    %v522 = vshrl.u32 %v521, 7
    %v523 = vsub.s32 2, %v522
    %v524 = vrot.slane %v511, %v523
    %v525 = vlaneseq
    %v526 = vshrl.u32 %v525, 7
    %v527 = vsub.s32 3, %v526
    %v528 = vrot.slane %v511, %v527
    %v529 = vlaneseq
    %v530 = vshrl.u32 %v529, 7
    %v531 = vsub.s32 4, %v530
    %v532 = vrot.slane %v511, %v531
    %v533 = vlaneseq
    %v534 = vshrl.u32 %v533, 7
    %v535 = vsub.s32 5, %v534
    %v536 = vrot.slane %v511, %v535
    %v537 = vlaneseq
    %v538 = vshrl.u32 %v537, 7
    %v539 = vsub.s32 6, %v538
    %v540 = vrot.slane %v511, %v539
    %v541 = vlaneseq
    %v542 = vshrl.u32 %v541, 7
    %v543 = vsub.s32 7, %v542
    %v544 = vrot.slane %v511, %v543
    %v937 = vunpack.c.l.b16 %v127
    %v938 = vunpack.c.h.b16 %v127
    %v939 = vunpack.c.l.b16 %v128
    %v940 = vunpack.c.h.b16 %v128
    %v941 = vunpack.c.l.b16 %v129
    %v942 = vunpack.c.h.b16 %v129
    %v943 = vunpack.c.l.b16 %v130
    %v944 = vunpack.c.h.b16 %v130
    %v945 = vunpack.c.l.b16 %v131
    %v946 = vunpack.c.h.b16 %v131
    %v947 = vunpack.c.l.b16 %v132
    %v948 = vunpack.c.h.b16 %v132
    %v949 = vunpack.c.l.b16 %v133
    %v950 = vunpack.c.h.b16 %v133
    %v951 = vunpack.c.l.b16 %v134
    %v952 = vunpack.c.h.b16 %v134
    %v953 = vunpack.c.l.b16 %v135
    %v954 = vunpack.c.h.b16 %v135
    %v955 = vunpack.c.l.b16 %v136
    %v956 = vunpack.c.h.b16 %v136
    %v957 = vunpack.c.l.b16 %v137
    %v958 = vunpack.c.h.b16 %v137
    %v959 = vunpack.c.l.b16 %v138
    %v960 = vunpack.c.h.b16 %v138
    %v961 = vunpack.c.l.b16 %v139
    %v962 = vunpack.c.h.b16 %v139
    %v963 = vunpack.c.l.b16 %v140
    %v964 = vunpack.c.h.b16 %v140
    %v965 = vunpack.c.l.b16 %v141
    %v966 = vunpack.c.h.b16 %v141
    %v967 = vunpack.c.l.b16 %v142
    %v968 = vunpack.c.h.b16 %v142
    %v969 = vunpack.c.l.b16 %v143
    %v970 = vunpack.c.h.b16 %v143
    %v971 = vunpack.c.l.b16 %v144
    %v972 = vunpack.c.h.b16 %v144
    %v973 = vunpack.c.l.b16 %v145
    %v974 = vunpack.c.h.b16 %v145
    %v975 = vunpack.c.l.b16 %v146
    %v976 = vunpack.c.h.b16 %v146
    %v977 = vunpack.c.l.b16 %v147
    %v978 = vunpack.c.h.b16 %v147
    %v979 = vunpack.c.l.b16 %v148
    %v980 = vunpack.c.h.b16 %v148
    %v981 = vunpack.c.l.b16 %v149
    %v982 = vunpack.c.h.b16 %v149
    %v983 = vunpack.c.l.b16 %v150
    %v984 = vunpack.c.h.b16 %v150
    %v985 = vunpack.c.l.b16 %v151
    %v986 = vunpack.c.h.b16 %v151
    %v987 = vunpack.c.l.b16 %v152
    %v988 = vunpack.c.h.b16 %v152
    %v989 = vunpack.c.l.b16 %v153
    %v990 = vunpack.c.h.b16 %v153
    %v991 = vunpack.c.l.b16 %v154
    %v992 = vunpack.c.h.b16 %v154
    %v993 = vunpack.c.l.b16 %v155
    %v994 = vunpack.c.h.b16 %v155
    %v995 = vunpack.c.l.b16 %v156
    %v996 = vunpack.c.h.b16 %v156
    %v997 = vunpack.c.l.b16 %v157
    %v998 = vunpack.c.h.b16 %v157
    %v999 = vunpack.c.l.b16 %v158
    %v1000 = vunpack.c.h.b16 %v158
    %v1001 = vunpack.c.l.b16 %v159
    %v1002 = vunpack.c.h.b16 %v159
    %v1003 = vunpack.c.l.b16 %v160
    %v1004 = vunpack.c.h.b16 %v160
    %v1005 = vunpack.c.l.b16 %v161
    %v1006 = vunpack.c.h.b16 %v161
    %v1007 = vunpack.c.l.b16 %v162
    %v1008 = vunpack.c.h.b16 %v162
    %v1009 = vunpack.c.l.b16 %v163
    %v1010 = vunpack.c.h.b16 %v163
    %v1011 = vunpack.c.l.b16 %v164
    %v1012 = vunpack.c.h.b16 %v164
    %v1013 = vunpack.c.l.b16 %v165
    %v1014 = vunpack.c.h.b16 %v165
    %v1015 = vunpack.c.l.b16 %v166
    %v1016 = vunpack.c.h.b16 %v166
    %v1017 = vunpack.c.l.b16 %v167
    %v1018 = vunpack.c.h.b16 %v167
    %v1019 = vunpack.c.l.b16 %v168
    %v1020 = vunpack.c.h.b16 %v168
    %v1021 = vunpack.c.l.b16 %v169
    %v1022 = vunpack.c.h.b16 %v169
    %v1023 = vunpack.c.l.b16 %v170
    %v1024 = vunpack.c.h.b16 %v170
    %v1025 = vunpack.c.l.b16 %v171
    %v1026 = vunpack.c.h.b16 %v171
    %v1027 = vunpack.c.l.b16 %v172
    %v1028 = vunpack.c.h.b16 %v172
    %v1029 = vunpack.c.l.b16 %v173
    %v1030 = vunpack.c.h.b16 %v173
    %v1031 = vunpack.c.l.b16 %v174
    %v1032 = vunpack.c.h.b16 %v174
    %v1033 = vunpack.c.l.b16 %v175
    %v1034 = vunpack.c.h.b16 %v175
    %v1035 = vunpack.c.l.b16 %v176
    %v1036 = vunpack.c.h.b16 %v176
    %v1037 = vunpack.c.l.b16 %v177
    %v1038 = vunpack.c.h.b16 %v177
    %v1039 = vunpack.c.l.b16 %v178
    %v1040 = vunpack.c.h.b16 %v178
    %v1041 = vunpack.c.l.b16 %v179
    %v1042 = vunpack.c.h.b16 %v179
    %v1043 = vunpack.c.l.b16 %v180
    %v1044 = vunpack.c.h.b16 %v180
    %v1045 = vunpack.c.l.b16 %v181
    %v1046 = vunpack.c.h.b16 %v181
    %v1047 = vunpack.c.l.b16 %v182
    %v1048 = vunpack.c.h.b16 %v182
    %v1049 = vunpack.c.l.b16 %v183
    %v1050 = vunpack.c.h.b16 %v183
    %v1051 = vunpack.c.l.b16 %v184
    %v1052 = vunpack.c.h.b16 %v184
    %v1053 = vunpack.c.l.b16 %v185
    %v1054 = vunpack.c.h.b16 %v185
    %v1055 = vunpack.c.l.b16 %v186
    %v1056 = vunpack.c.h.b16 %v186
    %v1057 = vunpack.c.l.b16 %v187
    %v1058 = vunpack.c.h.b16 %v187
    %v1059 = vunpack.c.l.b16 %v188
    %v1060 = vunpack.c.h.b16 %v188
    %v1061 = vunpack.c.l.b16 %v189
    %v1062 = vunpack.c.h.b16 %v189
    %v1063 = vunpack.c.l.b16 %v190
    %v1064 = vunpack.c.h.b16 %v190
    %v1065 = vunpack.c.l.b16 %v191
    %v1066 = vunpack.c.h.b16 %v191
    %v1067 = vunpack.c.l.b16 %v192
    %v1068 = vunpack.c.h.b16 %v192
    %v1069 = vunpack.c.l.b16 %v193
    %v1070 = vunpack.c.h.b16 %v193
    %v1071 = vunpack.c.l.b16 %v194
    %v1072 = vunpack.c.h.b16 %v194
    %v1073 = vunpack.c.l.b16 %v195
    %v1074 = vunpack.c.h.b16 %v195
    %v1075 = vunpack.c.l.b16 %v196
    %v1076 = vunpack.c.h.b16 %v196
    %v1077 = vunpack.c.l.b16 %v197
    %v1078 = vunpack.c.h.b16 %v197
    %v1079 = vunpack.c.l.b16 %v198
    %v1080 = vunpack.c.h.b16 %v198
    %v1081 = vunpack.c.l.b16 %v199
    %v1082 = vunpack.c.h.b16 %v199
    %v1083 = vunpack.c.l.b16 %v200
    %v1084 = vunpack.c.h.b16 %v200
    %v1085 = vunpack.c.l.b16 %v201
    %v1086 = vunpack.c.h.b16 %v201
    %v1087 = vunpack.c.l.b16 %v202
    %v1088 = vunpack.c.h.b16 %v202
    %v1089 = vunpack.c.l.b16 %v203
    %v1090 = vunpack.c.h.b16 %v203
    %v1091 = vunpack.c.l.b16 %v204
    %v1092 = vunpack.c.h.b16 %v204
    %v1093 = vunpack.c.l.b16 %v205
    %v1094 = vunpack.c.h.b16 %v205
    %v1095 = vunpack.c.l.b16 %v206
    %v1096 = vunpack.c.h.b16 %v206
    %v1097 = vunpack.c.l.b16 %v207
    %v1098 = vunpack.c.h.b16 %v207
    %v1099 = vunpack.c.l.b16 %v208
    %v1100 = vunpack.c.h.b16 %v208
    %v1101 = vunpack.c.l.b16 %v209
    %v1102 = vunpack.c.h.b16 %v209
    %v1103 = vunpack.c.l.b16 %v210
    %v1104 = vunpack.c.h.b16 %v210
    %v1105 = vunpack.c.l.b16 %v211
    %v1106 = vunpack.c.h.b16 %v211
    %v1107 = vunpack.c.l.b16 %v212
    %v1108 = vunpack.c.h.b16 %v212
    %v1109 = vunpack.c.l.b16 %v213
    %v1110 = vunpack.c.h.b16 %v213
    %v1111 = vunpack.c.l.b16 %v214
    %v1112 = vunpack.c.h.b16 %v214
    %v1113 = vunpack.c.l.b16 %v215
    %v1114 = vunpack.c.h.b16 %v215
    %v1115 = vunpack.c.l.b16 %v216
    %v1116 = vunpack.c.h.b16 %v216
    %v1117 = vunpack.c.l.b16 %v217
    %v1118 = vunpack.c.h.b16 %v217
    %v1119 = vunpack.c.l.b16 %v218
    %v1120 = vunpack.c.h.b16 %v218
    %v1121 = vunpack.c.l.b16 %v219
    %v1122 = vunpack.c.h.b16 %v219
    %v1123 = vunpack.c.l.b16 %v220
    %v1124 = vunpack.c.h.b16 %v220
    %v1125 = vunpack.c.l.b16 %v221
    %v1126 = vunpack.c.h.b16 %v221
    %v1127 = vunpack.c.l.b16 %v222
    %v1128 = vunpack.c.h.b16 %v222
    %v1129 = vunpack.c.l.b16 %v223
    %v1130 = vunpack.c.h.b16 %v223
    %v1131 = vunpack.c.l.b16 %v224
    %v1132 = vunpack.c.h.b16 %v224
    %v1133 = vunpack.c.l.b16 %v225
    %v1134 = vunpack.c.h.b16 %v225
    %v1135 = vunpack.c.l.b16 %v226
    %v1136 = vunpack.c.h.b16 %v226
    %v1137 = vunpack.c.l.b16 %v227
    %v1138 = vunpack.c.h.b16 %v227
    %v1139 = vunpack.c.l.b16 %v228
    %v1140 = vunpack.c.h.b16 %v228
    %v1141 = vunpack.c.l.b16 %v229
    %v1142 = vunpack.c.h.b16 %v229
    %v1143 = vunpack.c.l.b16 %v230
    %v1144 = vunpack.c.h.b16 %v230
    %v1145 = vunpack.c.l.b16 %v231
    %v1146 = vunpack.c.h.b16 %v231
    %v1147 = vunpack.c.l.b16 %v232
    %v1148 = vunpack.c.h.b16 %v232
    %v1149 = vunpack.c.l.b16 %v233
    %v1150 = vunpack.c.h.b16 %v233
    %v1151 = vunpack.c.l.b16 %v234
    %v1152 = vunpack.c.h.b16 %v234
    %v1153 = vunpack.c.l.b16 %v235
    %v1154 = vunpack.c.h.b16 %v235
    %v1155 = vunpack.c.l.b16 %v236
    %v1156 = vunpack.c.h.b16 %v236
    %v1157 = vunpack.c.l.b16 %v237
    %v1158 = vunpack.c.h.b16 %v237
    %v1159 = vunpack.c.l.b16 %v238
    %v1160 = vunpack.c.h.b16 %v238
    %v1161 = vunpack.c.l.b16 %v239
    %v1162 = vunpack.c.h.b16 %v239
    %v1163 = vunpack.c.l.b16 %v240
    %v1164 = vunpack.c.h.b16 %v240
    %v1165 = vunpack.c.l.b16 %v241
    %v1166 = vunpack.c.h.b16 %v241
    %v1167 = vunpack.c.l.b16 %v242
    %v1168 = vunpack.c.h.b16 %v242
    %v1169 = vunpack.c.l.b16 %v243
    %v1170 = vunpack.c.h.b16 %v243
    %v1171 = vunpack.c.l.b16 %v244
    %v1172 = vunpack.c.h.b16 %v244
    %v1173 = vunpack.c.l.b16 %v245
    %v1174 = vunpack.c.h.b16 %v245
    %v1175 = vunpack.c.l.b16 %v246
    %v1176 = vunpack.c.h.b16 %v246
    %v1177 = vunpack.c.l.b16 %v247
    %v1178 = vunpack.c.h.b16 %v247
    %v1179 = vunpack.c.l.b16 %v248
    %v1180 = vunpack.c.h.b16 %v248
    %v1181 = vunpack.c.l.b16 %v249
    %v1182 = vunpack.c.h.b16 %v249
    %v1183 = vunpack.c.l.b16 %v250
    %v1184 = vunpack.c.h.b16 %v250
    %v1185 = vunpack.c.l.b16 %v251
    %v1186 = vunpack.c.h.b16 %v251
    %v1187 = vunpack.c.l.b16 %v252
    %v1188 = vunpack.c.h.b16 %v252
    %v1189 = vunpack.c.l.b16 %v253
    %v1190 = vunpack.c.h.b16 %v253
    %v1191 = vunpack.c.l.b16 %v254
    %v1192 = vunpack.c.h.b16 %v254
    %v1193 = vunpack.c.l.b16 %v255
    %v1194 = vunpack.c.h.b16 %v255
    %v1195 = vunpack.c.l.b16 %v256
    %v1196 = vunpack.c.h.b16 %v256
    %v1197 = vunpack.c.l.b16 %v257
    %v1198 = vunpack.c.h.b16 %v257
    %v1199 = vunpack.c.l.b16 %v258
    %v1200 = vunpack.c.h.b16 %v258
    %v1201 = vunpack.c.l.b16 %v259
    %v1202 = vunpack.c.h.b16 %v259
    %v1203 = vunpack.c.l.b16 %v260
    %v1204 = vunpack.c.h.b16 %v260
    %v1205 = vunpack.c.l.b16 %v261
    %v1206 = vunpack.c.h.b16 %v261
    %v1207 = vunpack.c.l.b16 %v262
    %v1208 = vunpack.c.h.b16 %v262
    %v1209 = vunpack.c.l.b16 %v263
    %v1210 = vunpack.c.h.b16 %v263
    %v1211 = vunpack.c.l.b16 %v264
    %v1212 = vunpack.c.h.b16 %v264
    %v1213 = vunpack.c.l.b16 %v265
    %v1214 = vunpack.c.h.b16 %v265
    %v1215 = vunpack.c.l.b16 %v266
    %v1216 = vunpack.c.h.b16 %v266
    %v1217 = vunpack.c.l.b16 %v267
    %v1218 = vunpack.c.h.b16 %v267
    %v1219 = vunpack.c.l.b16 %v268
    %v1220 = vunpack.c.h.b16 %v268
    %v1221 = vunpack.c.l.b16 %v269
    %v1222 = vunpack.c.h.b16 %v269
    %v1223 = vunpack.c.l.b16 %v270
    %v1224 = vunpack.c.h.b16 %v270
    %v1225 = vunpack.c.l.b16 %v271
    %v1226 = vunpack.c.h.b16 %v271
    %v1227 = vunpack.c.l.b16 %v272
    %v1228 = vunpack.c.h.b16 %v272
    %v1229 = vunpack.c.l.b16 %v273
    %v1230 = vunpack.c.h.b16 %v273
    %v1231 = vunpack.c.l.b16 %v274
    %v1232 = vunpack.c.h.b16 %v274
    %v1233 = vunpack.c.l.b16 %v275
    %v1234 = vunpack.c.h.b16 %v275
    %v1235 = vunpack.c.l.b16 %v276
    %v1236 = vunpack.c.h.b16 %v276
    %v1237 = vunpack.c.l.b16 %v277
    %v1238 = vunpack.c.h.b16 %v277
    %v1239 = vunpack.c.l.b16 %v278
    %v1240 = vunpack.c.h.b16 %v278
    %v1241 = vunpack.c.l.b16 %v279
    %v1242 = vunpack.c.h.b16 %v279
    %v1243 = vunpack.c.l.b16 %v280
    %v1244 = vunpack.c.h.b16 %v280
    %v1245 = vunpack.c.l.b16 %v281
    %v1246 = vunpack.c.h.b16 %v281
    %v1247 = vunpack.c.l.b16 %v282
    %v1248 = vunpack.c.h.b16 %v282
    %v1249 = vunpack.c.l.b16 %v283
    %v1250 = vunpack.c.h.b16 %v283
    %v1251 = vunpack.c.l.b16 %v284
    %v1252 = vunpack.c.h.b16 %v284
    %v1253 = vunpack.c.l.b16 %v285
    %v1254 = vunpack.c.h.b16 %v285
    %v1255 = vunpack.c.l.b16 %v286
    %v1256 = vunpack.c.h.b16 %v286
    %v1257 = vunpack.c.l.b16 %v287
    %v1258 = vunpack.c.h.b16 %v287
    %v1259 = vunpack.c.l.b16 %v288
    %v1260 = vunpack.c.h.b16 %v288
    %v1261 = vunpack.c.l.b16 %v289
    %v1262 = vunpack.c.h.b16 %v289
    %v1263 = vunpack.c.l.b16 %v290
    %v1264 = vunpack.c.h.b16 %v290
    %v1265 = vunpack.c.l.b16 %v291
    %v1266 = vunpack.c.h.b16 %v291
    %v1267 = vunpack.c.l.b16 %v292
    %v1268 = vunpack.c.h.b16 %v292
    %v1269 = vunpack.c.l.b16 %v293
    %v1270 = vunpack.c.h.b16 %v293
    %v1271 = vunpack.c.l.b16 %v294
    %v1272 = vunpack.c.h.b16 %v294
    %v1273 = vunpack.c.l.b16 %v295
    %v1274 = vunpack.c.h.b16 %v295
    %v1275 = vunpack.c.l.b16 %v296
    %v1276 = vunpack.c.h.b16 %v296
    %v1277 = vunpack.c.l.b16 %v297
    %v1278 = vunpack.c.h.b16 %v297
    %v1279 = vunpack.c.l.b16 %v298
    %v1280 = vunpack.c.h.b16 %v298
    %v1281 = vunpack.c.l.b16 %v299
    %v1282 = vunpack.c.h.b16 %v299
    %v1283 = vunpack.c.l.b16 %v300
    %v1284 = vunpack.c.h.b16 %v300
    %v1285 = vunpack.c.l.b16 %v301
    %v1286 = vunpack.c.h.b16 %v301
    %v1287 = vunpack.c.l.b16 %v302
    %v1288 = vunpack.c.h.b16 %v302
    %v1289 = vunpack.c.l.b16 %v303
    %v1290 = vunpack.c.h.b16 %v303
    %v1291 = vunpack.c.l.b16 %v304
    %v1292 = vunpack.c.h.b16 %v304
    %v1293 = vunpack.c.l.b16 %v305
    %v1294 = vunpack.c.h.b16 %v305
    %v1295 = vunpack.c.l.b16 %v306
    %v1296 = vunpack.c.h.b16 %v306
    %v1297 = vunpack.c.l.b16 %v307
    %v1298 = vunpack.c.h.b16 %v307
    %v1299 = vunpack.c.l.b16 %v308
    %v1300 = vunpack.c.h.b16 %v308
    %v1301 = vunpack.c.l.b16 %v309
    %v1302 = vunpack.c.h.b16 %v309
    %v1303 = vunpack.c.l.b16 %v310
    %v1304 = vunpack.c.h.b16 %v310
    %v1305 = vunpack.c.l.b16 %v311
    %v1306 = vunpack.c.h.b16 %v311
    %v1307 = vunpack.c.l.b16 %v312
    %v1308 = vunpack.c.h.b16 %v312
    %v1309 = vunpack.c.l.b16 %v313
    %v1310 = vunpack.c.h.b16 %v313
    %v1311 = vunpack.c.l.b16 %v314
    %v1312 = vunpack.c.h.b16 %v314
    %v1313 = vunpack.c.l.b16 %v315
    %v1314 = vunpack.c.h.b16 %v315
    %v1315 = vunpack.c.l.b16 %v316
    %v1316 = vunpack.c.h.b16 %v316
    %v1317 = vunpack.c.l.b16 %v317
    %v1318 = vunpack.c.h.b16 %v317
    %v1319 = vunpack.c.l.b16 %v318
    %v1320 = vunpack.c.h.b16 %v318
    %v1321 = vunpack.c.l.b16 %v319
    %v1322 = vunpack.c.h.b16 %v319
    %v1323 = vunpack.c.l.b16 %v320
    %v1324 = vunpack.c.h.b16 %v320
    %v1325 = vunpack.c.l.b16 %v321
    %v1326 = vunpack.c.h.b16 %v321
    %v1327 = vunpack.c.l.b16 %v322
    %v1328 = vunpack.c.h.b16 %v322
    %v1329 = vunpack.c.l.b16 %v323
    %v1330 = vunpack.c.h.b16 %v323
    %v1331 = vunpack.c.l.b16 %v324
    %v1332 = vunpack.c.h.b16 %v324
    %v1333 = vunpack.c.l.b16 %v325
    %v1334 = vunpack.c.h.b16 %v325
    %v1335 = vunpack.c.l.b16 %v326
    %v1336 = vunpack.c.h.b16 %v326
    %v1337 = vunpack.c.l.b16 %v327
    %v1338 = vunpack.c.h.b16 %v327
    %v1339 = vunpack.c.l.b16 %v328
    %v1340 = vunpack.c.h.b16 %v328
    %v1341 = vunpack.c.l.b16 %v329
    %v1342 = vunpack.c.h.b16 %v329
    %v1343 = vunpack.c.l.b16 %v330
    %v1344 = vunpack.c.h.b16 %v330
    %v1345 = vunpack.c.l.b16 %v331
    %v1346 = vunpack.c.h.b16 %v331
    %v1347 = vunpack.c.l.b16 %v332
    %v1348 = vunpack.c.h.b16 %v332
    %v1349 = vunpack.c.l.b16 %v333
    %v1350 = vunpack.c.h.b16 %v333
    %v1351 = vunpack.c.l.b16 %v334
    %v1352 = vunpack.c.h.b16 %v334
    %v1353 = vunpack.c.l.b16 %v335
    %v1354 = vunpack.c.h.b16 %v335
    %v1355 = vunpack.c.l.b16 %v336
    %v1356 = vunpack.c.h.b16 %v336
    %v1357 = vunpack.c.l.b16 %v337
    %v1358 = vunpack.c.h.b16 %v337
    %v1359 = vunpack.c.l.b16 %v338
    %v1360 = vunpack.c.h.b16 %v338
    %v1361 = vunpack.c.l.b16 %v339
    %v1362 = vunpack.c.h.b16 %v339
    %v1363 = vunpack.c.l.b16 %v340
    %v1364 = vunpack.c.h.b16 %v340
    %v1365 = vunpack.c.l.b16 %v341
    %v1366 = vunpack.c.h.b16 %v341
    %v1367 = vunpack.c.l.b16 %v342
    %v1368 = vunpack.c.h.b16 %v342
    %v1369 = vunpack.c.l.b16 %v343
    %v1370 = vunpack.c.h.b16 %v343
    %v1371 = vunpack.c.l.b16 %v344
    %v1372 = vunpack.c.h.b16 %v344
    %v1373 = vunpack.c.l.b16 %v345
    %v1374 = vunpack.c.h.b16 %v345
    %v1375 = vunpack.c.l.b16 %v346
    %v1376 = vunpack.c.h.b16 %v346
    %v1377 = vunpack.c.l.b16 %v347
    %v1378 = vunpack.c.h.b16 %v347
    %v1379 = vunpack.c.l.b16 %v348
    %v1380 = vunpack.c.h.b16 %v348
    %v1381 = vunpack.c.l.b16 %v349
    %v1382 = vunpack.c.h.b16 %v349
    %v1383 = vunpack.c.l.b16 %v350
    %v1384 = vunpack.c.h.b16 %v350
    %v1385 = vunpack.c.l.b16 %v351
    %v1386 = vunpack.c.h.b16 %v351
    %v1387 = vunpack.c.l.b16 %v352
    %v1388 = vunpack.c.h.b16 %v352
    %v1389 = vunpack.c.l.b16 %v353
    %v1390 = vunpack.c.h.b16 %v353
    %v1391 = vunpack.c.l.b16 %v354
    %v1392 = vunpack.c.h.b16 %v354
    %v1393 = vunpack.c.l.b16 %v355
    %v1394 = vunpack.c.h.b16 %v355
    %v1395 = vunpack.c.l.b16 %v356
    %v1396 = vunpack.c.h.b16 %v356
    %v1397 = vunpack.c.l.b16 %v357
    %v1398 = vunpack.c.h.b16 %v357
    %v1399 = vunpack.c.l.b16 %v358
    %v1400 = vunpack.c.h.b16 %v358
    %v1401 = vunpack.c.l.b16 %v359
    %v1402 = vunpack.c.h.b16 %v359
    %v1403 = vunpack.c.l.b16 %v360
    %v1404 = vunpack.c.h.b16 %v360
    %v1405 = vunpack.c.l.b16 %v361
    %v1406 = vunpack.c.h.b16 %v361
    %v1407 = vunpack.c.l.b16 %v362
    %v1408 = vunpack.c.h.b16 %v362
    %v1409 = vunpack.c.l.b16 %v363
    %v1410 = vunpack.c.h.b16 %v363
    %v1411 = vunpack.c.l.b16 %v364
    %v1412 = vunpack.c.h.b16 %v364
    %v1413 = vunpack.c.l.b16 %v365
    %v1414 = vunpack.c.h.b16 %v365
    %v1415 = vunpack.c.l.b16 %v366
    %v1416 = vunpack.c.h.b16 %v366
    %v1417 = vunpack.c.l.b16 %v367
    %v1418 = vunpack.c.h.b16 %v367
    %v1419 = vunpack.c.l.b16 %v368
    %v1420 = vunpack.c.h.b16 %v368
    %v1421 = vunpack.c.l.b16 %v369
    %v1422 = vunpack.c.h.b16 %v369
    %v1423 = vunpack.c.l.b16 %v370
    %v1424 = vunpack.c.h.b16 %v370
    %v1425 = vunpack.c.l.b16 %v371
    %v1426 = vunpack.c.h.b16 %v371
    %v1427 = vunpack.c.l.b16 %v372
    %v1428 = vunpack.c.h.b16 %v372
    %v1429 = vunpack.c.l.b16 %v373
    %v1430 = vunpack.c.h.b16 %v373
    %v1431 = vunpack.c.l.b16 %v374
    %v1432 = vunpack.c.h.b16 %v374
    %v1433 = vunpack.c.l.b16 %v375
    %v1434 = vunpack.c.h.b16 %v375
    %v1435 = vunpack.c.l.b16 %v376
    %v1436 = vunpack.c.h.b16 %v376
    %v1437 = vunpack.c.l.b16 %v377
    %v1438 = vunpack.c.h.b16 %v377
    %v1439 = vunpack.c.l.b16 %v378
    %v1440 = vunpack.c.h.b16 %v378
    %v1441 = vunpack.c.l.b16 %v379
    %v1442 = vunpack.c.h.b16 %v379
    %v1443 = vunpack.c.l.b16 %v380
    %v1444 = vunpack.c.h.b16 %v380
    %v1445 = vunpack.c.l.b16 %v381
    %v1446 = vunpack.c.h.b16 %v381
    %v1447 = vunpack.c.l.b16 %v382
    %v1448 = vunpack.c.h.b16 %v382
    %v1449 = vunpack.c.l.b16 %v383
    %v1450 = vunpack.c.h.b16 %v383
    %v1451 = vunpack.c.l.b16 %v384
    %v1452 = vunpack.c.h.b16 %v384
    %v1453 = vunpack.c.l.b16 %v385
    %v1454 = vunpack.c.h.b16 %v385
    %v1455 = vunpack.c.l.b16 %v386
    %v1456 = vunpack.c.h.b16 %v386
    %v1457 = vunpack.c.l.b16 %v387
    %v1458 = vunpack.c.h.b16 %v387
    %v1459 = vunpack.c.l.b16 %v388
    %v1460 = vunpack.c.h.b16 %v388
    %v1461 = vunpack.c.l.b16 %v389
    %v1462 = vunpack.c.h.b16 %v389
    %v1463 = vunpack.c.l.b16 %v390
    %v1464 = vunpack.c.h.b16 %v390
    %v1465 = vunpack.c.l.b16 %v391
    %v1466 = vunpack.c.h.b16 %v391
    %v1467 = vunpack.c.l.b16 %v392
    %v1468 = vunpack.c.h.b16 %v392
    %v1469 = vunpack.c.l.b16 %v393
    %v1470 = vunpack.c.h.b16 %v393
    %v1471 = vunpack.c.l.b16 %v394
    %v1472 = vunpack.c.h.b16 %v394
    %v1473 = vunpack.c.l.b16 %v395
    %v1474 = vunpack.c.h.b16 %v395
    %v1475 = vunpack.c.l.b16 %v396
    %v1476 = vunpack.c.h.b16 %v396
    %v1477 = vunpack.c.l.b16 %v397
    %v1478 = vunpack.c.h.b16 %v397
    %v1479 = vunpack.c.l.b16 %v398
    %v1480 = vunpack.c.h.b16 %v398
    %v1481 = vunpack.c.l.b16 %v399
    %v1482 = vunpack.c.h.b16 %v399
    %v1483 = vunpack.c.l.b16 %v400
    %v1484 = vunpack.c.h.b16 %v400
    %v1485 = vunpack.c.l.b16 %v401
    %v1486 = vunpack.c.h.b16 %v401
    %v1487 = vunpack.c.l.b16 %v402
    %v1488 = vunpack.c.h.b16 %v402
    %v1489 = vunpack.c.l.b16 %v403
    %v1490 = vunpack.c.h.b16 %v403
    %v1491 = vunpack.c.l.b16 %v404
    %v1492 = vunpack.c.h.b16 %v404
    %v1493 = vunpack.c.l.b16 %v405
    %v1494 = vunpack.c.h.b16 %v405
    %v1495 = vunpack.c.l.b16 %v406
    %v1496 = vunpack.c.h.b16 %v406
    %v1497 = vunpack.c.l.b16 %v407
    %v1498 = vunpack.c.h.b16 %v407
    %v1499 = vunpack.c.l.b16 %v408
    %v1500 = vunpack.c.h.b16 %v408
    %v1501 = vunpack.c.l.b16 %v409
    %v1502 = vunpack.c.h.b16 %v409
    %v1503 = vunpack.c.l.b16 %v410
    %v1504 = vunpack.c.h.b16 %v410
    %v1505 = vunpack.c.l.b16 %v411
    %v1506 = vunpack.c.h.b16 %v411
    %v1507 = vunpack.c.l.b16 %v412
    %v1508 = vunpack.c.h.b16 %v412
    %v1509 = vunpack.c.l.b16 %v413
    %v1510 = vunpack.c.h.b16 %v413
    %v1511 = vunpack.c.l.b16 %v414
    %v1512 = vunpack.c.h.b16 %v414
    %v1513 = vunpack.c.l.b16 %v415
    %v1514 = vunpack.c.h.b16 %v415
    %v1515 = vunpack.c.l.b16 %v416
    %v1516 = vunpack.c.h.b16 %v416
    %v1517 = vunpack.c.l.b16 %v417
    %v1518 = vunpack.c.h.b16 %v417
    %v1519 = vunpack.c.l.b16 %v418
    %v1520 = vunpack.c.h.b16 %v418
    %v1521 = vunpack.c.l.b16 %v419
    %v1522 = vunpack.c.h.b16 %v419
    %v1523 = vunpack.c.l.b16 %v420
    %v1524 = vunpack.c.h.b16 %v420
    %v1525 = vunpack.c.l.b16 %v421
    %v1526 = vunpack.c.h.b16 %v421
    %v1527 = vunpack.c.l.b16 %v422
    %v1528 = vunpack.c.h.b16 %v422
    %v1529 = vunpack.c.l.b16 %v423
    %v1530 = vunpack.c.h.b16 %v423
    %v1531 = vunpack.c.l.b16 %v424
    %v1532 = vunpack.c.h.b16 %v424
    %v1533 = vunpack.c.l.b16 %v425
    %v1534 = vunpack.c.h.b16 %v425
    %v1535 = vunpack.c.l.b16 %v426
    %v1536 = vunpack.c.h.b16 %v426
    %v1537 = vunpack.c.l.b16 %v427
    %v1538 = vunpack.c.h.b16 %v427
    %v1539 = vunpack.c.l.b16 %v428
    %v1540 = vunpack.c.h.b16 %v428
    %v1541 = vunpack.c.l.b16 %v429
    %v1542 = vunpack.c.h.b16 %v429
    %v1543 = vunpack.c.l.b16 %v430
    %v1544 = vunpack.c.h.b16 %v430
    %v1545 = vunpack.c.l.b16 %v431
    %v1546 = vunpack.c.h.b16 %v431
    %v1547 = vunpack.c.l.b16 %v432
    %v1548 = vunpack.c.h.b16 %v432
    %v1549 = vunpack.c.l.b16 %v433
    %v1550 = vunpack.c.h.b16 %v433
    %v1551 = vunpack.c.l.b16 %v434
    %v1552 = vunpack.c.h.b16 %v434
    %v1553 = vunpack.c.l.b16 %v435
    %v1554 = vunpack.c.h.b16 %v435
    %v1555 = vunpack.c.l.b16 %v436
    %v1556 = vunpack.c.h.b16 %v436
    %v1557 = vunpack.c.l.b16 %v437
    %v1558 = vunpack.c.h.b16 %v437
    %v1559 = vunpack.c.l.b16 %v438
    %v1560 = vunpack.c.h.b16 %v438
    %v1561 = vunpack.c.l.b16 %v439
    %v1562 = vunpack.c.h.b16 %v439
    %v1563 = vunpack.c.l.b16 %v440
    %v1564 = vunpack.c.h.b16 %v440
    %v1565 = vunpack.c.l.b16 %v441
    %v1566 = vunpack.c.h.b16 %v441
    %v1567 = vunpack.c.l.b16 %v442
    %v1568 = vunpack.c.h.b16 %v442
    %v1569 = vunpack.c.l.b16 %v443
    %v1570 = vunpack.c.h.b16 %v443
    %v1571 = vunpack.c.l.b16 %v444
    %v1572 = vunpack.c.h.b16 %v444
    %v1573 = vunpack.c.l.b16 %v445
    %v1574 = vunpack.c.h.b16 %v445
    %v1575 = vunpack.c.l.b16 %v446
    %v1576 = vunpack.c.h.b16 %v446
    %v1577 = vunpack.c.l.b16 %v447
    %v1578 = vunpack.c.h.b16 %v447
    %v1579 = vunpack.c.l.b16 %v448
    %v1580 = vunpack.c.h.b16 %v448
    %v1581 = vunpack.c.l.b16 %v449
    %v1582 = vunpack.c.h.b16 %v449
    %v1583 = vunpack.c.l.b16 %v450
    %v1584 = vunpack.c.h.b16 %v450
    %v1585 = vunpack.c.l.b16 %v451
    %v1586 = vunpack.c.h.b16 %v451
    %v1587 = vunpack.c.l.b16 %v452
    %v1588 = vunpack.c.h.b16 %v452
    %v1589 = vunpack.c.l.b16 %v453
    %v1590 = vunpack.c.h.b16 %v453
    %v1591 = vunpack.c.l.b16 %v454
    %v1592 = vunpack.c.h.b16 %v454
    %v1593 = vunpack.c.l.b16 %v455
    %v1594 = vunpack.c.h.b16 %v455
    %v1595 = vunpack.c.l.b16 %v456
    %v1596 = vunpack.c.h.b16 %v456
    %v1597 = vunpack.c.l.b16 %v457
    %v1598 = vunpack.c.h.b16 %v457
    %v1599 = vunpack.c.l.b16 %v458
    %v1600 = vunpack.c.h.b16 %v458
    %v1601 = vunpack.c.l.b16 %v459
    %v1602 = vunpack.c.h.b16 %v459
    %v1603 = vunpack.c.l.b16 %v460
    %v1604 = vunpack.c.h.b16 %v460
    %v1605 = vunpack.c.l.b16 %v461
    %v1606 = vunpack.c.h.b16 %v461
    %v1607 = vunpack.c.l.b16 %v462
    %v1608 = vunpack.c.h.b16 %v462
    %v1609 = vunpack.c.l.b16 %v463
    %v1610 = vunpack.c.h.b16 %v463
    %v1611 = vunpack.c.l.b16 %v464
    %v1612 = vunpack.c.h.b16 %v464
    %v1613 = vunpack.c.l.b16 %v465
    %v1614 = vunpack.c.h.b16 %v465
    %v1615 = vunpack.c.l.b16 %v466
    %v1616 = vunpack.c.h.b16 %v466
    %v1617 = vunpack.c.l.b16 %v467
    %v1618 = vunpack.c.h.b16 %v467
    %v1619 = vunpack.c.l.b16 %v468
    %v1620 = vunpack.c.h.b16 %v468
    %v1621 = vunpack.c.l.b16 %v469
    %v1622 = vunpack.c.h.b16 %v469
    %v1623 = vunpack.c.l.b16 %v470
    %v1624 = vunpack.c.h.b16 %v470
    %v1625 = vunpack.c.l.b16 %v471
    %v1626 = vunpack.c.h.b16 %v471
    %v1627 = vunpack.c.l.b16 %v472
    %v1628 = vunpack.c.h.b16 %v472
    %v1629 = vunpack.c.l.b16 %v473
    %v1630 = vunpack.c.h.b16 %v473
    %v1631 = vunpack.c.l.b16 %v474
    %v1632 = vunpack.c.h.b16 %v474
    %v1633 = vunpack.c.l.b16 %v475
    %v1634 = vunpack.c.h.b16 %v475
    %v1635 = vunpack.c.l.b16 %v476
    %v1636 = vunpack.c.h.b16 %v476
    %v1637 = vunpack.c.l.b16 %v477
    %v1638 = vunpack.c.h.b16 %v477
    %v1639 = vunpack.c.l.b16 %v478
    %v1640 = vunpack.c.h.b16 %v478
    %v1641 = vunpack.c.l.b16 %v479
    %v1642 = vunpack.c.h.b16 %v479
    %v1643 = vunpack.c.l.b16 %v480
    %v1644 = vunpack.c.h.b16 %v480
    %v1645 = vunpack.c.l.b16 %v481
    %v1646 = vunpack.c.h.b16 %v481
    %v1647 = vunpack.c.l.b16 %v482
    %v1648 = vunpack.c.h.b16 %v482
    %v1649 = vunpack.c.l.b16 %v483
    %v1650 = vunpack.c.h.b16 %v483
    %v1651 = vunpack.c.l.b16 %v484
    %v1652 = vunpack.c.h.b16 %v484
    %v1653 = vunpack.c.l.b16 %v485
    %v1654 = vunpack.c.h.b16 %v485
    %v1655 = vunpack.c.l.b16 %v486
    %v1656 = vunpack.c.h.b16 %v486
    %v1657 = vunpack.c.l.b16 %v487
    %v1658 = vunpack.c.h.b16 %v487
    %v1659 = vunpack.c.l.b16 %v488
    %v1660 = vunpack.c.h.b16 %v488
    %v1661 = vunpack.c.l.b16 %v489
    %v1662 = vunpack.c.h.b16 %v489
    %v1663 = vunpack.c.l.b16 %v490
    %v1664 = vunpack.c.h.b16 %v490
    %v1665 = vunpack.c.l.b16 %v491
    %v1666 = vunpack.c.h.b16 %v491
    %v1667 = vunpack.c.l.b16 %v492
    %v1668 = vunpack.c.h.b16 %v492
    %v1669 = vunpack.c.l.b16 %v493
    %v1670 = vunpack.c.h.b16 %v493
    %v1671 = vunpack.c.l.b16 %v494
    %v1672 = vunpack.c.h.b16 %v494
    %v1673 = vunpack.c.l.b16 %v495
    %v1674 = vunpack.c.h.b16 %v495
    %v1675 = vunpack.c.l.b16 %v496
    %v1676 = vunpack.c.h.b16 %v496
    %v1677 = vunpack.c.l.b16 %v497
    %v1678 = vunpack.c.h.b16 %v497
    %v1679 = vunpack.c.l.b16 %v498
    %v1680 = vunpack.c.h.b16 %v498
    %v1681 = vunpack.c.l.b16 %v499
    %v1682 = vunpack.c.h.b16 %v499
    %v1683 = vunpack.c.l.b16 %v500
    %v1684 = vunpack.c.h.b16 %v500
    %v1685 = vunpack.c.l.b16 %v501
    %v1686 = vunpack.c.h.b16 %v501
    %v1687 = vunpack.c.l.b16 %v502
    %v1688 = vunpack.c.h.b16 %v502
    %v1689 = vunpack.c.l.b16 %v503
    %v1690 = vunpack.c.h.b16 %v503
    %v1691 = vunpack.c.l.b16 %v504
    %v1692 = vunpack.c.h.b16 %v504
    %v1693 = vunpack.c.l.b16 %v505
    %v1694 = vunpack.c.h.b16 %v505
    %v1695 = vunpack.c.l.b16 %v506
    %v1696 = vunpack.c.h.b16 %v506
    %v1697 = vunpack.c.l.b16 %v507
    %v1698 = vunpack.c.h.b16 %v507
    %v1699 = vunpack.c.l.b16 %v508
    %v1700 = vunpack.c.h.b16 %v508
    %v1701 = vunpack.c.l.b16 %v509
    %v1702 = vunpack.c.h.b16 %v509
    %v1703 = vunpack.c.l.b16 %v510
    %v1704 = vunpack.c.h.b16 %v510
    %v1705 = vpack.c.b16 %v945, %v937
    %v1706 = vpack.c.b16 %v946, %v938
    %v1707 = vpack.c.b16 %v947, %v939
    %v1708 = vpack.c.b16 %v948, %v940
    %v1709 = vpack.c.b16 %v949, %v941
    %v1710 = vpack.c.b16 %v950, %v942
    %v1711 = vpack.c.b16 %v951, %v943
    %v1712 = vpack.c.b16 %v952, %v944
    %v1713 = vpack.c.b16 %v961, %v953
    %v1714 = vpack.c.b16 %v962, %v954
    %v1715 = vpack.c.b16 %v963, %v955
    %v1716 = vpack.c.b16 %v964, %v956
    %v1717 = vpack.c.b16 %v965, %v957
    %v1718 = vpack.c.b16 %v966, %v958
    %v1719 = vpack.c.b16 %v967, %v959
    %v1720 = vpack.c.b16 %v968, %v960
    %v1721 = vpack.c.b16 %v977, %v969
    %v1722 = vpack.c.b16 %v978, %v970
    %v1723 = vpack.c.b16 %v979, %v971
    %v1724 = vpack.c.b16 %v980, %v972
    %v1725 = vpack.c.b16 %v981, %v973
    %v1726 = vpack.c.b16 %v982, %v974
    %v1727 = vpack.c.b16 %v983, %v975
    %v1728 = vpack.c.b16 %v984, %v976
    %v1729 = vpack.c.b16 %v993, %v985
    %v1730 = vpack.c.b16 %v994, %v986
    %v1731 = vpack.c.b16 %v995, %v987
    %v1732 = vpack.c.b16 %v996, %v988
    %v1733 = vpack.c.b16 %v997, %v989
    %v1734 = vpack.c.b16 %v998, %v990
    %v1735 = vpack.c.b16 %v999, %v991
    %v1736 = vpack.c.b16 %v1000, %v992
    %v1737 = vpack.c.b16 %v1009, %v1001
    %v1738 = vpack.c.b16 %v1010, %v1002
    %v1739 = vpack.c.b16 %v1011, %v1003
    %v1740 = vpack.c.b16 %v1012, %v1004
    %v1741 = vpack.c.b16 %v1013, %v1005
    %v1742 = vpack.c.b16 %v1014, %v1006
    %v1743 = vpack.c.b16 %v1015, %v1007
    %v1744 = vpack.c.b16 %v1016, %v1008
    %v1745 = vpack.c.b16 %v1025, %v1017
    %v1746 = vpack.c.b16 %v1026, %v1018
    %v1747 = vpack.c.b16 %v1027, %v1019
    %v1748 = vpack.c.b16 %v1028, %v1020
    %v1749 = vpack.c.b16 %v1029, %v1021
    %v1750 = vpack.c.b16 %v1030, %v1022
    %v1751 = vpack.c.b16 %v1031, %v1023
    %v1752 = vpack.c.b16 %v1032, %v1024
    %v1753 = vpack.c.b16 %v1041, %v1033
    %v1754 = vpack.c.b16 %v1042, %v1034
    %v1755 = vpack.c.b16 %v1043, %v1035
    %v1756 = vpack.c.b16 %v1044, %v1036
    %v1757 = vpack.c.b16 %v1045, %v1037
    %v1758 = vpack.c.b16 %v1046, %v1038
    %v1759 = vpack.c.b16 %v1047, %v1039
    %v1760 = vpack.c.b16 %v1048, %v1040
    %v1761 = vpack.c.b16 %v1057, %v1049
    %v1762 = vpack.c.b16 %v1058, %v1050
    %v1763 = vpack.c.b16 %v1059, %v1051
    %v1764 = vpack.c.b16 %v1060, %v1052
    %v1765 = vpack.c.b16 %v1061, %v1053
    %v1766 = vpack.c.b16 %v1062, %v1054
    %v1767 = vpack.c.b16 %v1063, %v1055
    %v1768 = vpack.c.b16 %v1064, %v1056
    %v1769 = vpack.c.b16 %v1073, %v1065
    %v1770 = vpack.c.b16 %v1074, %v1066
    %v1771 = vpack.c.b16 %v1075, %v1067
    %v1772 = vpack.c.b16 %v1076, %v1068
    %v1773 = vpack.c.b16 %v1077, %v1069
    %v1774 = vpack.c.b16 %v1078, %v1070
    %v1775 = vpack.c.b16 %v1079, %v1071
    %v1776 = vpack.c.b16 %v1080, %v1072
    %v1777 = vpack.c.b16 %v1089, %v1081
    %v1778 = vpack.c.b16 %v1090, %v1082
    %v1779 = vpack.c.b16 %v1091, %v1083
    %v1780 = vpack.c.b16 %v1092, %v1084
    %v1781 = vpack.c.b16 %v1093, %v1085
    %v1782 = vpack.c.b16 %v1094, %v1086
    %v1783 = vpack.c.b16 %v1095, %v1087
    %v1784 = vpack.c.b16 %v1096, %v1088
    %v1785 = vpack.c.b16 %v1105, %v1097
    %v1786 = vpack.c.b16 %v1106, %v1098
    %v1787 = vpack.c.b16 %v1107, %v1099
    %v1788 = vpack.c.b16 %v1108, %v1100
    %v1789 = vpack.c.b16 %v1109, %v1101
    %v1790 = vpack.c.b16 %v1110, %v1102
    %v1791 = vpack.c.b16 %v1111, %v1103
    %v1792 = vpack.c.b16 %v1112, %v1104
    %v1793 = vpack.c.b16 %v1121, %v1113
    %v1794 = vpack.c.b16 %v1122, %v1114
    %v1795 = vpack.c.b16 %v1123, %v1115
    %v1796 = vpack.c.b16 %v1124, %v1116
    %v1797 = vpack.c.b16 %v1125, %v1117
    %v1798 = vpack.c.b16 %v1126, %v1118
    %v1799 = vpack.c.b16 %v1127, %v1119
    %v1800 = vpack.c.b16 %v1128, %v1120
    %v1801 = vpack.c.b16 %v1137, %v1129
    %v1802 = vpack.c.b16 %v1138, %v1130
    %v1803 = vpack.c.b16 %v1139, %v1131
    %v1804 = vpack.c.b16 %v1140, %v1132
    %v1805 = vpack.c.b16 %v1141, %v1133
    %v1806 = vpack.c.b16 %v1142, %v1134
    %v1807 = vpack.c.b16 %v1143, %v1135
    %v1808 = vpack.c.b16 %v1144, %v1136
    %v1809 = vpack.c.b16 %v1153, %v1145
    %v1810 = vpack.c.b16 %v1154, %v1146
    %v1811 = vpack.c.b16 %v1155, %v1147
    %v1812 = vpack.c.b16 %v1156, %v1148
    %v1813 = vpack.c.b16 %v1157, %v1149
    %v1814 = vpack.c.b16 %v1158, %v1150
    %v1815 = vpack.c.b16 %v1159, %v1151
    %v1816 = vpack.c.b16 %v1160, %v1152
    %v1817 = vpack.c.b16 %v1169, %v1161
    %v1818 = vpack.c.b16 %v1170, %v1162
    %v1819 = vpack.c.b16 %v1171, %v1163
    %v1820 = vpack.c.b16 %v1172, %v1164
    %v1821 = vpack.c.b16 %v1173, %v1165
    %v1822 = vpack.c.b16 %v1174, %v1166
    %v1823 = vpack.c.b16 %v1175, %v1167
    %v1824 = vpack.c.b16 %v1176, %v1168
    %v1825 = vpack.c.b16 %v1185, %v1177
    %v1826 = vpack.c.b16 %v1186, %v1178
    %v1827 = vpack.c.b16 %v1187, %v1179
    %v1828 = vpack.c.b16 %v1188, %v1180
    %v1829 = vpack.c.b16 %v1189, %v1181
    %v1830 = vpack.c.b16 %v1190, %v1182
    %v1831 = vpack.c.b16 %v1191, %v1183
    %v1832 = vpack.c.b16 %v1192, %v1184
    %v1833 = vpack.c.b16 %v1201, %v1193
    %v1834 = vpack.c.b16 %v1202, %v1194
    %v1835 = vpack.c.b16 %v1203, %v1195
    %v1836 = vpack.c.b16 %v1204, %v1196
    %v1837 = vpack.c.b16 %v1205, %v1197
    %v1838 = vpack.c.b16 %v1206, %v1198
    %v1839 = vpack.c.b16 %v1207, %v1199
    %v1840 = vpack.c.b16 %v1208, %v1200
    %v1841 = vpack.c.b16 %v1217, %v1209
    %v1842 = vpack.c.b16 %v1218, %v1210
    %v1843 = vpack.c.b16 %v1219, %v1211
    %v1844 = vpack.c.b16 %v1220, %v1212
    %v1845 = vpack.c.b16 %v1221, %v1213
    %v1846 = vpack.c.b16 %v1222, %v1214
    %v1847 = vpack.c.b16 %v1223, %v1215
    %v1848 = vpack.c.b16 %v1224, %v1216
    %v1849 = vpack.c.b16 %v1233, %v1225
    %v1850 = vpack.c.b16 %v1234, %v1226
    %v1851 = vpack.c.b16 %v1235, %v1227
    %v1852 = vpack.c.b16 %v1236, %v1228
    %v1853 = vpack.c.b16 %v1237, %v1229
    %v1854 = vpack.c.b16 %v1238, %v1230
    %v1855 = vpack.c.b16 %v1239, %v1231
    %v1856 = vpack.c.b16 %v1240, %v1232
    %v1857 = vpack.c.b16 %v1249, %v1241
    %v1858 = vpack.c.b16 %v1250, %v1242
    %v1859 = vpack.c.b16 %v1251, %v1243
    %v1860 = vpack.c.b16 %v1252, %v1244
    %v1861 = vpack.c.b16 %v1253, %v1245
    %v1862 = vpack.c.b16 %v1254, %v1246
    %v1863 = vpack.c.b16 %v1255, %v1247
    %v1864 = vpack.c.b16 %v1256, %v1248
    %v1865 = vpack.c.b16 %v1265, %v1257
    %v1866 = vpack.c.b16 %v1266, %v1258
    %v1867 = vpack.c.b16 %v1267, %v1259
    %v1868 = vpack.c.b16 %v1268, %v1260
    %v1869 = vpack.c.b16 %v1269, %v1261
    %v1870 = vpack.c.b16 %v1270, %v1262
    %v1871 = vpack.c.b16 %v1271, %v1263
    %v1872 = vpack.c.b16 %v1272, %v1264
    %v1873 = vpack.c.b16 %v1281, %v1273
    %v1874 = vpack.c.b16 %v1282, %v1274
    %v1875 = vpack.c.b16 %v1283, %v1275
    %v1876 = vpack.c.b16 %v1284, %v1276
    %v1877 = vpack.c.b16 %v1285, %v1277
    %v1878 = vpack.c.b16 %v1286, %v1278
    %v1879 = vpack.c.b16 %v1287, %v1279
    %v1880 = vpack.c.b16 %v1288, %v1280
    %v1881 = vpack.c.b16 %v1297, %v1289
    %v1882 = vpack.c.b16 %v1298, %v1290
    %v1883 = vpack.c.b16 %v1299, %v1291
    %v1884 = vpack.c.b16 %v1300, %v1292
    %v1885 = vpack.c.b16 %v1301, %v1293
    %v1886 = vpack.c.b16 %v1302, %v1294
    %v1887 = vpack.c.b16 %v1303, %v1295
    %v1888 = vpack.c.b16 %v1304, %v1296
    %v1889 = vpack.c.b16 %v1313, %v1305
    %v1890 = vpack.c.b16 %v1314, %v1306
    %v1891 = vpack.c.b16 %v1315, %v1307
    %v1892 = vpack.c.b16 %v1316, %v1308
    %v1893 = vpack.c.b16 %v1317, %v1309
    %v1894 = vpack.c.b16 %v1318, %v1310
    %v1895 = vpack.c.b16 %v1319, %v1311
    %v1896 = vpack.c.b16 %v1320, %v1312
    %v1897 = vpack.c.b16 %v1329, %v1321
    %v1898 = vpack.c.b16 %v1330, %v1322
    %v1899 = vpack.c.b16 %v1331, %v1323
    %v1900 = vpack.c.b16 %v1332, %v1324
    %v1901 = vpack.c.b16 %v1333, %v1325
    %v1902 = vpack.c.b16 %v1334, %v1326
    %v1903 = vpack.c.b16 %v1335, %v1327
    %v1904 = vpack.c.b16 %v1336, %v1328
    %v1905 = vpack.c.b16 %v1345, %v1337
    %v1906 = vpack.c.b16 %v1346, %v1338
    %v1907 = vpack.c.b16 %v1347, %v1339
    %v1908 = vpack.c.b16 %v1348, %v1340
    %v1909 = vpack.c.b16 %v1349, %v1341
    %v1910 = vpack.c.b16 %v1350, %v1342
    %v1911 = vpack.c.b16 %v1351, %v1343
    %v1912 = vpack.c.b16 %v1352, %v1344
    %v1913 = vpack.c.b16 %v1361, %v1353
    %v1914 = vpack.c.b16 %v1362, %v1354
    %v1915 = vpack.c.b16 %v1363, %v1355
    %v1916 = vpack.c.b16 %v1364, %v1356
    %v1917 = vpack.c.b16 %v1365, %v1357
    %v1918 = vpack.c.b16 %v1366, %v1358
    %v1919 = vpack.c.b16 %v1367, %v1359
    %v1920 = vpack.c.b16 %v1368, %v1360
    %v1921 = vpack.c.b16 %v1377, %v1369
    %v1922 = vpack.c.b16 %v1378, %v1370
    %v1923 = vpack.c.b16 %v1379, %v1371
    %v1924 = vpack.c.b16 %v1380, %v1372
    %v1925 = vpack.c.b16 %v1381, %v1373
    %v1926 = vpack.c.b16 %v1382, %v1374
    %v1927 = vpack.c.b16 %v1383, %v1375
    %v1928 = vpack.c.b16 %v1384, %v1376
    %v1929 = vpack.c.b16 %v1393, %v1385
    %v1930 = vpack.c.b16 %v1394, %v1386
    %v1931 = vpack.c.b16 %v1395, %v1387
    %v1932 = vpack.c.b16 %v1396, %v1388
    %v1933 = vpack.c.b16 %v1397, %v1389
    %v1934 = vpack.c.b16 %v1398, %v1390
    %v1935 = vpack.c.b16 %v1399, %v1391
    %v1936 = vpack.c.b16 %v1400, %v1392
    %v1937 = vpack.c.b16 %v1409, %v1401
    %v1938 = vpack.c.b16 %v1410, %v1402
    %v1939 = vpack.c.b16 %v1411, %v1403
    %v1940 = vpack.c.b16 %v1412, %v1404
    %v1941 = vpack.c.b16 %v1413, %v1405
    %v1942 = vpack.c.b16 %v1414, %v1406
    %v1943 = vpack.c.b16 %v1415, %v1407
    %v1944 = vpack.c.b16 %v1416, %v1408
    %v1945 = vpack.c.b16 %v1425, %v1417
    %v1946 = vpack.c.b16 %v1426, %v1418
    %v1947 = vpack.c.b16 %v1427, %v1419
    %v1948 = vpack.c.b16 %v1428, %v1420
    %v1949 = vpack.c.b16 %v1429, %v1421
    %v1950 = vpack.c.b16 %v1430, %v1422
    %v1951 = vpack.c.b16 %v1431, %v1423
    %v1952 = vpack.c.b16 %v1432, %v1424
    %v1953 = vpack.c.b16 %v1441, %v1433
    %v1954 = vpack.c.b16 %v1442, %v1434
    %v1955 = vpack.c.b16 %v1443, %v1435
    %v1956 = vpack.c.b16 %v1444, %v1436
    %v1957 = vpack.c.b16 %v1445, %v1437
    %v1958 = vpack.c.b16 %v1446, %v1438
    %v1959 = vpack.c.b16 %v1447, %v1439
    %v1960 = vpack.c.b16 %v1448, %v1440
    %v1961 = vpack.c.b16 %v1457, %v1449
    %v1962 = vpack.c.b16 %v1458, %v1450
    %v1963 = vpack.c.b16 %v1459, %v1451
    %v1964 = vpack.c.b16 %v1460, %v1452
    %v1965 = vpack.c.b16 %v1461, %v1453
    %v1966 = vpack.c.b16 %v1462, %v1454
    %v1967 = vpack.c.b16 %v1463, %v1455
    %v1968 = vpack.c.b16 %v1464, %v1456
    %v1969 = vpack.c.b16 %v1473, %v1465
    %v1970 = vpack.c.b16 %v1474, %v1466
    %v1971 = vpack.c.b16 %v1475, %v1467
    %v1972 = vpack.c.b16 %v1476, %v1468
    %v1973 = vpack.c.b16 %v1477, %v1469
    %v1974 = vpack.c.b16 %v1478, %v1470
    %v1975 = vpack.c.b16 %v1479, %v1471
    %v1976 = vpack.c.b16 %v1480, %v1472
    %v1977 = vpack.c.b16 %v1489, %v1481
    %v1978 = vpack.c.b16 %v1490, %v1482
    %v1979 = vpack.c.b16 %v1491, %v1483
    %v1980 = vpack.c.b16 %v1492, %v1484
    %v1981 = vpack.c.b16 %v1493, %v1485
    %v1982 = vpack.c.b16 %v1494, %v1486
    %v1983 = vpack.c.b16 %v1495, %v1487
    %v1984 = vpack.c.b16 %v1496, %v1488
    %v1985 = vpack.c.b16 %v1505, %v1497
    %v1986 = vpack.c.b16 %v1506, %v1498
    %v1987 = vpack.c.b16 %v1507, %v1499
    %v1988 = vpack.c.b16 %v1508, %v1500
    %v1989 = vpack.c.b16 %v1509, %v1501
    %v1990 = vpack.c.b16 %v1510, %v1502
    %v1991 = vpack.c.b16 %v1511, %v1503
    %v1992 = vpack.c.b16 %v1512, %v1504
    %v1993 = vpack.c.b16 %v1521, %v1513
    %v1994 = vpack.c.b16 %v1522, %v1514
    %v1995 = vpack.c.b16 %v1523, %v1515
    %v1996 = vpack.c.b16 %v1524, %v1516
    %v1997 = vpack.c.b16 %v1525, %v1517
    %v1998 = vpack.c.b16 %v1526, %v1518
    %v1999 = vpack.c.b16 %v1527, %v1519
    %v2000 = vpack.c.b16 %v1528, %v1520
    %v2001 = vpack.c.b16 %v1537, %v1529
    %v2002 = vpack.c.b16 %v1538, %v1530
    %v2003 = vpack.c.b16 %v1539, %v1531
    %v2004 = vpack.c.b16 %v1540, %v1532
    %v2005 = vpack.c.b16 %v1541, %v1533
    %v2006 = vpack.c.b16 %v1542, %v1534
    %v2007 = vpack.c.b16 %v1543, %v1535
    %v2008 = vpack.c.b16 %v1544, %v1536
    %v2009 = vpack.c.b16 %v1553, %v1545
    %v2010 = vpack.c.b16 %v1554, %v1546
    %v2011 = vpack.c.b16 %v1555, %v1547
    %v2012 = vpack.c.b16 %v1556, %v1548
    %v2013 = vpack.c.b16 %v1557, %v1549
    %v2014 = vpack.c.b16 %v1558, %v1550
    %v2015 = vpack.c.b16 %v1559, %v1551
    %v2016 = vpack.c.b16 %v1560, %v1552
    %v2017 = vpack.c.b16 %v1569, %v1561
    %v2018 = vpack.c.b16 %v1570, %v1562
    %v2019 = vpack.c.b16 %v1571, %v1563
    %v2020 = vpack.c.b16 %v1572, %v1564
    %v2021 = vpack.c.b16 %v1573, %v1565
    %v2022 = vpack.c.b16 %v1574, %v1566
    %v2023 = vpack.c.b16 %v1575, %v1567
    %v2024 = vpack.c.b16 %v1576, %v1568
    %v2025 = vpack.c.b16 %v1585, %v1577
    %v2026 = vpack.c.b16 %v1586, %v1578
    %v2027 = vpack.c.b16 %v1587, %v1579
    %v2028 = vpack.c.b16 %v1588, %v1580
    %v2029 = vpack.c.b16 %v1589, %v1581
    %v2030 = vpack.c.b16 %v1590, %v1582
    %v2031 = vpack.c.b16 %v1591, %v1583
    %v2032 = vpack.c.b16 %v1592, %v1584
    %v2033 = vpack.c.b16 %v1601, %v1593
    %v2034 = vpack.c.b16 %v1602, %v1594
    %v2035 = vpack.c.b16 %v1603, %v1595
    %v2036 = vpack.c.b16 %v1604, %v1596
    %v2037 = vpack.c.b16 %v1605, %v1597
    %v2038 = vpack.c.b16 %v1606, %v1598
    %v2039 = vpack.c.b16 %v1607, %v1599
    %v2040 = vpack.c.b16 %v1608, %v1600
    %v2041 = vpack.c.b16 %v1617, %v1609
    %v2042 = vpack.c.b16 %v1618, %v1610
    %v2043 = vpack.c.b16 %v1619, %v1611
    %v2044 = vpack.c.b16 %v1620, %v1612
    %v2045 = vpack.c.b16 %v1621, %v1613
    %v2046 = vpack.c.b16 %v1622, %v1614
    %v2047 = vpack.c.b16 %v1623, %v1615
    %v2048 = vpack.c.b16 %v1624, %v1616
    %v2049 = vpack.c.b16 %v1633, %v1625
    %v2050 = vpack.c.b16 %v1634, %v1626
    %v2051 = vpack.c.b16 %v1635, %v1627
    %v2052 = vpack.c.b16 %v1636, %v1628
    %v2053 = vpack.c.b16 %v1637, %v1629
    %v2054 = vpack.c.b16 %v1638, %v1630
    %v2055 = vpack.c.b16 %v1639, %v1631
    %v2056 = vpack.c.b16 %v1640, %v1632
    %v2057 = vpack.c.b16 %v1649, %v1641
    %v2058 = vpack.c.b16 %v1650, %v1642
    %v2059 = vpack.c.b16 %v1651, %v1643
    %v2060 = vpack.c.b16 %v1652, %v1644
    %v2061 = vpack.c.b16 %v1653, %v1645
    %v2062 = vpack.c.b16 %v1654, %v1646
    %v2063 = vpack.c.b16 %v1655, %v1647
    %v2064 = vpack.c.b16 %v1656, %v1648
    %v2065 = vpack.c.b16 %v1665, %v1657
    %v2066 = vpack.c.b16 %v1666, %v1658
    %v2067 = vpack.c.b16 %v1667, %v1659
    %v2068 = vpack.c.b16 %v1668, %v1660
    %v2069 = vpack.c.b16 %v1669, %v1661
    %v2070 = vpack.c.b16 %v1670, %v1662
    %v2071 = vpack.c.b16 %v1671, %v1663
    %v2072 = vpack.c.b16 %v1672, %v1664
    %v2073 = vpack.c.b16 %v1681, %v1673
    %v2074 = vpack.c.b16 %v1682, %v1674
    %v2075 = vpack.c.b16 %v1683, %v1675
    %v2076 = vpack.c.b16 %v1684, %v1676
    %v2077 = vpack.c.b16 %v1685, %v1677
    %v2078 = vpack.c.b16 %v1686, %v1678
    %v2079 = vpack.c.b16 %v1687, %v1679
    %v2080 = vpack.c.b16 %v1688, %v1680
    %v2081 = vpack.c.b16 %v1697, %v1689
    %v2082 = vpack.c.b16 %v1698, %v1690
    %v2083 = vpack.c.b16 %v1699, %v1691
    %v2084 = vpack.c.b16 %v1700, %v1692
    %v2085 = vpack.c.b16 %v1701, %v1693
    %v2086 = vpack.c.b16 %v1702, %v1694
    %v2087 = vpack.c.b16 %v1703, %v1695
    %v2088 = vpack.c.b16 %v1704, %v1696
    %2473 = vmatprep.subr.bf16.mxu0 %v1706
    %2474 = vmatpush1.bf16.msra.mxu0 %v1705
    %2475 = vmatprep.subr.bf16.mxu0 %v1714
    %2476 = vmatpush1.bf16.msra.mxu0 %v1713
    %2477 = vmatprep.subr.bf16.mxu0 %v1722
    %2478 = vmatpush1.bf16.msra.mxu0 %v1721
    %2479 = vmatprep.subr.bf16.mxu0 %v1730
    %2480 = vmatpush1.bf16.msra.mxu0 %v1729
    %2481 = vmatprep.subr.bf16.mxu0 %v1738
    %2482 = vmatpush1.bf16.msra.mxu0 %v1737
    %2483 = vmatprep.subr.bf16.mxu0 %v1746
    %2484 = vmatpush1.bf16.msra.mxu0 %v1745
    %2485 = vmatprep.subr.bf16.mxu0 %v1754
    %2486 = vmatpush1.bf16.msra.mxu0 %v1753
    %2487 = vmatprep.subr.bf16.mxu0 %v1762
    %2488 = vmatpush1.bf16.msra.mxu0 %v1761
    %2489 = vmatprep.subr.bf16.mxu0 %v1770
    %2490 = vmatpush1.bf16.msra.mxu0 %v1769
    %2491 = vmatprep.subr.bf16.mxu0 %v1778
    %2492 = vmatpush1.bf16.msra.mxu0 %v1777
    %2493 = vmatprep.subr.bf16.mxu0 %v1786
    %2494 = vmatpush1.bf16.msra.mxu0 %v1785
    %2495 = vmatprep.subr.bf16.mxu0 %v1794
    %2496 = vmatpush1.bf16.msra.mxu0 %v1793
    %2497 = vmatprep.subr.bf16.mxu0 %v1802
    %2498 = vmatpush1.bf16.msra.mxu0 %v1801
    %2499 = vmatprep.subr.bf16.mxu0 %v1810
    %2500 = vmatpush1.bf16.msra.mxu0 %v1809
    %2501 = vmatprep.subr.bf16.mxu0 %v1818
    %2502 = vmatpush1.bf16.msra.mxu0 %v1817
    %2503 = vmatprep.subr.bf16.mxu0 %v1826
    %2504 = vmatpush1.bf16.msra.mxu0 %v1825
    %2505 = vmatprep.mubr.bf16.mxu0 %v122
    %2506 = vmatmul.mubr.bf16.gmra.mrb[0].mxu0 %v121
    %v2507 = vpop.f32.mrb[0].mxu0
    %v2508 = vadd.f32 %v516, %v2507
    %v2509 = vpop.f32.mrb[0].mxu0
    %v2510 = vadd.f32 %v520, %v2509
    %v2511 = vpop.f32.mrb[0].mxu0
    %v2512 = vpop.f32.mrb[0].mxu0
    %2513 = vdwg.mxu0
    %2514 = vmatprep.subr.bf16.mxu0 %v1834
    %2515 = vmatpush1.bf16.msra.mxu0 %v1833
    %2516 = vmatprep.subr.bf16.mxu0 %v1842
    %2517 = vmatpush1.bf16.msra.mxu0 %v1841
    %2518 = vmatprep.subr.bf16.mxu0 %v1850
    %2519 = vmatpush1.bf16.msra.mxu0 %v1849
    %2520 = vmatprep.subr.bf16.mxu0 %v1858
    %2521 = vmatpush1.bf16.msra.mxu0 %v1857
    %2522 = vmatprep.subr.bf16.mxu0 %v1866
    %2523 = vmatpush1.bf16.msra.mxu0 %v1865
    %2524 = vmatprep.subr.bf16.mxu0 %v1874
    %2525 = vmatpush1.bf16.msra.mxu0 %v1873
    %2526 = vmatprep.subr.bf16.mxu0 %v1882
    %2527 = vmatpush1.bf16.msra.mxu0 %v1881
    %2528 = vmatprep.subr.bf16.mxu0 %v1890
    %2529 = vmatpush1.bf16.msra.mxu0 %v1889
    %2530 = vmatprep.subr.bf16.mxu0 %v1898
    %2531 = vmatpush1.bf16.msra.mxu0 %v1897
    %2532 = vmatprep.subr.bf16.mxu0 %v1906
    %2533 = vmatpush1.bf16.msra.mxu0 %v1905
    %2534 = vmatprep.subr.bf16.mxu0 %v1914
    %2535 = vmatpush1.bf16.msra.mxu0 %v1913
    %2536 = vmatprep.subr.bf16.mxu0 %v1922
    %2537 = vmatpush1.bf16.msra.mxu0 %v1921
    %2538 = vmatprep.subr.bf16.mxu0 %v1930
    %2539 = vmatpush1.bf16.msra.mxu0 %v1929
    %2540 = vmatprep.subr.bf16.mxu0 %v1938
    %2541 = vmatpush1.bf16.msra.mxu0 %v1937
    %2542 = vmatprep.subr.bf16.mxu0 %v1946
    %2543 = vmatpush1.bf16.msra.mxu0 %v1945
    %2544 = vmatprep.subr.bf16.mxu0 %v1954
    %2545 = vmatpush1.bf16.msra.mxu0 %v1953
    %2546 = vmatprep.mubr.bf16.mxu0 %v124
    %2547 = vmatmul.mubr.bf16.gmra.mrb[0].mxu0 %v123
    %v2548 = vpop.f32.mrb[0].mxu0
    %v2549 = vadd.f32 %v2508, %v2548
    %v2550 = vpop.f32.mrb[0].mxu0
    %v2551 = vadd.f32 %v2510, %v2550
    %v2552 = vpop.f32.mrb[0].mxu0
    %v2553 = vpop.f32.mrb[0].mxu0
    %2554 = vdwg.mxu0
    %2555 = vmatprep.subr.bf16.mxu0 %v1962
    %2556 = vmatpush1.bf16.msra.mxu0 %v1961
    %2557 = vmatprep.subr.bf16.mxu0 %v1970
    %2558 = vmatpush1.bf16.msra.mxu0 %v1969
    %2559 = vmatprep.subr.bf16.mxu0 %v1978
    %2560 = vmatpush1.bf16.msra.mxu0 %v1977
    %2561 = vmatprep.subr.bf16.mxu0 %v1986
    %2562 = vmatpush1.bf16.msra.mxu0 %v1985
    %2563 = vmatprep.subr.bf16.mxu0 %v1994
    %2564 = vmatpush1.bf16.msra.mxu0 %v1993
    %2565 = vmatprep.subr.bf16.mxu0 %v2002
    %2566 = vmatpush1.bf16.msra.mxu0 %v2001
    %2567 = vmatprep.subr.bf16.mxu0 %v2010
    %2568 = vmatpush1.bf16.msra.mxu0 %v2009
    %2569 = vmatprep.subr.bf16.mxu0 %v2018
    %2570 = vmatpush1.bf16.msra.mxu0 %v2017
    %2571 = vmatprep.subr.bf16.mxu0 %v2026
    %2572 = vmatpush1.bf16.msra.mxu0 %v2025
    %2573 = vmatprep.subr.bf16.mxu0 %v2034
    %2574 = vmatpush1.bf16.msra.mxu0 %v2033
    %2575 = vmatprep.subr.bf16.mxu0 %v2042
    %2576 = vmatpush1.bf16.msra.mxu0 %v2041
    %2577 = vmatprep.subr.bf16.mxu0 %v2050
    %2578 = vmatpush1.bf16.msra.mxu0 %v2049
    %2579 = vmatprep.subr.bf16.mxu0 %v2058
    %2580 = vmatpush1.bf16.msra.mxu0 %v2057
    %2581 = vmatprep.subr.bf16.mxu0 %v2066
    %2582 = vmatpush1.bf16.msra.mxu0 %v2065
    %2583 = vmatprep.subr.bf16.mxu0 %v2074
    %2584 = vmatpush1.bf16.msra.mxu0 %v2073
    %2585 = vmatprep.subr.bf16.mxu0 %v2082
    %2586 = vmatpush1.bf16.msra.mxu0 %v2081
    %2587 = vmatprep.mubr.bf16.mxu0 %v126
    %2588 = vmatmul.mubr.bf16.gmra.mrb[0].mxu0 %v125
    %v2589 = vpop.f32.mrb[0].mxu0
    %v2590 = vadd.f32 %v2549, %v2589
    %v2591 = vpop.f32.mrb[0].mxu0
    %v2592 = vadd.f32 %v2551, %v2591
    %v2593 = vpop.f32.mrb[0].mxu0
    %v2594 = vpop.f32.mrb[0].mxu0
    %2595 = vdwg.mxu0
    %2596 = vmatprep.subr.bf16.mxu0 %v1708
    %2597 = vmatpush1.bf16.msra.mxu0 %v1707
    %2598 = vmatprep.subr.bf16.mxu0 %v1716
    %2599 = vmatpush1.bf16.msra.mxu0 %v1715
    %2600 = vmatprep.subr.bf16.mxu0 %v1724
    %2601 = vmatpush1.bf16.msra.mxu0 %v1723
    %2602 = vmatprep.subr.bf16.mxu0 %v1732
    %2603 = vmatpush1.bf16.msra.mxu0 %v1731
    %2604 = vmatprep.subr.bf16.mxu0 %v1740
    %2605 = vmatpush1.bf16.msra.mxu0 %v1739
    %2606 = vmatprep.subr.bf16.mxu0 %v1748
    %2607 = vmatpush1.bf16.msra.mxu0 %v1747
    %2608 = vmatprep.subr.bf16.mxu0 %v1756
    %2609 = vmatpush1.bf16.msra.mxu0 %v1755
    %2610 = vmatprep.subr.bf16.mxu0 %v1764
    %2611 = vmatpush1.bf16.msra.mxu0 %v1763
    %2612 = vmatprep.subr.bf16.mxu0 %v1772
    %2613 = vmatpush1.bf16.msra.mxu0 %v1771
    %2614 = vmatprep.subr.bf16.mxu0 %v1780
    %2615 = vmatpush1.bf16.msra.mxu0 %v1779
    %2616 = vmatprep.subr.bf16.mxu0 %v1788
    %2617 = vmatpush1.bf16.msra.mxu0 %v1787
    %2618 = vmatprep.subr.bf16.mxu0 %v1796
    %2619 = vmatpush1.bf16.msra.mxu0 %v1795
    %2620 = vmatprep.subr.bf16.mxu0 %v1804
    %2621 = vmatpush1.bf16.msra.mxu0 %v1803
    %2622 = vmatprep.subr.bf16.mxu0 %v1812
    %2623 = vmatpush1.bf16.msra.mxu0 %v1811
    %2624 = vmatprep.subr.bf16.mxu0 %v1820
    %2625 = vmatpush1.bf16.msra.mxu0 %v1819
    %2626 = vmatprep.subr.bf16.mxu0 %v1828
    %2627 = vmatpush1.bf16.msra.mxu0 %v1827
    %2628 = vmatprep.mubr.bf16.mxu0 %v122
    %2629 = vmatmul.mubr.bf16.gmra.mrb[0].mxu0 %v121
    %v2630 = vpop.f32.mrb[0].mxu0
    %v2631 = vadd.f32 %v524, %v2630
    %v2632 = vpop.f32.mrb[0].mxu0
    %v2633 = vadd.f32 %v528, %v2632
    %v2634 = vpop.f32.mrb[0].mxu0
    %v2635 = vpop.f32.mrb[0].mxu0
    %2636 = vdwg.mxu0
    %2637 = vmatprep.subr.bf16.mxu0 %v1836
    %2638 = vmatpush1.bf16.msra.mxu0 %v1835
    %2639 = vmatprep.subr.bf16.mxu0 %v1844
    %2640 = vmatpush1.bf16.msra.mxu0 %v1843
    %2641 = vmatprep.subr.bf16.mxu0 %v1852
    %2642 = vmatpush1.bf16.msra.mxu0 %v1851
    %2643 = vmatprep.subr.bf16.mxu0 %v1860
    %2644 = vmatpush1.bf16.msra.mxu0 %v1859
    %2645 = vmatprep.subr.bf16.mxu0 %v1868
    %2646 = vmatpush1.bf16.msra.mxu0 %v1867
    %2647 = vmatprep.subr.bf16.mxu0 %v1876
    %2648 = vmatpush1.bf16.msra.mxu0 %v1875
    %2649 = vmatprep.subr.bf16.mxu0 %v1884
    %2650 = vmatpush1.bf16.msra.mxu0 %v1883
    %2651 = vmatprep.subr.bf16.mxu0 %v1892
    %2652 = vmatpush1.bf16.msra.mxu0 %v1891
    %2653 = vmatprep.subr.bf16.mxu0 %v1900
    %2654 = vmatpush1.bf16.msra.mxu0 %v1899
    %2655 = vmatprep.subr.bf16.mxu0 %v1908
    %2656 = vmatpush1.bf16.msra.mxu0 %v1907
    %2657 = vmatprep.subr.bf16.mxu0 %v1916
    %2658 = vmatpush1.bf16.msra.mxu0 %v1915
    %2659 = vmatprep.subr.bf16.mxu0 %v1924
    %2660 = vmatpush1.bf16.msra.mxu0 %v1923
    %2661 = vmatprep.subr.bf16.mxu0 %v1932
    %2662 = vmatpush1.bf16.msra.mxu0 %v1931
    %2663 = vmatprep.subr.bf16.mxu0 %v1940
    %2664 = vmatpush1.bf16.msra.mxu0 %v1939
    %2665 = vmatprep.subr.bf16.mxu0 %v1948
    %2666 = vmatpush1.bf16.msra.mxu0 %v1947
    %2667 = vmatprep.subr.bf16.mxu0 %v1956
    %2668 = vmatpush1.bf16.msra.mxu0 %v1955
    %2669 = vmatprep.mubr.bf16.mxu0 %v124
    %2670 = vmatmul.mubr.bf16.gmra.mrb[0].mxu0 %v123
    %v2671 = vpop.f32.mrb[0].mxu0
    %v2672 = vadd.f32 %v2631, %v2671
    %v2673 = vpop.f32.mrb[0].mxu0
    %v2674 = vadd.f32 %v2633, %v2673
    %v2675 = vpop.f32.mrb[0].mxu0
    %v2676 = vpop.f32.mrb[0].mxu0
    %2677 = vdwg.mxu0
    %2678 = vmatprep.subr.bf16.mxu0 %v1964
    %2679 = vmatpush1.bf16.msra.mxu0 %v1963
    %2680 = vmatprep.subr.bf16.mxu0 %v1972
    %2681 = vmatpush1.bf16.msra.mxu0 %v1971
    %2682 = vmatprep.subr.bf16.mxu0 %v1980
    %2683 = vmatpush1.bf16.msra.mxu0 %v1979
    %2684 = vmatprep.subr.bf16.mxu0 %v1988
    %2685 = vmatpush1.bf16.msra.mxu0 %v1987
    %2686 = vmatprep.subr.bf16.mxu0 %v1996
    %2687 = vmatpush1.bf16.msra.mxu0 %v1995
    %2688 = vmatprep.subr.bf16.mxu0 %v2004
    %2689 = vmatpush1.bf16.msra.mxu0 %v2003
    %2690 = vmatprep.subr.bf16.mxu0 %v2012
    %2691 = vmatpush1.bf16.msra.mxu0 %v2011
    %2692 = vmatprep.subr.bf16.mxu0 %v2020
    %2693 = vmatpush1.bf16.msra.mxu0 %v2019
    %2694 = vmatprep.subr.bf16.mxu0 %v2028
    %2695 = vmatpush1.bf16.msra.mxu0 %v2027
    %2696 = vmatprep.subr.bf16.mxu0 %v2036
    %2697 = vmatpush1.bf16.msra.mxu0 %v2035
    %2698 = vmatprep.subr.bf16.mxu0 %v2044
    %2699 = vmatpush1.bf16.msra.mxu0 %v2043
    %2700 = vmatprep.subr.bf16.mxu0 %v2052
    %2701 = vmatpush1.bf16.msra.mxu0 %v2051
    %2702 = vmatprep.subr.bf16.mxu0 %v2060
    %2703 = vmatpush1.bf16.msra.mxu0 %v2059
    %2704 = vmatprep.subr.bf16.mxu0 %v2068
    %2705 = vmatpush1.bf16.msra.mxu0 %v2067
    %2706 = vmatprep.subr.bf16.mxu0 %v2076
    %2707 = vmatpush1.bf16.msra.mxu0 %v2075
    %2708 = vmatprep.subr.bf16.mxu0 %v2084
    %2709 = vmatpush1.bf16.msra.mxu0 %v2083
    %2710 = vmatprep.mubr.bf16.mxu0 %v126
    %2711 = vmatmul.mubr.bf16.gmra.mrb[0].mxu0 %v125
    %v2712 = vpop.f32.mrb[0].mxu0
    %v2713 = vadd.f32 %v2672, %v2712
    %v2714 = vpop.f32.mrb[0].mxu0
    %v2715 = vadd.f32 %v2674, %v2714
    %v2716 = vpop.f32.mrb[0].mxu0
    %v2717 = vpop.f32.mrb[0].mxu0
    %2718 = vdwg.mxu0
    %2719 = vmatprep.subr.bf16.mxu0 %v1710
    %2720 = vmatpush1.bf16.msra.mxu0 %v1709
    %2721 = vmatprep.subr.bf16.mxu0 %v1718
    %2722 = vmatpush1.bf16.msra.mxu0 %v1717
    %2723 = vmatprep.subr.bf16.mxu0 %v1726
    %2724 = vmatpush1.bf16.msra.mxu0 %v1725
    %2725 = vmatprep.subr.bf16.mxu0 %v1734
    %2726 = vmatpush1.bf16.msra.mxu0 %v1733
    %2727 = vmatprep.subr.bf16.mxu0 %v1742
    %2728 = vmatpush1.bf16.msra.mxu0 %v1741
    %2729 = vmatprep.subr.bf16.mxu0 %v1750
    %2730 = vmatpush1.bf16.msra.mxu0 %v1749
    %2731 = vmatprep.subr.bf16.mxu0 %v1758
    %2732 = vmatpush1.bf16.msra.mxu0 %v1757
    %2733 = vmatprep.subr.bf16.mxu0 %v1766
    %2734 = vmatpush1.bf16.msra.mxu0 %v1765
    %2735 = vmatprep.subr.bf16.mxu0 %v1774
    %2736 = vmatpush1.bf16.msra.mxu0 %v1773
    %2737 = vmatprep.subr.bf16.mxu0 %v1782
    %2738 = vmatpush1.bf16.msra.mxu0 %v1781
    %2739 = vmatprep.subr.bf16.mxu0 %v1790
    %2740 = vmatpush1.bf16.msra.mxu0 %v1789
    %2741 = vmatprep.subr.bf16.mxu0 %v1798
    %2742 = vmatpush1.bf16.msra.mxu0 %v1797
    %2743 = vmatprep.subr.bf16.mxu0 %v1806
    %2744 = vmatpush1.bf16.msra.mxu0 %v1805
    %2745 = vmatprep.subr.bf16.mxu0 %v1814
    %2746 = vmatpush1.bf16.msra.mxu0 %v1813
    %2747 = vmatprep.subr.bf16.mxu0 %v1822
    %2748 = vmatpush1.bf16.msra.mxu0 %v1821
    %2749 = vmatprep.subr.bf16.mxu0 %v1830
    %2750 = vmatpush1.bf16.msra.mxu0 %v1829
    %2751 = vmatprep.mubr.bf16.mxu0 %v122
    %2752 = vmatmul.mubr.bf16.gmra.mrb[0].mxu0 %v121
    %v2753 = vpop.f32.mrb[0].mxu0
    %v2754 = vadd.f32 %v532, %v2753
    %v2755 = vpop.f32.mrb[0].mxu0
    %v2756 = vadd.f32 %v536, %v2755
    %v2757 = vpop.f32.mrb[0].mxu0
    %v2758 = vpop.f32.mrb[0].mxu0
    %2759 = vdwg.mxu0
    %2760 = vmatprep.subr.bf16.mxu0 %v1838
    %2761 = vmatpush1.bf16.msra.mxu0 %v1837
    %2762 = vmatprep.subr.bf16.mxu0 %v1846
    %2763 = vmatpush1.bf16.msra.mxu0 %v1845
    %2764 = vmatprep.subr.bf16.mxu0 %v1854
    %2765 = vmatpush1.bf16.msra.mxu0 %v1853
    %2766 = vmatprep.subr.bf16.mxu0 %v1862
    %2767 = vmatpush1.bf16.msra.mxu0 %v1861
    %2768 = vmatprep.subr.bf16.mxu0 %v1870
    %2769 = vmatpush1.bf16.msra.mxu0 %v1869
    %2770 = vmatprep.subr.bf16.mxu0 %v1878
    %2771 = vmatpush1.bf16.msra.mxu0 %v1877
    %2772 = vmatprep.subr.bf16.mxu0 %v1886
    %2773 = vmatpush1.bf16.msra.mxu0 %v1885
    %2774 = vmatprep.subr.bf16.mxu0 %v1894
    %2775 = vmatpush1.bf16.msra.mxu0 %v1893
    %2776 = vmatprep.subr.bf16.mxu0 %v1902
    %2777 = vmatpush1.bf16.msra.mxu0 %v1901
    %2778 = vmatprep.subr.bf16.mxu0 %v1910
    %2779 = vmatpush1.bf16.msra.mxu0 %v1909
    %2780 = vmatprep.subr.bf16.mxu0 %v1918
    %2781 = vmatpush1.bf16.msra.mxu0 %v1917
    %2782 = vmatprep.subr.bf16.mxu0 %v1926
    %2783 = vmatpush1.bf16.msra.mxu0 %v1925
    %2784 = vmatprep.subr.bf16.mxu0 %v1934
    %2785 = vmatpush1.bf16.msra.mxu0 %v1933
    %2786 = vmatprep.subr.bf16.mxu0 %v1942
    %2787 = vmatpush1.bf16.msra.mxu0 %v1941
    %2788 = vmatprep.subr.bf16.mxu0 %v1950
    %2789 = vmatpush1.bf16.msra.mxu0 %v1949
    %2790 = vmatprep.subr.bf16.mxu0 %v1958
    %2791 = vmatpush1.bf16.msra.mxu0 %v1957
    %2792 = vmatprep.mubr.bf16.mxu0 %v124
    %2793 = vmatmul.mubr.bf16.gmra.mrb[0].mxu0 %v123
    %v2794 = vpop.f32.mrb[0].mxu0
    %v2795 = vadd.f32 %v2754, %v2794
    %v2796 = vpop.f32.mrb[0].mxu0
    %v2797 = vadd.f32 %v2756, %v2796
    %v2798 = vpop.f32.mrb[0].mxu0
    %v2799 = vpop.f32.mrb[0].mxu0
    %2800 = vdwg.mxu0
    %2801 = vmatprep.subr.bf16.mxu0 %v1966
    %2802 = vmatpush1.bf16.msra.mxu0 %v1965
    %2803 = vmatprep.subr.bf16.mxu0 %v1974
    %2804 = vmatpush1.bf16.msra.mxu0 %v1973
    %2805 = vmatprep.subr.bf16.mxu0 %v1982
    %2806 = vmatpush1.bf16.msra.mxu0 %v1981
    %2807 = vmatprep.subr.bf16.mxu0 %v1990
    %2808 = vmatpush1.bf16.msra.mxu0 %v1989
    %2809 = vmatprep.subr.bf16.mxu0 %v1998
    %2810 = vmatpush1.bf16.msra.mxu0 %v1997
    %2811 = vmatprep.subr.bf16.mxu0 %v2006
    %2812 = vmatpush1.bf16.msra.mxu0 %v2005
    %2813 = vmatprep.subr.bf16.mxu0 %v2014
    %2814 = vmatpush1.bf16.msra.mxu0 %v2013
    %2815 = vmatprep.subr.bf16.mxu0 %v2022
    %2816 = vmatpush1.bf16.msra.mxu0 %v2021
    %2817 = vmatprep.subr.bf16.mxu0 %v2030
    %2818 = vmatpush1.bf16.msra.mxu0 %v2029
    %2819 = vmatprep.subr.bf16.mxu0 %v2038
    %2820 = vmatpush1.bf16.msra.mxu0 %v2037
    %2821 = vmatprep.subr.bf16.mxu0 %v2046
    %2822 = vmatpush1.bf16.msra.mxu0 %v2045
    %2823 = vmatprep.subr.bf16.mxu0 %v2054
    %2824 = vmatpush1.bf16.msra.mxu0 %v2053
    %2825 = vmatprep.subr.bf16.mxu0 %v2062
    %2826 = vmatpush1.bf16.msra.mxu0 %v2061
    %2827 = vmatprep.subr.bf16.mxu0 %v2070
    %2828 = vmatpush1.bf16.msra.mxu0 %v2069
    %2829 = vmatprep.subr.bf16.mxu0 %v2078
    %2830 = vmatpush1.bf16.msra.mxu0 %v2077
    %2831 = vmatprep.subr.bf16.mxu0 %v2086
    %2832 = vmatpush1.bf16.msra.mxu0 %v2085
    %2833 = vmatprep.mubr.bf16.mxu0 %v126
    %2834 = vmatmul.mubr.bf16.gmra.mrb[0].mxu0 %v125
    %v2835 = vpop.f32.mrb[0].mxu0
    %v2836 = vadd.f32 %v2795, %v2835
    %v2837 = vpop.f32.mrb[0].mxu0
    %v2838 = vadd.f32 %v2797, %v2837
    %v2839 = vpop.f32.mrb[0].mxu0
    %v2840 = vpop.f32.mrb[0].mxu0
    %2841 = vdwg.mxu0
    %2842 = vmatprep.subr.bf16.mxu0 %v1712
    %2843 = vmatpush1.bf16.msra.mxu0 %v1711
    %2844 = vmatprep.subr.bf16.mxu0 %v1720
    %2845 = vmatpush1.bf16.msra.mxu0 %v1719
    %2846 = vmatprep.subr.bf16.mxu0 %v1728
    %2847 = vmatpush1.bf16.msra.mxu0 %v1727
    %2848 = vmatprep.subr.bf16.mxu0 %v1736
    %2849 = vmatpush1.bf16.msra.mxu0 %v1735
    %2850 = vmatprep.subr.bf16.mxu0 %v1744
    %2851 = vmatpush1.bf16.msra.mxu0 %v1743
    %2852 = vmatprep.subr.bf16.mxu0 %v1752
    %2853 = vmatpush1.bf16.msra.mxu0 %v1751
    %2854 = vmatprep.subr.bf16.mxu0 %v1760
    %2855 = vmatpush1.bf16.msra.mxu0 %v1759
    %2856 = vmatprep.subr.bf16.mxu0 %v1768
    %2857 = vmatpush1.bf16.msra.mxu0 %v1767
    %2858 = vmatprep.subr.bf16.mxu0 %v1776
    %2859 = vmatpush1.bf16.msra.mxu0 %v1775
    %2860 = vmatprep.subr.bf16.mxu0 %v1784
    %2861 = vmatpush1.bf16.msra.mxu0 %v1783
    %2862 = vmatprep.subr.bf16.mxu0 %v1792
    %2863 = vmatpush1.bf16.msra.mxu0 %v1791
    %2864 = vmatprep.subr.bf16.mxu0 %v1800
    %2865 = vmatpush1.bf16.msra.mxu0 %v1799
    %2866 = vmatprep.subr.bf16.mxu0 %v1808
    %2867 = vmatpush1.bf16.msra.mxu0 %v1807
    %2868 = vmatprep.subr.bf16.mxu0 %v1816
    %2869 = vmatpush1.bf16.msra.mxu0 %v1815
    %2870 = vmatprep.subr.bf16.mxu0 %v1824
    %2871 = vmatpush1.bf16.msra.mxu0 %v1823
    %2872 = vmatprep.subr.bf16.mxu0 %v1832
    %2873 = vmatpush1.bf16.msra.mxu0 %v1831
    %2874 = vmatprep.mubr.bf16.mxu0 %v122
    %2875 = vmatmul.mubr.bf16.gmra.mrb[0].mxu0 %v121
    %v2876 = vpop.f32.mrb[0].mxu0
    %v2877 = vadd.f32 %v540, %v2876
    %v2878 = vpop.f32.mrb[0].mxu0
    %v2879 = vadd.f32 %v544, %v2878
    %v2880 = vpop.f32.mrb[0].mxu0
    %v2881 = vpop.f32.mrb[0].mxu0
    %2882 = vdwg.mxu0
    %2883 = vmatprep.subr.bf16.mxu0 %v1840
    %2884 = vmatpush1.bf16.msra.mxu0 %v1839
    %2885 = vmatprep.subr.bf16.mxu0 %v1848
    %2886 = vmatpush1.bf16.msra.mxu0 %v1847
    %2887 = vmatprep.subr.bf16.mxu0 %v1856
    %2888 = vmatpush1.bf16.msra.mxu0 %v1855
    %2889 = vmatprep.subr.bf16.mxu0 %v1864
    %2890 = vmatpush1.bf16.msra.mxu0 %v1863
    %2891 = vmatprep.subr.bf16.mxu0 %v1872
    %2892 = vmatpush1.bf16.msra.mxu0 %v1871
    %2893 = vmatprep.subr.bf16.mxu0 %v1880
    %2894 = vmatpush1.bf16.msra.mxu0 %v1879
    %2895 = vmatprep.subr.bf16.mxu0 %v1888
    %2896 = vmatpush1.bf16.msra.mxu0 %v1887
    %2897 = vmatprep.subr.bf16.mxu0 %v1896
    %2898 = vmatpush1.bf16.msra.mxu0 %v1895
    %2899 = vmatprep.subr.bf16.mxu0 %v1904
    %2900 = vmatpush1.bf16.msra.mxu0 %v1903
    %2901 = vmatprep.subr.bf16.mxu0 %v1912
    %2902 = vmatpush1.bf16.msra.mxu0 %v1911
    %2903 = vmatprep.subr.bf16.mxu0 %v1920
    %2904 = vmatpush1.bf16.msra.mxu0 %v1919
    %2905 = vmatprep.subr.bf16.mxu0 %v1928
    %2906 = vmatpush1.bf16.msra.mxu0 %v1927
    %2907 = vmatprep.subr.bf16.mxu0 %v1936
    %2908 = vmatpush1.bf16.msra.mxu0 %v1935
    %2909 = vmatprep.subr.bf16.mxu0 %v1944
    %2910 = vmatpush1.bf16.msra.mxu0 %v1943
    %2911 = vmatprep.subr.bf16.mxu0 %v1952
    %2912 = vmatpush1.bf16.msra.mxu0 %v1951
    %2913 = vmatprep.subr.bf16.mxu0 %v1960
    %2914 = vmatpush1.bf16.msra.mxu0 %v1959
    %2915 = vmatprep.mubr.bf16.mxu0 %v124
    %2916 = vmatmul.mubr.bf16.gmra.mrb[0].mxu0 %v123
    %v2917 = vpop.f32.mrb[0].mxu0
    %v2918 = vadd.f32 %v2877, %v2917
    %v2919 = vpop.f32.mrb[0].mxu0
    %v2920 = vadd.f32 %v2879, %v2919
    %v2921 = vpop.f32.mrb[0].mxu0
    %v2922 = vpop.f32.mrb[0].mxu0
    %2923 = vdwg.mxu0
    %2924 = vmatprep.subr.bf16.mxu0 %v1968
    %2925 = vmatpush1.bf16.msra.mxu0 %v1967
    %2926 = vmatprep.subr.bf16.mxu0 %v1976
    %2927 = vmatpush1.bf16.msra.mxu0 %v1975
    %2928 = vmatprep.subr.bf16.mxu0 %v1984
    %2929 = vmatpush1.bf16.msra.mxu0 %v1983
    %2930 = vmatprep.subr.bf16.mxu0 %v1992
    %2931 = vmatpush1.bf16.msra.mxu0 %v1991
    %2932 = vmatprep.subr.bf16.mxu0 %v2000
    %2933 = vmatpush1.bf16.msra.mxu0 %v1999
    %2934 = vmatprep.subr.bf16.mxu0 %v2008
    %2935 = vmatpush1.bf16.msra.mxu0 %v2007
    %2936 = vmatprep.subr.bf16.mxu0 %v2016
    %2937 = vmatpush1.bf16.msra.mxu0 %v2015
    %2938 = vmatprep.subr.bf16.mxu0 %v2024
    %2939 = vmatpush1.bf16.msra.mxu0 %v2023
    %2940 = vmatprep.subr.bf16.mxu0 %v2032
    %2941 = vmatpush1.bf16.msra.mxu0 %v2031
    %2942 = vmatprep.subr.bf16.mxu0 %v2040
    %2943 = vmatpush1.bf16.msra.mxu0 %v2039
    %2944 = vmatprep.subr.bf16.mxu0 %v2048
    %2945 = vmatpush1.bf16.msra.mxu0 %v2047
    %2946 = vmatprep.subr.bf16.mxu0 %v2056
    %2947 = vmatpush1.bf16.msra.mxu0 %v2055
    %2948 = vmatprep.subr.bf16.mxu0 %v2064
    %2949 = vmatpush1.bf16.msra.mxu0 %v2063
    %2950 = vmatprep.subr.bf16.mxu0 %v2072
    %2951 = vmatpush1.bf16.msra.mxu0 %v2071
    %2952 = vmatprep.subr.bf16.mxu0 %v2080
    %2953 = vmatpush1.bf16.msra.mxu0 %v2079
    %2954 = vmatprep.subr.bf16.mxu0 %v2088
    %2955 = vmatpush1.bf16.msra.mxu0 %v2087
    %2956 = vmatprep.mubr.bf16.mxu0 %v126
    %2957 = vmatmul.mubr.bf16.gmra.mrb[0].mxu0 %v125
    %v2958 = vpop.f32.mrb[0].mxu0
    %v2959 = vadd.f32 %v2918, %v2958
    %v2960 = vpop.f32.mrb[0].mxu0
    %v2961 = vadd.f32 %v2920, %v2960
    %v2962 = vpop.f32.mrb[0].mxu0
    %v2963 = vpop.f32.mrb[0].mxu0
    %2964 = vdwg.mxu0
    %v2965 = vmax.f32 %v2590, 0.0
    %v2966 = vmax.f32 %v2592, 0.0
    %v2967 = vmax.f32 %v2713, 0.0
    %v2968 = vmax.f32 %v2715, 0.0
    %v2969 = vmax.f32 %v2836, 0.0
    %v2970 = vmax.f32 %v2838, 0.0
    %v2971 = vmax.f32 %v2959, 0.0
    %v2972 = vmax.f32 %v2961, 0.0
    %v2973 = vpack.c.bf16 %v2965, %v2965
    %v2974 = vpack.c.bf16 %v2966, %v2966
    %v2975 = vpack.c.bf16 %v2967, %v2967
    %v2976 = vpack.c.bf16 %v2968, %v2968
    %v2977 = vpack.c.bf16 %v2969, %v2969
    %v2978 = vpack.c.bf16 %v2970, %v2970
    %v2979 = vpack.c.bf16 %v2971, %v2971
    %v2980 = vpack.c.bf16 %v2972, %v2972
    %v2981 = vld [vmem:[#allocation8] sm:$0xf]
    %v2982 = vld [vmem:[#allocation8 + $0x4] sm:$0xf]
    %v2983 = vld [vmem:[#allocation8 + $0x8] sm:$0xf]
    %v2984 = vld [vmem:[#allocation8 + $0xc] sm:$0xf]
    %v2985 = vld [vmem:[#allocation8 + $0x10] sm:$0xf]
    %v2986 = vld [vmem:[#allocation8 + $0x14] sm:$0xf]
    %v2987 = vld [vmem:[#allocation8 + $0x18] sm:$0xf]
    %v2988 = vld [vmem:[#allocation8 + $0x1c] sm:$0xf]
    %v2989 = vld [vmem:[#allocation8 + $0x20] sm:$0xf]
    %v2990 = vld [vmem:[#allocation8 + $0x24] sm:$0xf]
    %v2991 = vld [vmem:[#allocation8 + $0x28] sm:$0xf]
    %v2992 = vld [vmem:[#allocation8 + $0x2c] sm:$0xf]
    %v2993 = vld [vmem:[#allocation8 + $0x30] sm:$0xf]
    %v2994 = vld [vmem:[#allocation8 + $0x34] sm:$0xf]
    %v2995 = vld [vmem:[#allocation8 + $0x38] sm:$0xf]
    %v2996 = vld [vmem:[#allocation8 + $0x3c] sm:$0xf]
    %v2997 = vld [vmem:[#allocation8 + $0x40] sm:$0xf]
    %v2998 = vld [vmem:[#allocation8 + $0x44] sm:$0xf]
    %v2999 = vld [vmem:[#allocation8 + $0x48] sm:$0xf]
    %v3000 = vld [vmem:[#allocation8 + $0x4c] sm:$0xf]
    %v3001 = vld [vmem:[#allocation8 + $0x50] sm:$0xf]
    %v3002 = vld [vmem:[#allocation8 + $0x54] sm:$0xf]
    %v3003 = vld [vmem:[#allocation8 + $0x58] sm:$0xf]
    %v3004 = vld [vmem:[#allocation8 + $0x5c] sm:$0xf]
    %v3005 = vld [vmem:[#allocation8 + $0x60] sm:$0xf]
    %v3006 = vld [vmem:[#allocation8 + $0x64] sm:$0xf]
    %v3007 = vld [vmem:[#allocation8 + $0x68] sm:$0xf]
    %v3008 = vld [vmem:[#allocation8 + $0x6c] sm:$0xf]
    %v3009 = vld [vmem:[#allocation8 + $0x70] sm:$0xf]
    %v3010 = vld [vmem:[#allocation8 + $0x74] sm:$0xf]
    %v3011 = vld [vmem:[#allocation8 + $0x78] sm:$0xf]
    %v3012 = vld [vmem:[#allocation8 + $0x7c] sm:$0xf]
    %v3013 = vld [vmem:[#allocation8 + $0x80] sm:$0xf]
    %v3014 = vld [vmem:[#allocation8 + $0x84] sm:$0xf]
    %v3015 = vld [vmem:[#allocation8 + $0x88] sm:$0xf]
    %v3016 = vld [vmem:[#allocation8 + $0x8c] sm:$0xf]
    %v3017 = vld [vmem:[#allocation8 + $0x90] sm:$0xf]
    %v3018 = vld [vmem:[#allocation8 + $0x94] sm:$0xf]
    %v3019 = vld [vmem:[#allocation8 + $0x98] sm:$0xf]
    %v3020 = vld [vmem:[#allocation8 + $0x9c] sm:$0xf]
    %v3021 = vld [vmem:[#allocation8 + $0xa0] sm:$0xf]
    %v3022 = vld [vmem:[#allocation8 + $0xa4] sm:$0xf]
    %v3023 = vld [vmem:[#allocation8 + $0xa8] sm:$0xf]
    %v3024 = vld [vmem:[#allocation8 + $0xac] sm:$0xf]
    %v3025 = vld [vmem:[#allocation8 + $0xb0] sm:$0xf]
    %v3026 = vld [vmem:[#allocation8 + $0xb4] sm:$0xf]
    %v3027 = vld [vmem:[#allocation8 + $0xb8] sm:$0xf]
    %v3028 = vld [vmem:[#allocation8 + $0xbc] sm:$0xf]
    %v3029 = vld [vmem:[#allocation8 + $0xc0] sm:$0xf]
    %v3030 = vld [vmem:[#allocation8 + $0xc4] sm:$0xf]
    %v3031 = vld [vmem:[#allocation8 + $0xc8] sm:$0xf]
    %v3032 = vld [vmem:[#allocation8 + $0xcc] sm:$0xf]
    %v3033 = vld [vmem:[#allocation8 + $0xd0] sm:$0xf]
    %v3034 = vld [vmem:[#allocation8 + $0xd4] sm:$0xf]
    %v3035 = vld [vmem:[#allocation8 + $0xd8] sm:$0xf]
    %v3036 = vld [vmem:[#allocation8 + $0xdc] sm:$0xf]
    %v3037 = vld [vmem:[#allocation8 + $0xe0] sm:$0xf]
    %v3038 = vld [vmem:[#allocation8 + $0xe4] sm:$0xf]
    %v3039 = vld [vmem:[#allocation8 + $0xe8] sm:$0xf]
    %v3040 = vld [vmem:[#allocation8 + $0xec] sm:$0xf]
    %v3041 = vld [vmem:[#allocation8 + $0xf0] sm:$0xf]
    %v3042 = vld [vmem:[#allocation8 + $0xf4] sm:$0xf]
    %v3043 = vld [vmem:[#allocation8 + $0xf8] sm:$0xf]
    %v3044 = vld [vmem:[#allocation8 + $0xfc] sm:$0xf]
    %v3045 = vld [vmem:[#allocation8 + $0x100] sm:$0xf]
    %v3046 = vld [vmem:[#allocation8 + $0x104] sm:$0xf]
    %v3047 = vld [vmem:[#allocation8 + $0x108] sm:$0xf]
    %v3048 = vld [vmem:[#allocation8 + $0x10c] sm:$0xf]
    %v3049 = vld [vmem:[#allocation8 + $0x110] sm:$0xf]
    %v3050 = vld [vmem:[#allocation8 + $0x114] sm:$0xf]
    %v3051 = vld [vmem:[#allocation8 + $0x118] sm:$0xf]
    %v3052 = vld [vmem:[#allocation8 + $0x11c] sm:$0xf]
    %v3053 = vld [vmem:[#allocation8 + $0x120] sm:$0xf]
    %v3054 = vld [vmem:[#allocation8 + $0x124] sm:$0xf]
    %v3055 = vld [vmem:[#allocation8 + $0x128] sm:$0xf]
    %v3056 = vld [vmem:[#allocation8 + $0x12c] sm:$0xf]
    %v3057 = vld [vmem:[#allocation8 + $0x130] sm:$0xf]
    %v3058 = vld [vmem:[#allocation8 + $0x134] sm:$0xf]
    %v3059 = vld [vmem:[#allocation8 + $0x138] sm:$0xf]
    %v3060 = vld [vmem:[#allocation8 + $0x13c] sm:$0xf]
    %v3061 = vld [vmem:[#allocation8 + $0x140] sm:$0xf]
    %v3062 = vld [vmem:[#allocation8 + $0x144] sm:$0xf]
    %v3063 = vld [vmem:[#allocation8 + $0x148] sm:$0xf]
    %v3064 = vld [vmem:[#allocation8 + $0x14c] sm:$0xf]
    %v3065 = vld [vmem:[#allocation8 + $0x150] sm:$0xf]
    %v3066 = vld [vmem:[#allocation8 + $0x154] sm:$0xf]
    %v3067 = vld [vmem:[#allocation8 + $0x158] sm:$0xf]
    %v3068 = vld [vmem:[#allocation8 + $0x15c] sm:$0xf]
    %v3069 = vld [vmem:[#allocation8 + $0x160] sm:$0xf]
    %v3070 = vld [vmem:[#allocation8 + $0x164] sm:$0xf]
    %v3071 = vld [vmem:[#allocation8 + $0x168] sm:$0xf]
    %v3072 = vld [vmem:[#allocation8 + $0x16c] sm:$0xf]
    %v3073 = vld [vmem:[#allocation8 + $0x170] sm:$0xf]
    %v3074 = vld [vmem:[#allocation8 + $0x174] sm:$0xf]
    %v3075 = vld [vmem:[#allocation8 + $0x178] sm:$0xf]
    %v3076 = vld [vmem:[#allocation8 + $0x17c] sm:$0xf]
    %v3077 = vld [vmem:[#allocation8 + $0x180] sm:$0xf]
    %v3078 = vld [vmem:[#allocation8 + $0x184] sm:$0xf]
    %v3079 = vld [vmem:[#allocation8 + $0x188] sm:$0xf]
    %v3080 = vld [vmem:[#allocation8 + $0x18c] sm:$0xf]
    %v3081 = vld [vmem:[#allocation8 + $0x190] sm:$0xf]
    %v3082 = vld [vmem:[#allocation8 + $0x194] sm:$0xf]
    %v3083 = vld [vmem:[#allocation8 + $0x198] sm:$0xf]
    %v3084 = vld [vmem:[#allocation8 + $0x19c] sm:$0xf]
    %v3085 = vld [vmem:[#allocation8 + $0x1a0] sm:$0xf]
    %v3086 = vld [vmem:[#allocation8 + $0x1a4] sm:$0xf]
    %v3087 = vld [vmem:[#allocation8 + $0x1a8] sm:$0xf]
    %v3088 = vld [vmem:[#allocation8 + $0x1ac] sm:$0xf]
    %v3089 = vld [vmem:[#allocation8 + $0x1b0] sm:$0xf]
    %v3090 = vld [vmem:[#allocation8 + $0x1b4] sm:$0xf]
    %v3091 = vld [vmem:[#allocation8 + $0x1b8] sm:$0xf]
    %v3092 = vld [vmem:[#allocation8 + $0x1bc] sm:$0xf]
    %v3093 = vld [vmem:[#allocation8 + $0x1c0] sm:$0xf]
    %v3094 = vld [vmem:[#allocation8 + $0x1c4] sm:$0xf]
    %v3095 = vld [vmem:[#allocation8 + $0x1c8] sm:$0xf]
    %v3096 = vld [vmem:[#allocation8 + $0x1cc] sm:$0xf]
    %v3097 = vld [vmem:[#allocation8 + $0x1d0] sm:$0xf]
    %v3098 = vld [vmem:[#allocation8 + $0x1d4] sm:$0xf]
    %v3099 = vld [vmem:[#allocation8 + $0x1d8] sm:$0xf]
    %v3100 = vld [vmem:[#allocation8 + $0x1dc] sm:$0xf]
    %v3101 = vld [vmem:[#allocation8 + $0x1e0] sm:$0xf]
    %v3102 = vld [vmem:[#allocation8 + $0x1e4] sm:$0xf]
    %v3103 = vld [vmem:[#allocation8 + $0x1e8] sm:$0xf]
    %v3104 = vld [vmem:[#allocation8 + $0x1ec] sm:$0xf]
    %v3105 = vld [vmem:[#allocation8 + $0x1f0] sm:$0xf]
    %v3106 = vld [vmem:[#allocation8 + $0x1f4] sm:$0xf]
    %v3107 = vld [vmem:[#allocation8 + $0x1f8] sm:$0xf]
    %v3108 = vld [vmem:[#allocation8 + $0x1fc] sm:$0xf]
    %v3109 = vld [vmem:[#allocation10] sm:$0x1]
    %v3111 = vlaneseq
    %v3112 = vshrl.u32 %v3111, 7
    %v3113 = vsub.s32 0, %v3112
    %v3114 = vrot.slane %v3109, %v3113
    %v3244 = vunpack.c.l.b16 %v2981
    %v3245 = vunpack.c.l.b16 %v2982
    %v3246 = vunpack.c.l.b16 %v2983
    %v3247 = vunpack.c.l.b16 %v2984
    %v3248 = vunpack.c.l.b16 %v2985
    %v3249 = vunpack.c.l.b16 %v2986
    %v3250 = vunpack.c.l.b16 %v2987
    %v3251 = vunpack.c.l.b16 %v2988
    %v3252 = vunpack.c.l.b16 %v2989
    %v3253 = vunpack.c.l.b16 %v2990
    %v3254 = vunpack.c.l.b16 %v2991
    %v3255 = vunpack.c.l.b16 %v2992
    %v3256 = vunpack.c.l.b16 %v2993
    %v3257 = vunpack.c.l.b16 %v2994
    %v3258 = vunpack.c.l.b16 %v2995
    %v3259 = vunpack.c.l.b16 %v2996
    %v3260 = vunpack.c.l.b16 %v2997
    %v3261 = vunpack.c.l.b16 %v2998
    %v3262 = vunpack.c.l.b16 %v2999
    %v3263 = vunpack.c.l.b16 %v3000
    %v3264 = vunpack.c.l.b16 %v3001
    %v3265 = vunpack.c.l.b16 %v3002
    %v3266 = vunpack.c.l.b16 %v3003
    %v3267 = vunpack.c.l.b16 %v3004
    %v3268 = vunpack.c.l.b16 %v3005
    %v3269 = vunpack.c.l.b16 %v3006
    %v3270 = vunpack.c.l.b16 %v3007
    %v3271 = vunpack.c.l.b16 %v3008
    %v3272 = vunpack.c.l.b16 %v3009
    %v3273 = vunpack.c.l.b16 %v3010
    %v3274 = vunpack.c.l.b16 %v3011
    %v3275 = vunpack.c.l.b16 %v3012
    %v3276 = vunpack.c.l.b16 %v3013
    %v3277 = vunpack.c.l.b16 %v3014
    %v3278 = vunpack.c.l.b16 %v3015
    %v3279 = vunpack.c.l.b16 %v3016
    %v3280 = vunpack.c.l.b16 %v3017
    %v3281 = vunpack.c.l.b16 %v3018
    %v3282 = vunpack.c.l.b16 %v3019
    %v3283 = vunpack.c.l.b16 %v3020
    %v3284 = vunpack.c.l.b16 %v3021
    %v3285 = vunpack.c.l.b16 %v3022
    %v3286 = vunpack.c.l.b16 %v3023
    %v3287 = vunpack.c.l.b16 %v3024
    %v3288 = vunpack.c.l.b16 %v3025
    %v3289 = vunpack.c.l.b16 %v3026
    %v3290 = vunpack.c.l.b16 %v3027
    %v3291 = vunpack.c.l.b16 %v3028
    %v3292 = vunpack.c.l.b16 %v3029
    %v3293 = vunpack.c.l.b16 %v3030
    %v3294 = vunpack.c.l.b16 %v3031
    %v3295 = vunpack.c.l.b16 %v3032
    %v3296 = vunpack.c.l.b16 %v3033
    %v3297 = vunpack.c.l.b16 %v3034
    %v3298 = vunpack.c.l.b16 %v3035
    %v3299 = vunpack.c.l.b16 %v3036
    %v3300 = vunpack.c.l.b16 %v3037
    %v3301 = vunpack.c.l.b16 %v3038
    %v3302 = vunpack.c.l.b16 %v3039
    %v3303 = vunpack.c.l.b16 %v3040
    %v3304 = vunpack.c.l.b16 %v3041
    %v3305 = vunpack.c.l.b16 %v3042
    %v3306 = vunpack.c.l.b16 %v3043
    %v3307 = vunpack.c.l.b16 %v3044
    %v3308 = vunpack.c.l.b16 %v3045
    %v3309 = vunpack.c.l.b16 %v3046
    %v3310 = vunpack.c.l.b16 %v3047
    %v3311 = vunpack.c.l.b16 %v3048
    %v3312 = vunpack.c.l.b16 %v3049
    %v3313 = vunpack.c.l.b16 %v3050
    %v3314 = vunpack.c.l.b16 %v3051
    %v3315 = vunpack.c.l.b16 %v3052
    %v3316 = vunpack.c.l.b16 %v3053
    %v3317 = vunpack.c.l.b16 %v3054
    %v3318 = vunpack.c.l.b16 %v3055
    %v3319 = vunpack.c.l.b16 %v3056
    %v3320 = vunpack.c.l.b16 %v3057
    %v3321 = vunpack.c.l.b16 %v3058
    %v3322 = vunpack.c.l.b16 %v3059
    %v3323 = vunpack.c.l.b16 %v3060
    %v3324 = vunpack.c.l.b16 %v3061
    %v3325 = vunpack.c.l.b16 %v3062
    %v3326 = vunpack.c.l.b16 %v3063
    %v3327 = vunpack.c.l.b16 %v3064
    %v3328 = vunpack.c.l.b16 %v3065
    %v3329 = vunpack.c.l.b16 %v3066
    %v3330 = vunpack.c.l.b16 %v3067
    %v3331 = vunpack.c.l.b16 %v3068
    %v3332 = vunpack.c.l.b16 %v3069
    %v3333 = vunpack.c.l.b16 %v3070
    %v3334 = vunpack.c.l.b16 %v3071
    %v3335 = vunpack.c.l.b16 %v3072
    %v3336 = vunpack.c.l.b16 %v3073
    %v3337 = vunpack.c.l.b16 %v3074
    %v3338 = vunpack.c.l.b16 %v3075
    %v3339 = vunpack.c.l.b16 %v3076
    %v3340 = vunpack.c.l.b16 %v3077
    %v3341 = vunpack.c.l.b16 %v3078
    %v3342 = vunpack.c.l.b16 %v3079
    %v3343 = vunpack.c.l.b16 %v3080
    %v3344 = vunpack.c.l.b16 %v3081
    %v3345 = vunpack.c.l.b16 %v3082
    %v3346 = vunpack.c.l.b16 %v3083
    %v3347 = vunpack.c.l.b16 %v3084
    %v3348 = vunpack.c.l.b16 %v3085
    %v3349 = vunpack.c.l.b16 %v3086
    %v3350 = vunpack.c.l.b16 %v3087
    %v3351 = vunpack.c.l.b16 %v3088
    %v3352 = vunpack.c.l.b16 %v3089
    %v3353 = vunpack.c.l.b16 %v3090
    %v3354 = vunpack.c.l.b16 %v3091
    %v3355 = vunpack.c.l.b16 %v3092
    %v3356 = vunpack.c.l.b16 %v3093
    %v3357 = vunpack.c.l.b16 %v3094
    %v3358 = vunpack.c.l.b16 %v3095
    %v3359 = vunpack.c.l.b16 %v3096
    %v3360 = vunpack.c.l.b16 %v3097
    %v3361 = vunpack.c.l.b16 %v3098
    %v3362 = vunpack.c.l.b16 %v3099
    %v3363 = vunpack.c.l.b16 %v3100
    %v3364 = vunpack.c.l.b16 %v3101
    %v3365 = vunpack.c.l.b16 %v3102
    %v3366 = vunpack.c.l.b16 %v3103
    %v3367 = vunpack.c.l.b16 %v3104
    %v3368 = vunpack.c.l.b16 %v3105
    %v3369 = vunpack.c.l.b16 %v3106
    %v3370 = vunpack.c.l.b16 %v3107
    %v3371 = vunpack.c.l.b16 %v3108
    %v3372 = vpack.c.b16 %v3245, %v3244
    %v3373 = vpack.c.b16 %v3247, %v3246
    %v3374 = vpack.c.b16 %v3249, %v3248
    %v3375 = vpack.c.b16 %v3251, %v3250
    %v3376 = vpack.c.b16 %v3253, %v3252
    %v3377 = vpack.c.b16 %v3255, %v3254
    %v3378 = vpack.c.b16 %v3257, %v3256
    %v3379 = vpack.c.b16 %v3259, %v3258
    %v3380 = vpack.c.b16 %v3261, %v3260
    %v3381 = vpack.c.b16 %v3263, %v3262
    %v3382 = vpack.c.b16 %v3265, %v3264
    %v3383 = vpack.c.b16 %v3267, %v3266
    %v3384 = vpack.c.b16 %v3269, %v3268
    %v3385 = vpack.c.b16 %v3271, %v3270
    %v3386 = vpack.c.b16 %v3273, %v3272
    %v3387 = vpack.c.b16 %v3275, %v3274
    %v3388 = vpack.c.b16 %v3277, %v3276
    %v3389 = vpack.c.b16 %v3279, %v3278
    %v3390 = vpack.c.b16 %v3281, %v3280
    %v3391 = vpack.c.b16 %v3283, %v3282
    %v3392 = vpack.c.b16 %v3285, %v3284
    %v3393 = vpack.c.b16 %v3287, %v3286
    %v3394 = vpack.c.b16 %v3289, %v3288
    %v3395 = vpack.c.b16 %v3291, %v3290
    %v3396 = vpack.c.b16 %v3293, %v3292
    %v3397 = vpack.c.b16 %v3295, %v3294
    %v3398 = vpack.c.b16 %v3297, %v3296
    %v3399 = vpack.c.b16 %v3299, %v3298
    %v3400 = vpack.c.b16 %v3301, %v3300
    %v3401 = vpack.c.b16 %v3303, %v3302
    %v3402 = vpack.c.b16 %v3305, %v3304
    %v3403 = vpack.c.b16 %v3307, %v3306
    %v3404 = vpack.c.b16 %v3309, %v3308
    %v3405 = vpack.c.b16 %v3311, %v3310
    %v3406 = vpack.c.b16 %v3313, %v3312
    %v3407 = vpack.c.b16 %v3315, %v3314
    %v3408 = vpack.c.b16 %v3317, %v3316
    %v3409 = vpack.c.b16 %v3319, %v3318
    %v3410 = vpack.c.b16 %v3321, %v3320
    %v3411 = vpack.c.b16 %v3323, %v3322
    %v3412 = vpack.c.b16 %v3325, %v3324
    %v3413 = vpack.c.b16 %v3327, %v3326
    %v3414 = vpack.c.b16 %v3329, %v3328
    %v3415 = vpack.c.b16 %v3331, %v3330
    %v3416 = vpack.c.b16 %v3333, %v3332
    %v3417 = vpack.c.b16 %v3335, %v3334
    %v3418 = vpack.c.b16 %v3337, %v3336
    %v3419 = vpack.c.b16 %v3339, %v3338
    %v3420 = vpack.c.b16 %v3341, %v3340
    %v3421 = vpack.c.b16 %v3343, %v3342
    %v3422 = vpack.c.b16 %v3345, %v3344
    %v3423 = vpack.c.b16 %v3347, %v3346
    %v3424 = vpack.c.b16 %v3349, %v3348
    %v3425 = vpack.c.b16 %v3351, %v3350
    %v3426 = vpack.c.b16 %v3353, %v3352
    %v3427 = vpack.c.b16 %v3355, %v3354
    %v3428 = vpack.c.b16 %v3357, %v3356
    %v3429 = vpack.c.b16 %v3359, %v3358
    %v3430 = vpack.c.b16 %v3361, %v3360
    %v3431 = vpack.c.b16 %v3363, %v3362
    %v3432 = vpack.c.b16 %v3365, %v3364
    %v3433 = vpack.c.b16 %v3367, %v3366
    %v3434 = vpack.c.b16 %v3369, %v3368
    %v3435 = vpack.c.b16 %v3371, %v3370
    %3500 = vmatprep.subr.bf16.mxu0 0
    %3501 = vmatpush1.bf16.msra.mxu0 %v3372
    %3502 = vmatprep.subr.bf16.mxu0 0
    %3503 = vmatpush1.bf16.msra.mxu0 %v3373
    %3504 = vmatprep.subr.bf16.mxu0 0
    %3505 = vmatpush1.bf16.msra.mxu0 %v3374
    %3506 = vmatprep.subr.bf16.mxu0 0
    %3507 = vmatpush1.bf16.msra.mxu0 %v3375
    %3508 = vmatprep.subr.bf16.mxu0 0
    %3509 = vmatpush1.bf16.msra.mxu0 %v3376
    %3510 = vmatprep.subr.bf16.mxu0 0
    %3511 = vmatpush1.bf16.msra.mxu0 %v3377
    %3512 = vmatprep.subr.bf16.mxu0 0
    %3513 = vmatpush1.bf16.msra.mxu0 %v3378
    %3514 = vmatprep.subr.bf16.mxu0 0
    %3515 = vmatpush1.bf16.msra.mxu0 %v3379
    %3516 = vmatprep.subr.bf16.mxu0 0
    %3517 = vmatpush1.bf16.msra.mxu0 %v3380
    %3518 = vmatprep.subr.bf16.mxu0 0
    %3519 = vmatpush1.bf16.msra.mxu0 %v3381
    %3520 = vmatprep.subr.bf16.mxu0 0
    %3521 = vmatpush1.bf16.msra.mxu0 %v3382
    %3522 = vmatprep.subr.bf16.mxu0 0
    %3523 = vmatpush1.bf16.msra.mxu0 %v3383
    %3524 = vmatprep.subr.bf16.mxu0 0
    %3525 = vmatpush1.bf16.msra.mxu0 %v3384
    %3526 = vmatprep.subr.bf16.mxu0 0
    %3527 = vmatpush1.bf16.msra.mxu0 %v3385
    %3528 = vmatprep.subr.bf16.mxu0 0
    %3529 = vmatpush1.bf16.msra.mxu0 %v3386
    %3530 = vmatprep.subr.bf16.mxu0 0
    %3531 = vmatpush1.bf16.msra.mxu0 %v3387
    %3532 = vmatprep.mubr.bf16.mxu0 %v2974
    %3533 = vmatmul.mubr.bf16.gmra.mrb[0].mxu0 %v2973
    %v3534 = vpop.f32.mrb[0].mxu0
    %v3535 = vadd.f32 %v3114, %v3534
    %v3536 = vpop.f32.mrb[0].mxu0
    %v3537 = vpop.f32.mrb[0].mxu0
    %v3538 = vpop.f32.mrb[0].mxu0
    %3539 = vdwg.mxu0
    %3540 = vmatprep.subr.bf16.mxu0 0
    %3541 = vmatpush1.bf16.msra.mxu0 %v3388
    %3542 = vmatprep.subr.bf16.mxu0 0
    %3543 = vmatpush1.bf16.msra.mxu0 %v3389
    %3544 = vmatprep.subr.bf16.mxu0 0
    %3545 = vmatpush1.bf16.msra.mxu0 %v3390
    %3546 = vmatprep.subr.bf16.mxu0 0
    %3547 = vmatpush1.bf16.msra.mxu0 %v3391
    %3548 = vmatprep.subr.bf16.mxu0 0
    %3549 = vmatpush1.bf16.msra.mxu0 %v3392
    %3550 = vmatprep.subr.bf16.mxu0 0
    %3551 = vmatpush1.bf16.msra.mxu0 %v3393
    %3552 = vmatprep.subr.bf16.mxu0 0
    %3553 = vmatpush1.bf16.msra.mxu0 %v3394
    %3554 = vmatprep.subr.bf16.mxu0 0
    %3555 = vmatpush1.bf16.msra.mxu0 %v3395
    %3556 = vmatprep.subr.bf16.mxu0 0
    %3557 = vmatpush1.bf16.msra.mxu0 %v3396
    %3558 = vmatprep.subr.bf16.mxu0 0
    %3559 = vmatpush1.bf16.msra.mxu0 %v3397
    %3560 = vmatprep.subr.bf16.mxu0 0
    %3561 = vmatpush1.bf16.msra.mxu0 %v3398
    %3562 = vmatprep.subr.bf16.mxu0 0
    %3563 = vmatpush1.bf16.msra.mxu0 %v3399
    %3564 = vmatprep.subr.bf16.mxu0 0
    %3565 = vmatpush1.bf16.msra.mxu0 %v3400
    %3566 = vmatprep.subr.bf16.mxu0 0
    %3567 = vmatpush1.bf16.msra.mxu0 %v3401
    %3568 = vmatprep.subr.bf16.mxu0 0
    %3569 = vmatpush1.bf16.msra.mxu0 %v3402
    %3570 = vmatprep.subr.bf16.mxu0 0
    %3571 = vmatpush1.bf16.msra.mxu0 %v3403
    %3572 = vmatprep.mubr.bf16.mxu0 %v2976
    %3573 = vmatmul.mubr.bf16.gmra.mrb[0].mxu0 %v2975
    %v3574 = vpop.f32.mrb[0].mxu0
    %v3575 = vadd.f32 %v3535, %v3574
    %v3576 = vpop.f32.mrb[0].mxu0
    %v3577 = vpop.f32.mrb[0].mxu0
    %v3578 = vpop.f32.mrb[0].mxu0
    %3579 = vdwg.mxu0
    %3580 = vmatprep.subr.bf16.mxu0 0
    %3581 = vmatpush1.bf16.msra.mxu0 %v3404
    %3582 = vmatprep.subr.bf16.mxu0 0
    %3583 = vmatpush1.bf16.msra.mxu0 %v3405
    %3584 = vmatprep.subr.bf16.mxu0 0
    %3585 = vmatpush1.bf16.msra.mxu0 %v3406
    %3586 = vmatprep.subr.bf16.mxu0 0
    %3587 = vmatpush1.bf16.msra.mxu0 %v3407
    %3588 = vmatprep.subr.bf16.mxu0 0
    %3589 = vmatpush1.bf16.msra.mxu0 %v3408
    %3590 = vmatprep.subr.bf16.mxu0 0
    %3591 = vmatpush1.bf16.msra.mxu0 %v3409
    %3592 = vmatprep.subr.bf16.mxu0 0
    %3593 = vmatpush1.bf16.msra.mxu0 %v3410
    %3594 = vmatprep.subr.bf16.mxu0 0
    %3595 = vmatpush1.bf16.msra.mxu0 %v3411
    %3596 = vmatprep.subr.bf16.mxu0 0
    %3597 = vmatpush1.bf16.msra.mxu0 %v3412
    %3598 = vmatprep.subr.bf16.mxu0 0
    %3599 = vmatpush1.bf16.msra.mxu0 %v3413
    %3600 = vmatprep.subr.bf16.mxu0 0
    %3601 = vmatpush1.bf16.msra.mxu0 %v3414
    %3602 = vmatprep.subr.bf16.mxu0 0
    %3603 = vmatpush1.bf16.msra.mxu0 %v3415
    %3604 = vmatprep.subr.bf16.mxu0 0
    %3605 = vmatpush1.bf16.msra.mxu0 %v3416
    %3606 = vmatprep.subr.bf16.mxu0 0
    %3607 = vmatpush1.bf16.msra.mxu0 %v3417
    %3608 = vmatprep.subr.bf16.mxu0 0
    %3609 = vmatpush1.bf16.msra.mxu0 %v3418
    %3610 = vmatprep.subr.bf16.mxu0 0
    %3611 = vmatpush1.bf16.msra.mxu0 %v3419
    %3612 = vmatprep.mubr.bf16.mxu0 %v2978
    %3613 = vmatmul.mubr.bf16.gmra.mrb[0].mxu0 %v2977
    %v3614 = vpop.f32.mrb[0].mxu0
    %v3615 = vadd.f32 %v3575, %v3614
    %v3616 = vpop.f32.mrb[0].mxu0
    %v3617 = vpop.f32.mrb[0].mxu0
    %v3618 = vpop.f32.mrb[0].mxu0
    %3619 = vdwg.mxu0
    %3620 = vmatprep.subr.bf16.mxu0 0
    %3621 = vmatpush1.bf16.msra.mxu0 %v3420
    %3622 = vmatprep.subr.bf16.mxu0 0
    %3623 = vmatpush1.bf16.msra.mxu0 %v3421
    %3624 = vmatprep.subr.bf16.mxu0 0
    %3625 = vmatpush1.bf16.msra.mxu0 %v3422
    %3626 = vmatprep.subr.bf16.mxu0 0
    %3627 = vmatpush1.bf16.msra.mxu0 %v3423
    %3628 = vmatprep.subr.bf16.mxu0 0
    %3629 = vmatpush1.bf16.msra.mxu0 %v3424
    %3630 = vmatprep.subr.bf16.mxu0 0
    %3631 = vmatpush1.bf16.msra.mxu0 %v3425
    %3632 = vmatprep.subr.bf16.mxu0 0
    %3633 = vmatpush1.bf16.msra.mxu0 %v3426
    %3634 = vmatprep.subr.bf16.mxu0 0
    %3635 = vmatpush1.bf16.msra.mxu0 %v3427
    %3636 = vmatprep.subr.bf16.mxu0 0
    %3637 = vmatpush1.bf16.msra.mxu0 %v3428
    %3638 = vmatprep.subr.bf16.mxu0 0
    %3639 = vmatpush1.bf16.msra.mxu0 %v3429
    %3640 = vmatprep.subr.bf16.mxu0 0
    %3641 = vmatpush1.bf16.msra.mxu0 %v3430
    %3642 = vmatprep.subr.bf16.mxu0 0
    %3643 = vmatpush1.bf16.msra.mxu0 %v3431
    %3644 = vmatprep.subr.bf16.mxu0 0
    %3645 = vmatpush1.bf16.msra.mxu0 %v3432
    %3646 = vmatprep.subr.bf16.mxu0 0
    %3647 = vmatpush1.bf16.msra.mxu0 %v3433
    %3648 = vmatprep.subr.bf16.mxu0 0
    %3649 = vmatpush1.bf16.msra.mxu0 %v3434
    %3650 = vmatprep.subr.bf16.mxu0 0
    %3651 = vmatpush1.bf16.msra.mxu0 %v3435
    %3652 = vmatprep.mubr.bf16.mxu0 %v2980
    %3653 = vmatmul.mubr.bf16.gmra.mrb[0].mxu0 %v2979
    %v3654 = vpop.f32.mrb[0].mxu0
    %v3655 = vadd.f32 %v3615, %v3654
    %v3656 = vpop.f32.mrb[0].mxu0
    %v3657 = vpop.f32.mrb[0].mxu0
    %v3658 = vpop.f32.mrb[0].mxu0
    %3659 = vdwg.mxu0
    %v3660 = vmax.f32 %v3655, 0.0
    %v3661 = vpack.c.bf16 %v3660, %v3660
    %v3662 = vld [vmem:[#allocation11] sm:$0xf]
    %v3663 = vld [vmem:[#allocation11 + $0x4] sm:$0xf]
    %v3664 = vld [vmem:[#allocation11 + $0x8] sm:$0xf]
    %v3665 = vld [vmem:[#allocation11 + $0xc] sm:$0xf]
    %v3666 = vld [vmem:[#allocation11 + $0x10] sm:$0xf]
    %v3667 = vld [vmem:[#allocation11 + $0x14] sm:$0xf]
    %v3668 = vld [vmem:[#allocation11 + $0x18] sm:$0xf]
    %v3669 = vld [vmem:[#allocation11 + $0x1c] sm:$0xf]
    %v3670 = vld [vmem:[#allocation11 + $0x20] sm:$0xf]
    %v3671 = vld [vmem:[#allocation11 + $0x24] sm:$0xf]
    %v3672 = vld [vmem:[#allocation11 + $0x28] sm:$0xf]
    %v3673 = vld [vmem:[#allocation11 + $0x2c] sm:$0xf]
    %v3674 = vld [vmem:[#allocation11 + $0x30] sm:$0xf]
    %v3675 = vld [vmem:[#allocation11 + $0x34] sm:$0xf]
    %v3676 = vld [vmem:[#allocation11 + $0x38] sm:$0xf]
    %v3677 = vld [vmem:[#allocation11 + $0x3c] sm:$0xf]
    %v3678 = vld [vmem:[#allocation13] sm:$0x1]
    %v3680 = vlaneseq
    %v3681 = vshrl.u32 %v3680, 7
    %v3682 = vsub.s32 0, %v3681
    %v3683 = vrot.slane %v3678, %v3682
    %v3701 = vunpack.c.l.b16 %v3662
    %v3702 = vunpack.c.l.b16 %v3663
    %v3703 = vunpack.c.l.b16 %v3664
    %v3704 = vunpack.c.l.b16 %v3665
    %v3705 = vunpack.c.l.b16 %v3666
    %v3706 = vunpack.c.l.b16 %v3667
    %v3707 = vunpack.c.l.b16 %v3668
    %v3708 = vunpack.c.l.b16 %v3669
    %v3709 = vunpack.c.l.b16 %v3670
    %v3710 = vunpack.c.l.b16 %v3671
    %v3711 = vunpack.c.l.b16 %v3672
    %v3712 = vunpack.c.l.b16 %v3673
    %v3713 = vunpack.c.l.b16 %v3674
    %v3714 = vunpack.c.l.b16 %v3675
    %v3715 = vunpack.c.l.b16 %v3676
    %v3716 = vunpack.c.l.b16 %v3677
    %v3717 = vpack.c.b16 %v3702, %v3701
    %v3718 = vpack.c.b16 %v3704, %v3703
    %v3719 = vpack.c.b16 %v3706, %v3705
    %v3720 = vpack.c.b16 %v3708, %v3707
    %v3721 = vpack.c.b16 %v3710, %v3709
    %v3722 = vpack.c.b16 %v3712, %v3711
    %v3723 = vpack.c.b16 %v3714, %v3713
    %v3724 = vpack.c.b16 %v3716, %v3715
    %3733 = vmatprep.subr.bf16.mxu0 0
    %3734 = vmatpush1.bf16.msra.mxu0 %v3717
    %3735 = vmatprep.subr.bf16.mxu0 0
    %3736 = vmatpush1.bf16.msra.mxu0 %v3718
    %3737 = vmatprep.subr.bf16.mxu0 0
    %3738 = vmatpush1.bf16.msra.mxu0 %v3719
    %3739 = vmatprep.subr.bf16.mxu0 0
    %3740 = vmatpush1.bf16.msra.mxu0 %v3720
    %3741 = vmatprep.subr.bf16.mxu0 0
    %3742 = vmatpush1.bf16.msra.mxu0 %v3721
    %3743 = vmatprep.subr.bf16.mxu0 0
    %3744 = vmatpush1.bf16.msra.mxu0 %v3722
    %3745 = vmatprep.subr.bf16.mxu0 0
    %3746 = vmatpush1.bf16.msra.mxu0 %v3723
    %3747 = vmatprep.subr.bf16.mxu0 0
    %3748 = vmatpush1.bf16.msra.mxu0 %v3724
    %3749 = vmatprep.subr.bf16.mxu0 0
    %3750 = vmatpush1.bf16.msra.mxu0 0
    %3751 = vmatprep.subr.bf16.mxu0 0
    %3752 = vmatpush1.bf16.msra.mxu0 0
    %3753 = vmatprep.subr.bf16.mxu0 0
    %3754 = vmatpush1.bf16.msra.mxu0 0
    %3755 = vmatprep.subr.bf16.mxu0 0
    %3756 = vmatpush1.bf16.msra.mxu0 0
    %3757 = vmatprep.subr.bf16.mxu0 0
    %3758 = vmatpush1.bf16.msra.mxu0 0
    %3759 = vmatprep.subr.bf16.mxu0 0
    %3760 = vmatpush1.bf16.msra.mxu0 0
    %3761 = vmatprep.subr.bf16.mxu0 0
    %3762 = vmatpush1.bf16.msra.mxu0 0
    %3763 = vmatprep.subr.bf16.mxu0 0
    %3764 = vmatpush1.bf16.msra.mxu0 0
    %3765 = vmatprep.mubr.bf16.mxu0 0
    %3766 = vmatmul.mubr.bf16.gmra.mrb[0].mxu0 %v3661
    %v3767 = vpop.f32.mrb[0].mxu0
    %v3768 = vadd.f32 %v3683, %v3767
    %v3769 = vpop.f32.mrb[0].mxu0
    %v3770 = vpop.f32.mrb[0].mxu0
    %v3771 = vpop.f32.mrb[0].mxu0
    %3772 = vdwg.mxu0
    %3773 = vst [vmem:[#allocation14] sm:$0xff] %v3768
    // Predicated region
    $region58: #{tpu_custom_call.1} parent=1 // pred_check
      _
    $region59: #{tpu_custom_call.1} parent=1 // pred_check_branch
      %3775 = sbr.rel (0) target = $region61
    $region60: #{tpu_custom_call.1} parent=1 // pred_region
      %s3777 = ssub.s32 128, 128
      %3778 = vsyncadd [#allocation4], %s3777
      %s3780 = sshll.u32 [#allocation14], 4
      %s3781 = int_to_ptr.vmem [resolvable:$true] %s3780
      %3783 = dma.vmem_to_hbm [thread:$0]  %s3781, 128, %s7, [#allocation4]
    $region61: #{tpu_custom_call.1} parent=1 // pred_fallthru
      _
    // Predicated region
    $region62: #{tpu_custom_call.1} parent=1 // pred_check
      _
    $region63: #{tpu_custom_call.1} parent=1 // pred_check_branch
      %3785 = sbr.rel (0) target = $region65
    $region64: #{tpu_custom_call.1} parent=1 // pred_region
      %3786 = dma.done [#allocation4], 128
    $region65: #{tpu_custom_call.1} parent=1 // pred_fallthru
      _
    %3787 = vsyncpa [#allocation3], 1
    %3788 = vsyncpa [#allocation6], 1
    %3789 = vsyncpa [#allocation9], 1
    %3790 = vsyncpa [#allocation12], 1
    %3791 = vsyncpa [#allocation4], 1

</llo_original>
